<compile_context>
chip_gen: v5e
topology: v5e:2x2
jax: 0.10.0
libtpu: 0.0.40
codegen_flags: <defaults>
</compile_context>

<pallas_src>
import numpy as np
import jax
import jax.numpy as jnp
from jax.experimental import pallas as pl
from jax.experimental.pallas import tpu as pltpu

GP = 128          # per-gate padded lane width (one vreg of lanes)
G3 = 3 * GP       # merged r|z|n gate width


def _round8(n):
    return ((n + 7) // 8) * 8


# ------------------------------ fused kernel ---------------------------------
def _make_kernel(T1, T2, Bp, offs):
    """Builds the fused kernel for static sequence lengths / padded batch."""

    def kernel(tx_ref, emb_ref, w_ref, b_ref, head_ref, out_ref):
        bf16 = jnp.bfloat16
        f32 = jnp.float32

        # ---- packed GRU weights (bf16), static aligned ref slices ----
        def wsl(name):
            a, b = offs[name]
            return w_ref[a:b, :]

        t_wih0, t_whh0 = wsl("t_wih0"), wsl("t_whh0")
        t_wih1, t_whh1 = wsl("t_wih1"), wsl("t_whh1")
        x_wih0, x_whh0 = wsl("x_wih0"), wsl("x_whh0")
        x_wih1, x_whh1 = wsl("x_wih1"), wsl("x_whh1")

        # ---- packed biases (f32): one aligned (8, 384) load, then vreg slices
        ball = b_ref[...]
        # layer-1 input-side bias rows (b_ih + b_hh for r/z, b_ih for n),
        # pre-broadcast once so the unrolled loop only does adds.
        b1_t = jnp.broadcast_to(ball[1:2, :], (Bp, G3))
        b1_x = jnp.broadcast_to(ball[3:4, :], (Bp, G3))
        bn0_t = jnp.broadcast_to(ball[4:5, 0:GP], (Bp, GP))
        bn1_t = jnp.broadcast_to(ball[5:6, 0:GP], (Bp, GP))
        bn0_x = jnp.broadcast_to(ball[6:7, 0:GP], (Bp, GP))
        bn1_x = jnp.broadcast_to(ball[7:8, 0:GP], (Bp, GP))

        # ---- hoisted layer-0 input projections over the whole sequences ----
        # (off the recurrent critical path; r/z biases b_ih+b_hh folded in)
        gi_t = jnp.dot(tx_ref[...], t_wih0,
                       preferred_element_type=f32) + ball[0:1, :]   # (T1*Bp, 384)
        gi_x = jnp.dot(emb_ref[...], x_wih0,
                       preferred_element_type=f32) + ball[2:3, :]   # (T2*Bp, 384)

        # ---- GRU cell on merged, lane-padded gates (PyTorch r,z,n order) ----
        def gates(g_in, g_h, b_hh_n, h_prev):
            r = jax.nn.sigmoid(g_in[:, 0:GP] + g_h[:, 0:GP])
            z = jax.nn.sigmoid(g_in[:, GP:2 * GP] + g_h[:, GP:2 * GP])
            n = jnp.tanh(g_in[:, 2 * GP:3 * GP]
                         + r * (g_h[:, 2 * GP:3 * GP] + b_hh_n))
            return (1.0 - z) * n + z * h_prev

        def step_l0(h, gi_blk, whh, b_hh_n):
            # single merged (B,128)x(128,384) bf16 matmul per step
            g_h = jnp.dot(h.astype(bf16), whh, preferred_element_type=f32)
            return gates(gi_blk, g_h, b_hh_n, h)

        def step_l1(h, x_in, wih, whh, b_in, b_hh_n):
            # x_in is last iteration's layer-0 output -> independent of this
            # iteration's layer-0 matmul; both dots pipeline on the MXU.
            g_in = jnp.dot(x_in.astype(bf16), wih, preferred_element_type=f32) + b_in
            g_h = jnp.dot(h.astype(bf16), whh, preferred_element_type=f32)
            return gates(g_in, g_h, b_hh_n, h)

        zero_h = jnp.zeros((Bp, GP), f32)
        h0_t, h1_t = zero_h, zero_h
        h0_x, h1_x = zero_h, zero_h

        # ---- wavefront recurrence over both layers and both branches --------
        # iteration s: layer-0 step s, layer-1 step s-1 (consumes h0 from the
        # previous iteration) -> 4 mutually independent matmul chains per iter.
        for s in range(max(T1, T2) + 1):
            nh0_t = (step_l0(h0_t, gi_t[s * Bp:(s + 1) * Bp, :], t_whh0, bn0_t)
                     if s < T1 else None)
            nh0_x = (step_l0(h0_x, gi_x[s * Bp:(s + 1) * Bp, :], x_whh0, bn0_x)
                     if s < T2 else None)
            if 1 <= s <= T1:
                h1_t = step_l1(h1_t, h0_t, t_wih1, t_whh1, b1_t, bn1_t)
            if 1 <= s <= T2:
                h1_x = step_l1(h1_x, h0_x, x_wih1, x_whh1, b1_x, bn1_x)
            if nh0_t is not None:
                h0_t = nh0_t
            if nh0_x is not None:
                h0_x = nh0_x

        # ---- head: fc(cat(tf, xf)) -> ReLU -> out -> sigmoid ----------------
        # (no concat: FC weight split by input rows; padded feature columns are
        #  exactly zero so the padded FC rows contribute nothing)
        htop = head_ref[0:8, :]                  # bias rows (aligned load)
        b_fc = htop[0:1, :]
        w_out_row = htop[1:2, :]
        b_out = htop[2:3, 0:1]
        w_fc_t = head_ref[8:8 + GP, :]           # (128, FC)
        w_fc_x = head_ref[8 + GP:8 + 2 * GP, :]  # (128, FC)

        hid = (jnp.dot(h1_t, w_fc_t, preferred_element_type=f32)
               + jnp.dot(h1_x, w_fc_x, preferred_element_type=f32)
               + b_fc)
        hid = jnp.maximum(hid, 0.0)
        # (B,64)x(64,1) dot replaced by VPU multiply + lane reduce
        y = jnp.sum(hid * w_out_row, axis=-1, keepdims=True) + b_out
        out_ref[...] = jax.nn.sigmoid(y)

    return kernel


# --------------------------- parameter construction --------------------------
def _uniform(key, shape, k):
    return jax.random.uniform(key, shape, jnp.float32, -k, k)


def make_params(key, transaction_input_size, transaction_hidden_size,
                text_vocab_size, text_embed_dim, text_hidden_size,
                num_layers, fc_hidden_size=64):
    assert num_layers == 2, "fused kernel implements the module's 2-layer GRUs"
    keys = iter(jax.random.split(key, 64))
    params = {}

    def gru_params(input_size, hidden_size, n_layers):
        layers = []
        k = float(hidden_size) ** -0.5   # PyTorch nn.GRU init: U(-1/sqrt(H), 1/sqrt(H))
        for l in range(n_layers):
            d_in = input_size if l == 0 else hidden_size
            # per-gate stacked (gate order r, z, n), stored transposed vs PyTorch
            wih = _uniform(next(keys), (3, d_in, hidden_size), k)
            whh = _uniform(next(keys), (3, hidden_size, hidden_size), k)
            bih = _uniform(next(keys), (3, 1, hidden_size), k)
            bhh = _uniform(next(keys), (3, 1, hidden_size), k)
            layers.append((wih, whh, bih, bhh))
        return layers

    params["trans_gru"] = gru_params(transaction_input_size, transaction_hidden_size, num_layers)
    params["text_gru"] = gru_params(text_embed_dim, text_hidden_size, num_layers)
    params["embedding"] = jax.random.normal(
        next(keys), (text_vocab_size, text_embed_dim), jnp.float32)

    fc_in = transaction_hidden_size + text_hidden_size
    k_fc = float(fc_in) ** -0.5
    # FC weight split by input rows: [transaction part | text part]
    params["w_fc_t"] = _uniform(next(keys), (transaction_hidden_size, fc_hidden_size), k_fc)
    params["w_fc_x"] = _uniform(next(keys), (text_hidden_size, fc_hidden_size), k_fc)
    params["b_fc"] = _uniform(next(keys), (1, fc_hidden_size), k_fc)
    k_out = float(fc_hidden_size) ** -0.5
    params["w_out"] = _uniform(next(keys), (fc_hidden_size, 1), k_out)
    params["b_out"] = _uniform(next(keys), (1, 1), k_out)
    return params


def _merge_gru_layer(wih, whh, bih, bhh, d_in_pad):
    """Per-gate stacked params -> lane-padded merged matrices.

    Returns: w_ih_m (d_in_pad, 384), w_hh_m (128, 384),
             b_gi (1, 384) = [bih_r+bhh_r | bih_z+bhh_z | bih_n],
             b_hh_n (1, 128)."""
    d_in, H = wih.shape[1], wih.shape[2]
    assert H <= GP
    w_ih_m = np.zeros((d_in_pad, G3), np.float32)
    w_hh_m = np.zeros((GP, G3), np.float32)
    b_gi = np.zeros((1, G3), np.float32)
    b_hh_n = np.zeros((1, GP), np.float32)
    for g in range(3):
        w_ih_m[:d_in, g * GP:g * GP + H] = wih[g]
        w_hh_m[:H, g * GP:g * GP + H] = whh[g]
    b_gi[0, 0 * GP:0 * GP + H] = bih[0, 0] + bhh[0, 0]
    b_gi[0, 1 * GP:1 * GP + H] = bih[1, 0] + bhh[1, 0]
    b_gi[0, 2 * GP:2 * GP + H] = bih[2, 0]
    b_hh_n[0, :H] = bhh[2, 0]
    return w_ih_m, w_hh_m, b_gi, b_hh_n


def pack_params(params):
    """Packs the ~22 small weight/bias arrays into 3 contiguous device arrays."""
    t0, t1 = params["trans_gru"]
    x0, x1 = params["text_gru"]
    D1, E = t0[0].shape[1], x0[0].shape[1]
    H1, H2 = t0[1].shape[-1], x0[1].shape[-1]
    D1p, Ep = _round8(D1), _round8(E)

    t_ih0, t_hh0, t_b0, t_bn0 = _merge_gru_layer(*[np.asarray(a) for a in t0], d_in_pad=D1p)
    t_ih1, t_hh1, t_b1, t_bn1 = _merge_gru_layer(*[np.asarray(a) for a in t1], d_in_pad=GP)
    x_ih0, x_hh0, x_b0, x_bn0 = _merge_gru_layer(*[np.asarray(a) for a in x0], d_in_pad=Ep)
    x_ih1, x_hh1, x_b1, x_bn1 = _merge_gru_layer(*[np.asarray(a) for a in x1], d_in_pad=GP)

    blocks = [("t_wih0", t_ih0), ("t_whh0", t_hh0), ("t_wih1", t_ih1), ("t_whh1", t_hh1),
              ("x_wih0", x_ih0), ("x_whh0", x_hh0), ("x_wih1", x_ih1), ("x_whh1", x_hh1)]
    offs, row = {}, 0
    for name, blk in blocks:
        offs[name] = (row, row + blk.shape[0])
        row += blk.shape[0]
    w_pack = np.concatenate([blk for _, blk in blocks], axis=0)       # (rows, 384)

    b_pack = np.zeros((8, G3), np.float32)
    b_pack[0], b_pack[1] = t_b0[0], t_b1[0]
    b_pack[2], b_pack[3] = x_b0[0], x_b1[0]
    b_pack[4, :GP], b_pack[5, :GP] = t_bn0[0], t_bn1[0]
    b_pack[6, :GP], b_pack[7, :GP] = x_bn0[0], x_bn1[0]

    fc_h = params["w_fc_t"].shape[1]
    head = np.zeros((8 + 2 * GP, fc_h), np.float32)
    head[0, :] = np.asarray(params["b_fc"])[0]
    head[1, :] = np.asarray(params["w_out"])[:, 0]
    head[2, 0] = float(np.asarray(params["b_out"])[0, 0])
    head[8:8 + H1, :] = np.asarray(params["w_fc_t"])
    head[8 + GP:8 + GP + H2, :] = np.asarray(params["w_fc_x"])

    return dict(
        w_pack=jnp.asarray(w_pack, jnp.bfloat16),     # bf16 MXU inputs
        b_pack=jnp.asarray(b_pack, jnp.float32),
        head_pack=jnp.asarray(head, jnp.float32),
        embedding=params["embedding"],
        offs=offs,
        dims=dict(D1p=D1p, Ep=Ep),
    )


# --------------------------------- forward -----------------------------------
def _time_major_padded_2d(x_btd, b_pad, d_pad):
    """(B, T, D) batch-first -> (T*b_pad, d_pad) time-major, zero-padded, bf16."""
    x = jnp.transpose(x_btd, (1, 0, 2)).astype(jnp.float32)   # (T, B, D)
    T, B, D = x.shape
    x = jnp.pad(x, ((0, 0), (0, b_pad - B), (0, d_pad - D)))
    return x.reshape(T * b_pad, d_pad).astype(jnp.bfloat16)


def multimodal_fraud_forward(packed, transaction_data, text_data):
    B, T1, _ = transaction_data.shape
    T2 = text_data.shape[1]
    Bp = _round8(B)                                        # sublane-aligned batch

    # plain-JAX glue: embedding gather, layout to time-major, batch/feature pad
    # TODO(synk): nn.Embedding lookup stays as a plain-JAX gather in the wrapper
    # (data-dependent gather; not worth a manual-DMA kernel at these sizes).
    text_embed = packed["embedding"][text_data]            # (B, T2, E)
    tx2 = _time_major_padded_2d(transaction_data, Bp, packed["dims"]["D1p"])
    emb2 = _time_major_padded_2d(text_embed, Bp, packed["dims"]["Ep"])

    kernel = _make_kernel(T1, T2, Bp, packed["offs"])
    vmem = pl.BlockSpec(memory_space=pltpu.MemorySpace.VMEM)
    out_pad = pl.pallas_call(
        kernel,
        out_shape=jax.ShapeDtypeStruct((Bp, 1), jnp.float32),
        in_specs=[vmem] * 5,
        out_specs=vmem,
    )(tx2, emb2, packed["w_pack"], packed["b_pack"], packed["head_pack"])
    return out_pad[:B]                                     # (B, 1)


if __name__ == "__main__":
    # small, module-consistent shapes
    batch = 2
    seq_trans = 8
    transaction_input_size = 8          # == X_train_seq.shape[2]
    transaction_hidden_size = 64
    text_vocab_size = 50
    text_embed_dim = 16
    text_hidden_size = 32
    num_layers = 2
    seq_text = 6

    key = jax.random.PRNGKey(0)
    k_param, k_trans, k_text = jax.random.split(key, 3)

    params = make_params(k_param, transaction_input_size, transaction_hidden_size,
                         text_vocab_size, text_embed_dim, text_hidden_size, num_layers)
    packed = pack_params(params)

    transaction_data = jax.random.normal(
        k_trans, (batch, seq_trans, transaction_input_size), jnp.float32)
    text_data = jax.random.randint(
        k_text, (batch, seq_text), 0, text_vocab_size, dtype=jnp.int32)

    out = multimodal_fraud_forward(packed, transaction_data, text_data)
    out = jax.block_until_ready(out)
    assert out.shape == (batch, 1)
    assert bool(jnp.all((out >= 0.0) & (out <= 1.0)))
    print("KERNEL_OK")
</pallas_src>

<mosaic_0001>
module attributes {stable_mosaic.version = 11 : i64} {
  func.func @kernel(%arg0: memref<64x8xbf16, #tpu.memory_space<vmem>>, %arg1: memref<48x16xbf16, #tpu.memory_space<vmem>>, %arg2: memref<792x384xbf16, #tpu.memory_space<vmem>>, %arg3: memref<8x384xf32, #tpu.memory_space<vmem>>, %arg4: memref<264x64xf32, #tpu.memory_space<vmem>>, %arg5: memref<8x1xf32, #tpu.memory_space<vmem>>) attributes {dimension_semantics = [], scalar_prefetch = 0 : i64, scratch_operands = 0 : i64, tpu.core_type = #tpu.core_type<tc>} {
    %c0 = arith.constant 0 : index
    %c0_0 = arith.constant 0 : index
    %0 = vector.load %arg2[%c0, %c0_0] : memref<792x384xbf16, #tpu.memory_space<vmem>>, vector<8x384xbf16>
    %c8 = arith.constant 8 : index
    %c0_1 = arith.constant 0 : index
    %1 = vector.load %arg2[%c8, %c0_1] : memref<792x384xbf16, #tpu.memory_space<vmem>>, vector<128x384xbf16>
    %c136 = arith.constant 136 : index
    %c0_2 = arith.constant 0 : index
    %2 = vector.load %arg2[%c136, %c0_2] : memref<792x384xbf16, #tpu.memory_space<vmem>>, vector<128x384xbf16>
    %c264 = arith.constant 264 : index
    %c0_3 = arith.constant 0 : index
    %3 = vector.load %arg2[%c264, %c0_3] : memref<792x384xbf16, #tpu.memory_space<vmem>>, vector<128x384xbf16>
    %c392 = arith.constant 392 : index
    %c0_4 = arith.constant 0 : index
    %4 = vector.load %arg2[%c392, %c0_4] : memref<792x384xbf16, #tpu.memory_space<vmem>>, vector<16x384xbf16>
    %c408 = arith.constant 408 : index
    %c0_5 = arith.constant 0 : index
    %5 = vector.load %arg2[%c408, %c0_5] : memref<792x384xbf16, #tpu.memory_space<vmem>>, vector<128x384xbf16>
    %c536 = arith.constant 536 : index
    %c0_6 = arith.constant 0 : index
    %6 = vector.load %arg2[%c536, %c0_6] : memref<792x384xbf16, #tpu.memory_space<vmem>>, vector<128x384xbf16>
    %c664 = arith.constant 664 : index
    %c0_7 = arith.constant 0 : index
    %7 = vector.load %arg2[%c664, %c0_7] : memref<792x384xbf16, #tpu.memory_space<vmem>>, vector<128x384xbf16>
    %c0_8 = arith.constant 0 : index
    %c0_9 = arith.constant 0 : index
    %8 = vector.load %arg3[%c0_8, %c0_9] : memref<8x384xf32, #tpu.memory_space<vmem>>, vector<8x384xf32>
    %9 = vector.extract_strided_slice %8 {offsets = [1, 0], sizes = [1, 384], strides = [1, 1]} : vector<8x384xf32> to vector<1x384xf32>
    %10 = vector.shape_cast %9 : vector<1x384xf32> to vector<1x384xf32>
    %11 = vector.broadcast %10 : vector<1x384xf32> to vector<8x384xf32>
    %12 = vector.extract_strided_slice %8 {offsets = [3, 0], sizes = [1, 384], strides = [1, 1]} : vector<8x384xf32> to vector<1x384xf32>
    %13 = vector.shape_cast %12 : vector<1x384xf32> to vector<1x384xf32>
    %14 = vector.broadcast %13 : vector<1x384xf32> to vector<8x384xf32>
    %15 = vector.extract_strided_slice %8 {offsets = [4, 0], sizes = [1, 128], strides = [1, 1]} : vector<8x384xf32> to vector<1x128xf32>
    %16 = vector.shape_cast %15 : vector<1x128xf32> to vector<1x128xf32>
    %17 = vector.broadcast %16 : vector<1x128xf32> to vector<8x128xf32>
    %18 = vector.extract_strided_slice %8 {offsets = [5, 0], sizes = [1, 128], strides = [1, 1]} : vector<8x384xf32> to vector<1x128xf32>
    %19 = vector.shape_cast %18 : vector<1x128xf32> to vector<1x128xf32>
    %20 = vector.broadcast %19 : vector<1x128xf32> to vector<8x128xf32>
    %21 = vector.extract_strided_slice %8 {offsets = [6, 0], sizes = [1, 128], strides = [1, 1]} : vector<8x384xf32> to vector<1x128xf32>
    %22 = vector.shape_cast %21 : vector<1x128xf32> to vector<1x128xf32>
    %23 = vector.broadcast %22 : vector<1x128xf32> to vector<8x128xf32>
    %24 = vector.extract_strided_slice %8 {offsets = [7, 0], sizes = [1, 128], strides = [1, 1]} : vector<8x384xf32> to vector<1x128xf32>
    %25 = vector.shape_cast %24 : vector<1x128xf32> to vector<1x128xf32>
    %26 = vector.broadcast %25 : vector<1x128xf32> to vector<8x128xf32>
    %c0_10 = arith.constant 0 : index
    %c0_11 = arith.constant 0 : index
    %27 = vector.load %arg0[%c0_10, %c0_11] : memref<64x8xbf16, #tpu.memory_space<vmem>>, vector<64x8xbf16>
    %cst = arith.constant dense<0.000000e+00> : vector<64x384xf32>
    %28 = tpu.matmul %27, %0, %cst {dimension_numbers = #tpu.dot_dimension_numbers<[1], [0], [0], [1], [0, 0, 1, 1], [], []>} : vector<64x8xbf16>, vector<8x384xbf16>, vector<64x384xf32> -> vector<64x384xf32>
    %29 = vector.extract_strided_slice %8 {offsets = [0, 0], sizes = [1, 384], strides = [1, 1]} : vector<8x384xf32> to vector<1x384xf32>
    %30 = vector.broadcast %29 : vector<1x384xf32> to vector<64x384xf32>
    %31 = arith.addf %28, %30 : vector<64x384xf32>
    %c0_12 = arith.constant 0 : index
    %c0_13 = arith.constant 0 : index
    %32 = vector.load %arg1[%c0_12, %c0_13] : memref<48x16xbf16, #tpu.memory_space<vmem>>, vector<48x16xbf16>
    %cst_14 = arith.constant dense<0.000000e+00> : vector<48x384xf32>
    %33 = tpu.matmul %32, %4, %cst_14 {dimension_numbers = #tpu.dot_dimension_numbers<[1], [0], [0], [1], [0, 0, 1, 1], [], []>} : vector<48x16xbf16>, vector<16x384xbf16>, vector<48x384xf32> -> vector<48x384xf32>
    %34 = vector.extract_strided_slice %8 {offsets = [2, 0], sizes = [1, 384], strides = [1, 1]} : vector<8x384xf32> to vector<1x384xf32>
    %35 = vector.broadcast %34 : vector<1x384xf32> to vector<48x384xf32>
    %36 = arith.addf %33, %35 : vector<48x384xf32>
    %cst_15 = arith.constant 0.000000e+00 : f32
    %37 = vector.broadcast %cst_15 : f32 to vector<8x128xf32>
    %38 = vector.extract_strided_slice %31 {offsets = [0, 0], sizes = [8, 384], strides = [1, 1]} : vector<64x384xf32> to vector<8x384xf32>
    %39 = arith.truncf %37 : vector<8x128xf32> to vector<8x128xbf16>
    %cst_16 = arith.constant dense<0.000000e+00> : vector<8x384xf32>
    %40 = tpu.matmul %39, %1, %cst_16 {dimension_numbers = #tpu.dot_dimension_numbers<[1], [0], [0], [1], [0, 0, 1, 1], [], []>} : vector<8x128xbf16>, vector<128x384xbf16>, vector<8x384xf32> -> vector<8x384xf32>
    %41 = vector.extract_strided_slice %38 {offsets = [0, 0], sizes = [8, 128], strides = [1, 1]} : vector<8x384xf32> to vector<8x128xf32>
    %42 = vector.extract_strided_slice %40 {offsets = [0, 0], sizes = [8, 128], strides = [1, 1]} : vector<8x384xf32> to vector<8x128xf32>
    %43 = arith.addf %41, %42 : vector<8x128xf32>
    %44 = arith.negf %43 : vector<8x128xf32>
    %45 = math.exp %44 : vector<8x128xf32>
    %cst_17 = arith.constant 1.000000e+00 : f32
    %46 = vector.broadcast %cst_17 : f32 to vector<8x128xf32>
    %47 = arith.addf %46, %45 : vector<8x128xf32>
    %48 = arith.divf %46, %47 : vector<8x128xf32>
    %49 = vector.extract_strided_slice %38 {offsets = [0, 128], sizes = [8, 128], strides = [1, 1]} : vector<8x384xf32> to vector<8x128xf32>
    %50 = vector.extract_strided_slice %40 {offsets = [0, 128], sizes = [8, 128], strides = [1, 1]} : vector<8x384xf32> to vector<8x128xf32>
    %51 = arith.addf %49, %50 : vector<8x128xf32>
    %52 = arith.negf %51 : vector<8x128xf32>
    %53 = math.exp %52 : vector<8x128xf32>
    %cst_18 = arith.constant 1.000000e+00 : f32
    %54 = vector.broadcast %cst_18 : f32 to vector<8x128xf32>
    %55 = arith.addf %54, %53 : vector<8x128xf32>
    %56 = arith.divf %54, %55 : vector<8x128xf32>
    %57 = vector.extract_strided_slice %38 {offsets = [0, 256], sizes = [8, 128], strides = [1, 1]} : vector<8x384xf32> to vector<8x128xf32>
    %58 = vector.extract_strided_slice %40 {offsets = [0, 256], sizes = [8, 128], strides = [1, 1]} : vector<8x384xf32> to vector<8x128xf32>
    %59 = arith.addf %58, %17 : vector<8x128xf32>
    %60 = arith.mulf %48, %59 : vector<8x128xf32>
    %61 = arith.addf %57, %60 : vector<8x128xf32>
    %62 = math.tanh %61 : vector<8x128xf32>
    %cst_19 = arith.constant 1.000000e+00 : f32
    %63 = vector.broadcast %cst_19 : f32 to vector<8x128xf32>
    %64 = arith.subf %63, %56 : vector<8x128xf32>
    %65 = arith.mulf %64, %62 : vector<8x128xf32>
    %66 = arith.mulf %56, %37 : vector<8x128xf32>
    %67 = arith.addf %65, %66 : vector<8x128xf32>
    %68 = vector.extract_strided_slice %36 {offsets = [0, 0], sizes = [8, 384], strides = [1, 1]} : vector<48x384xf32> to vector<8x384xf32>
    %69 = arith.truncf %37 : vector<8x128xf32> to vector<8x128xbf16>
    %cst_20 = arith.constant dense<0.000000e+00> : vector<8x384xf32>
    %70 = tpu.matmul %69, %5, %cst_20 {dimension_numbers = #tpu.dot_dimension_numbers<[1], [0], [0], [1], [0, 0, 1, 1], [], []>} : vector<8x128xbf16>, vector<128x384xbf16>, vector<8x384xf32> -> vector<8x384xf32>
    %71 = vector.extract_strided_slice %68 {offsets = [0, 0], sizes = [8, 128], strides = [1, 1]} : vector<8x384xf32> to vector<8x128xf32>
    %72 = vector.extract_strided_slice %70 {offsets = [0, 0], sizes = [8, 128], strides = [1, 1]} : vector<8x384xf32> to vector<8x128xf32>
    %73 = arith.addf %71, %72 : vector<8x128xf32>
    %74 = arith.negf %73 : vector<8x128xf32>
    %75 = math.exp %74 : vector<8x128xf32>
    %cst_21 = arith.constant 1.000000e+00 : f32
    %76 = vector.broadcast %cst_21 : f32 to vector<8x128xf32>
    %77 = arith.addf %76, %75 : vector<8x128xf32>
    %78 = arith.divf %76, %77 : vector<8x128xf32>
    %79 = vector.extract_strided_slice %68 {offsets = [0, 128], sizes = [8, 128], strides = [1, 1]} : vector<8x384xf32> to vector<8x128xf32>
    %80 = vector.extract_strided_slice %70 {offsets = [0, 128], sizes = [8, 128], strides = [1, 1]} : vector<8x384xf32> to vector<8x128xf32>
    %81 = arith.addf %79, %80 : vector<8x128xf32>
    %82 = arith.negf %81 : vector<8x128xf32>
    %83 = math.exp %82 : vector<8x128xf32>
    %cst_22 = arith.constant 1.000000e+00 : f32
    %84 = vector.broadcast %cst_22 : f32 to vector<8x128xf32>
    %85 = arith.addf %84, %83 : vector<8x128xf32>
    %86 = arith.divf %84, %85 : vector<8x128xf32>
    %87 = vector.extract_strided_slice %68 {offsets = [0, 256], sizes = [8, 128], strides = [1, 1]} : vector<8x384xf32> to vector<8x128xf32>
    %88 = vector.extract_strided_slice %70 {offsets = [0, 256], sizes = [8, 128], strides = [1, 1]} : vector<8x384xf32> to vector<8x128xf32>
    %89 = arith.addf %88, %23 : vector<8x128xf32>
    %90 = arith.mulf %78, %89 : vector<8x128xf32>
    %91 = arith.addf %87, %90 : vector<8x128xf32>
    %92 = math.tanh %91 : vector<8x128xf32>
    %cst_23 = arith.constant 1.000000e+00 : f32
    %93 = vector.broadcast %cst_23 : f32 to vector<8x128xf32>
    %94 = arith.subf %93, %86 : vector<8x128xf32>
    %95 = arith.mulf %94, %92 : vector<8x128xf32>
    %96 = arith.mulf %86, %37 : vector<8x128xf32>
    %97 = arith.addf %95, %96 : vector<8x128xf32>
    %98 = vector.extract_strided_slice %31 {offsets = [8, 0], sizes = [8, 384], strides = [1, 1]} : vector<64x384xf32> to vector<8x384xf32>
    %99 = arith.truncf %67 : vector<8x128xf32> to vector<8x128xbf16>
    %cst_24 = arith.constant dense<0.000000e+00> : vector<8x384xf32>
    %100 = tpu.matmul %99, %1, %cst_24 {dimension_numbers = #tpu.dot_dimension_numbers<[1], [0], [0], [1], [0, 0, 1, 1], [], []>} : vector<8x128xbf16>, vector<128x384xbf16>, vector<8x384xf32> -> vector<8x384xf32>
    %101 = vector.extract_strided_slice %98 {offsets = [0, 0], sizes = [8, 128], strides = [1, 1]} : vector<8x384xf32> to vector<8x128xf32>
    %102 = vector.extract_strided_slice %100 {offsets = [0, 0], sizes = [8, 128], strides = [1, 1]} : vector<8x384xf32> to vector<8x128xf32>
    %103 = arith.addf %101, %102 : vector<8x128xf32>
    %104 = arith.negf %103 : vector<8x128xf32>
    %105 = math.exp %104 : vector<8x128xf32>
    %cst_25 = arith.constant 1.000000e+00 : f32
    %106 = vector.broadcast %cst_25 : f32 to vector<8x128xf32>
    %107 = arith.addf %106, %105 : vector<8x128xf32>
    %108 = arith.divf %106, %107 : vector<8x128xf32>
    %109 = vector.extract_strided_slice %98 {offsets = [0, 128], sizes = [8, 128], strides = [1, 1]} : vector<8x384xf32> to vector<8x128xf32>
    %110 = vector.extract_strided_slice %100 {offsets = [0, 128], sizes = [8, 128], strides = [1, 1]} : vector<8x384xf32> to vector<8x128xf32>
    %111 = arith.addf %109, %110 : vector<8x128xf32>
    %112 = arith.negf %111 : vector<8x128xf32>
    %113 = math.exp %112 : vector<8x128xf32>
    %cst_26 = arith.constant 1.000000e+00 : f32
    %114 = vector.broadcast %cst_26 : f32 to vector<8x128xf32>
    %115 = arith.addf %114, %113 : vector<8x128xf32>
    %116 = arith.divf %114, %115 : vector<8x128xf32>
    %117 = vector.extract_strided_slice %98 {offsets = [0, 256], sizes = [8, 128], strides = [1, 1]} : vector<8x384xf32> to vector<8x128xf32>
    %118 = vector.extract_strided_slice %100 {offsets = [0, 256], sizes = [8, 128], strides = [1, 1]} : vector<8x384xf32> to vector<8x128xf32>
    %119 = arith.addf %118, %17 : vector<8x128xf32>
    %120 = arith.mulf %108, %119 : vector<8x128xf32>
    %121 = arith.addf %117, %120 : vector<8x128xf32>
    %122 = math.tanh %121 : vector<8x128xf32>
    %cst_27 = arith.constant 1.000000e+00 : f32
    %123 = vector.broadcast %cst_27 : f32 to vector<8x128xf32>
    %124 = arith.subf %123, %116 : vector<8x128xf32>
    %125 = arith.mulf %124, %122 : vector<8x128xf32>
    %126 = arith.mulf %116, %67 : vector<8x128xf32>
    %127 = arith.addf %125, %126 : vector<8x128xf32>
    %128 = vector.extract_strided_slice %36 {offsets = [8, 0], sizes = [8, 384], strides = [1, 1]} : vector<48x384xf32> to vector<8x384xf32>
    %129 = arith.truncf %97 : vector<8x128xf32> to vector<8x128xbf16>
    %cst_28 = arith.constant dense<0.000000e+00> : vector<8x384xf32>
    %130 = tpu.matmul %129, %5, %cst_28 {dimension_numbers = #tpu.dot_dimension_numbers<[1], [0], [0], [1], [0, 0, 1, 1], [], []>} : vector<8x128xbf16>, vector<128x384xbf16>, vector<8x384xf32> -> vector<8x384xf32>
    %131 = vector.extract_strided_slice %128 {offsets = [0, 0], sizes = [8, 128], strides = [1, 1]} : vector<8x384xf32> to vector<8x128xf32>
    %132 = vector.extract_strided_slice %130 {offsets = [0, 0], sizes = [8, 128], strides = [1, 1]} : vector<8x384xf32> to vector<8x128xf32>
    %133 = arith.addf %131, %132 : vector<8x128xf32>
    %134 = arith.negf %133 : vector<8x128xf32>
    %135 = math.exp %134 : vector<8x128xf32>
    %cst_29 = arith.constant 1.000000e+00 : f32
    %136 = vector.broadcast %cst_29 : f32 to vector<8x128xf32>
    %137 = arith.addf %136, %135 : vector<8x128xf32>
    %138 = arith.divf %136, %137 : vector<8x128xf32>
    %139 = vector.extract_strided_slice %128 {offsets = [0, 128], sizes = [8, 128], strides = [1, 1]} : vector<8x384xf32> to vector<8x128xf32>
    %140 = vector.extract_strided_slice %130 {offsets = [0, 128], sizes = [8, 128], strides = [1, 1]} : vector<8x384xf32> to vector<8x128xf32>
    %141 = arith.addf %139, %140 : vector<8x128xf32>
    %142 = arith.negf %141 : vector<8x128xf32>
    %143 = math.exp %142 : vector<8x128xf32>
    %cst_30 = arith.constant 1.000000e+00 : f32
    %144 = vector.broadcast %cst_30 : f32 to vector<8x128xf32>
    %145 = arith.addf %144, %143 : vector<8x128xf32>
    %146 = arith.divf %144, %145 : vector<8x128xf32>
    %147 = vector.extract_strided_slice %128 {offsets = [0, 256], sizes = [8, 128], strides = [1, 1]} : vector<8x384xf32> to vector<8x128xf32>
    %148 = vector.extract_strided_slice %130 {offsets = [0, 256], sizes = [8, 128], strides = [1, 1]} : vector<8x384xf32> to vector<8x128xf32>
    %149 = arith.addf %148, %23 : vector<8x128xf32>
    %150 = arith.mulf %138, %149 : vector<8x128xf32>
    %151 = arith.addf %147, %150 : vector<8x128xf32>
    %152 = math.tanh %151 : vector<8x128xf32>
    %cst_31 = arith.constant 1.000000e+00 : f32
    %153 = vector.broadcast %cst_31 : f32 to vector<8x128xf32>
    %154 = arith.subf %153, %146 : vector<8x128xf32>
    %155 = arith.mulf %154, %152 : vector<8x128xf32>
    %156 = arith.mulf %146, %97 : vector<8x128xf32>
    %157 = arith.addf %155, %156 : vector<8x128xf32>
    %158 = arith.truncf %67 : vector<8x128xf32> to vector<8x128xbf16>
    %cst_32 = arith.constant dense<0.000000e+00> : vector<8x384xf32>
    %159 = tpu.matmul %158, %2, %cst_32 {dimension_numbers = #tpu.dot_dimension_numbers<[1], [0], [0], [1], [0, 0, 1, 1], [], []>} : vector<8x128xbf16>, vector<128x384xbf16>, vector<8x384xf32> -> vector<8x384xf32>
    %160 = arith.addf %159, %11 : vector<8x384xf32>
    %161 = arith.truncf %37 : vector<8x128xf32> to vector<8x128xbf16>
    %cst_33 = arith.constant dense<0.000000e+00> : vector<8x384xf32>
    %162 = tpu.matmul %161, %3, %cst_33 {dimension_numbers = #tpu.dot_dimension_numbers<[1], [0], [0], [1], [0, 0, 1, 1], [], []>} : vector<8x128xbf16>, vector<128x384xbf16>, vector<8x384xf32> -> vector<8x384xf32>
    %163 = vector.extract_strided_slice %160 {offsets = [0, 0], sizes = [8, 128], strides = [1, 1]} : vector<8x384xf32> to vector<8x128xf32>
    %164 = vector.extract_strided_slice %162 {offsets = [0, 0], sizes = [8, 128], strides = [1, 1]} : vector<8x384xf32> to vector<8x128xf32>
    %165 = arith.addf %163, %164 : vector<8x128xf32>
    %166 = arith.negf %165 : vector<8x128xf32>
    %167 = math.exp %166 : vector<8x128xf32>
    %cst_34 = arith.constant 1.000000e+00 : f32
    %168 = vector.broadcast %cst_34 : f32 to vector<8x128xf32>
    %169 = arith.addf %168, %167 : vector<8x128xf32>
    %170 = arith.divf %168, %169 : vector<8x128xf32>
    %171 = vector.extract_strided_slice %160 {offsets = [0, 128], sizes = [8, 128], strides = [1, 1]} : vector<8x384xf32> to vector<8x128xf32>
    %172 = vector.extract_strided_slice %162 {offsets = [0, 128], sizes = [8, 128], strides = [1, 1]} : vector<8x384xf32> to vector<8x128xf32>
    %173 = arith.addf %171, %172 : vector<8x128xf32>
    %174 = arith.negf %173 : vector<8x128xf32>
    %175 = math.exp %174 : vector<8x128xf32>
    %cst_35 = arith.constant 1.000000e+00 : f32
    %176 = vector.broadcast %cst_35 : f32 to vector<8x128xf32>
    %177 = arith.addf %176, %175 : vector<8x128xf32>
    %178 = arith.divf %176, %177 : vector<8x128xf32>
    %179 = vector.extract_strided_slice %160 {offsets = [0, 256], sizes = [8, 128], strides = [1, 1]} : vector<8x384xf32> to vector<8x128xf32>
    %180 = vector.extract_strided_slice %162 {offsets = [0, 256], sizes = [8, 128], strides = [1, 1]} : vector<8x384xf32> to vector<8x128xf32>
    %181 = arith.addf %180, %20 : vector<8x128xf32>
    %182 = arith.mulf %170, %181 : vector<8x128xf32>
    %183 = arith.addf %179, %182 : vector<8x128xf32>
    %184 = math.tanh %183 : vector<8x128xf32>
    %cst_36 = arith.constant 1.000000e+00 : f32
    %185 = vector.broadcast %cst_36 : f32 to vector<8x128xf32>
    %186 = arith.subf %185, %178 : vector<8x128xf32>
    %187 = arith.mulf %186, %184 : vector<8x128xf32>
    %188 = arith.mulf %178, %37 : vector<8x128xf32>
    %189 = arith.addf %187, %188 : vector<8x128xf32>
    %190 = arith.truncf %97 : vector<8x128xf32> to vector<8x128xbf16>
    %cst_37 = arith.constant dense<0.000000e+00> : vector<8x384xf32>
    %191 = tpu.matmul %190, %6, %cst_37 {dimension_numbers = #tpu.dot_dimension_numbers<[1], [0], [0], [1], [0, 0, 1, 1], [], []>} : vector<8x128xbf16>, vector<128x384xbf16>, vector<8x384xf32> -> vector<8x384xf32>
    %192 = arith.addf %191, %14 : vector<8x384xf32>
    %193 = arith.truncf %37 : vector<8x128xf32> to vector<8x128xbf16>
    %cst_38 = arith.constant dense<0.000000e+00> : vector<8x384xf32>
    %194 = tpu.matmul %193, %7, %cst_38 {dimension_numbers = #tpu.dot_dimension_numbers<[1], [0], [0], [1], [0, 0, 1, 1], [], []>} : vector<8x128xbf16>, vector<128x384xbf16>, vector<8x384xf32> -> vector<8x384xf32>
    %195 = vector.extract_strided_slice %192 {offsets = [0, 0], sizes = [8, 128], strides = [1, 1]} : vector<8x384xf32> to vector<8x128xf32>
    %196 = vector.extract_strided_slice %194 {offsets = [0, 0], sizes = [8, 128], strides = [1, 1]} : vector<8x384xf32> to vector<8x128xf32>
    %197 = arith.addf %195, %196 : vector<8x128xf32>
    %198 = arith.negf %197 : vector<8x128xf32>
    %199 = math.exp %198 : vector<8x128xf32>
    %cst_39 = arith.constant 1.000000e+00 : f32
    %200 = vector.broadcast %cst_39 : f32 to vector<8x128xf32>
    %201 = arith.addf %200, %199 : vector<8x128xf32>
    %202 = arith.divf %200, %201 : vector<8x128xf32>
    %203 = vector.extract_strided_slice %192 {offsets = [0, 128], sizes = [8, 128], strides = [1, 1]} : vector<8x384xf32> to vector<8x128xf32>
    %204 = vector.extract_strided_slice %194 {offsets = [0, 128], sizes = [8, 128], strides = [1, 1]} : vector<8x384xf32> to vector<8x128xf32>
    %205 = arith.addf %203, %204 : vector<8x128xf32>
    %206 = arith.negf %205 : vector<8x128xf32>
    %207 = math.exp %206 : vector<8x128xf32>
    %cst_40 = arith.constant 1.000000e+00 : f32
    %208 = vector.broadcast %cst_40 : f32 to vector<8x128xf32>
    %209 = arith.addf %208, %207 : vector<8x128xf32>
    %210 = arith.divf %208, %209 : vector<8x128xf32>
    %211 = vector.extract_strided_slice %192 {offsets = [0, 256], sizes = [8, 128], strides = [1, 1]} : vector<8x384xf32> to vector<8x128xf32>
    %212 = vector.extract_strided_slice %194 {offsets = [0, 256], sizes = [8, 128], strides = [1, 1]} : vector<8x384xf32> to vector<8x128xf32>
    %213 = arith.addf %212, %26 : vector<8x128xf32>
    %214 = arith.mulf %202, %213 : vector<8x128xf32>
    %215 = arith.addf %211, %214 : vector<8x128xf32>
    %216 = math.tanh %215 : vector<8x128xf32>
    %cst_41 = arith.constant 1.000000e+00 : f32
    %217 = vector.broadcast %cst_41 : f32 to vector<8x128xf32>
    %218 = arith.subf %217, %210 : vector<8x128xf32>
    %219 = arith.mulf %218, %216 : vector<8x128xf32>
    %220 = arith.mulf %210, %37 : vector<8x128xf32>
    %221 = arith.addf %219, %220 : vector<8x128xf32>
    %222 = vector.extract_strided_slice %31 {offsets = [16, 0], sizes = [8, 384], strides = [1, 1]} : vector<64x384xf32> to vector<8x384xf32>
    %223 = arith.truncf %127 : vector<8x128xf32> to vector<8x128xbf16>
    %cst_42 = arith.constant dense<0.000000e+00> : vector<8x384xf32>
    %224 = tpu.matmul %223, %1, %cst_42 {dimension_numbers = #tpu.dot_dimension_numbers<[1], [0], [0], [1], [0, 0, 1, 1], [], []>} : vector<8x128xbf16>, vector<128x384xbf16>, vector<8x384xf32> -> vector<8x384xf32>
    %225 = vector.extract_strided_slice %222 {offsets = [0, 0], sizes = [8, 128], strides = [1, 1]} : vector<8x384xf32> to vector<8x128xf32>
    %226 = vector.extract_strided_slice %224 {offsets = [0, 0], sizes = [8, 128], strides = [1, 1]} : vector<8x384xf32> to vector<8x128xf32>
    %227 = arith.addf %225, %226 : vector<8x128xf32>
    %228 = arith.negf %227 : vector<8x128xf32>
    %229 = math.exp %228 : vector<8x128xf32>
    %cst_43 = arith.constant 1.000000e+00 : f32
    %230 = vector.broadcast %cst_43 : f32 to vector<8x128xf32>
    %231 = arith.addf %230, %229 : vector<8x128xf32>
    %232 = arith.divf %230, %231 : vector<8x128xf32>
    %233 = vector.extract_strided_slice %222 {offsets = [0, 128], sizes = [8, 128], strides = [1, 1]} : vector<8x384xf32> to vector<8x128xf32>
    %234 = vector.extract_strided_slice %224 {offsets = [0, 128], sizes = [8, 128], strides = [1, 1]} : vector<8x384xf32> to vector<8x128xf32>
    %235 = arith.addf %233, %234 : vector<8x128xf32>
    %236 = arith.negf %235 : vector<8x128xf32>
    %237 = math.exp %236 : vector<8x128xf32>
    %cst_44 = arith.constant 1.000000e+00 : f32
    %238 = vector.broadcast %cst_44 : f32 to vector<8x128xf32>
    %239 = arith.addf %238, %237 : vector<8x128xf32>
    %240 = arith.divf %238, %239 : vector<8x128xf32>
    %241 = vector.extract_strided_slice %222 {offsets = [0, 256], sizes = [8, 128], strides = [1, 1]} : vector<8x384xf32> to vector<8x128xf32>
    %242 = vector.extract_strided_slice %224 {offsets = [0, 256], sizes = [8, 128], strides = [1, 1]} : vector<8x384xf32> to vector<8x128xf32>
    %243 = arith.addf %242, %17 : vector<8x128xf32>
    %244 = arith.mulf %232, %243 : vector<8x128xf32>
    %245 = arith.addf %241, %244 : vector<8x128xf32>
    %246 = math.tanh %245 : vector<8x128xf32>
    %cst_45 = arith.constant 1.000000e+00 : f32
    %247 = vector.broadcast %cst_45 : f32 to vector<8x128xf32>
    %248 = arith.subf %247, %240 : vector<8x128xf32>
    %249 = arith.mulf %248, %246 : vector<8x128xf32>
    %250 = arith.mulf %240, %127 : vector<8x128xf32>
    %251 = arith.addf %249, %250 : vector<8x128xf32>
    %252 = vector.extract_strided_slice %36 {offsets = [16, 0], sizes = [8, 384], strides = [1, 1]} : vector<48x384xf32> to vector<8x384xf32>
    %253 = arith.truncf %157 : vector<8x128xf32> to vector<8x128xbf16>
    %cst_46 = arith.constant dense<0.000000e+00> : vector<8x384xf32>
    %254 = tpu.matmul %253, %5, %cst_46 {dimension_numbers = #tpu.dot_dimension_numbers<[1], [0], [0], [1], [0, 0, 1, 1], [], []>} : vector<8x128xbf16>, vector<128x384xbf16>, vector<8x384xf32> -> vector<8x384xf32>
    %255 = vector.extract_strided_slice %252 {offsets = [0, 0], sizes = [8, 128], strides = [1, 1]} : vector<8x384xf32> to vector<8x128xf32>
    %256 = vector.extract_strided_slice %254 {offsets = [0, 0], sizes = [8, 128], strides = [1, 1]} : vector<8x384xf32> to vector<8x128xf32>
    %257 = arith.addf %255, %256 : vector<8x128xf32>
    %258 = arith.negf %257 : vector<8x128xf32>
    %259 = math.exp %258 : vector<8x128xf32>
    %cst_47 = arith.constant 1.000000e+00 : f32
    %260 = vector.broadcast %cst_47 : f32 to vector<8x128xf32>
    %261 = arith.addf %260, %259 : vector<8x128xf32>
    %262 = arith.divf %260, %261 : vector<8x128xf32>
    %263 = vector.extract_strided_slice %252 {offsets = [0, 128], sizes = [8, 128], strides = [1, 1]} : vector<8x384xf32> to vector<8x128xf32>
    %264 = vector.extract_strided_slice %254 {offsets = [0, 128], sizes = [8, 128], strides = [1, 1]} : vector<8x384xf32> to vector<8x128xf32>
    %265 = arith.addf %263, %264 : vector<8x128xf32>
    %266 = arith.negf %265 : vector<8x128xf32>
    %267 = math.exp %266 : vector<8x128xf32>
    %cst_48 = arith.constant 1.000000e+00 : f32
    %268 = vector.broadcast %cst_48 : f32 to vector<8x128xf32>
    %269 = arith.addf %268, %267 : vector<8x128xf32>
    %270 = arith.divf %268, %269 : vector<8x128xf32>
    %271 = vector.extract_strided_slice %252 {offsets = [0, 256], sizes = [8, 128], strides = [1, 1]} : vector<8x384xf32> to vector<8x128xf32>
    %272 = vector.extract_strided_slice %254 {offsets = [0, 256], sizes = [8, 128], strides = [1, 1]} : vector<8x384xf32> to vector<8x128xf32>
    %273 = arith.addf %272, %23 : vector<8x128xf32>
    %274 = arith.mulf %262, %273 : vector<8x128xf32>
    %275 = arith.addf %271, %274 : vector<8x128xf32>
    %276 = math.tanh %275 : vector<8x128xf32>
    %cst_49 = arith.constant 1.000000e+00 : f32
    %277 = vector.broadcast %cst_49 : f32 to vector<8x128xf32>
    %278 = arith.subf %277, %270 : vector<8x128xf32>
    %279 = arith.mulf %278, %276 : vector<8x128xf32>
    %280 = arith.mulf %270, %157 : vector<8x128xf32>
    %281 = arith.addf %279, %280 : vector<8x128xf32>
    %282 = arith.truncf %127 : vector<8x128xf32> to vector<8x128xbf16>
    %cst_50 = arith.constant dense<0.000000e+00> : vector<8x384xf32>
    %283 = tpu.matmul %282, %2, %cst_50 {dimension_numbers = #tpu.dot_dimension_numbers<[1], [0], [0], [1], [0, 0, 1, 1], [], []>} : vector<8x128xbf16>, vector<128x384xbf16>, vector<8x384xf32> -> vector<8x384xf32>
    %284 = arith.addf %283, %11 : vector<8x384xf32>
    %285 = arith.truncf %189 : vector<8x128xf32> to vector<8x128xbf16>
    %cst_51 = arith.constant dense<0.000000e+00> : vector<8x384xf32>
    %286 = tpu.matmul %285, %3, %cst_51 {dimension_numbers = #tpu.dot_dimension_numbers<[1], [0], [0], [1], [0, 0, 1, 1], [], []>} : vector<8x128xbf16>, vector<128x384xbf16>, vector<8x384xf32> -> vector<8x384xf32>
    %287 = vector.extract_strided_slice %284 {offsets = [0, 0], sizes = [8, 128], strides = [1, 1]} : vector<8x384xf32> to vector<8x128xf32>
    %288 = vector.extract_strided_slice %286 {offsets = [0, 0], sizes = [8, 128], strides = [1, 1]} : vector<8x384xf32> to vector<8x128xf32>
    %289 = arith.addf %287, %288 : vector<8x128xf32>
    %290 = arith.negf %289 : vector<8x128xf32>
    %291 = math.exp %290 : vector<8x128xf32>
    %cst_52 = arith.constant 1.000000e+00 : f32
    %292 = vector.broadcast %cst_52 : f32 to vector<8x128xf32>
    %293 = arith.addf %292, %291 : vector<8x128xf32>
    %294 = arith.divf %292, %293 : vector<8x128xf32>
    %295 = vector.extract_strided_slice %284 {offsets = [0, 128], sizes = [8, 128], strides = [1, 1]} : vector<8x384xf32> to vector<8x128xf32>
    %296 = vector.extract_strided_slice %286 {offsets = [0, 128], sizes = [8, 128], strides = [1, 1]} : vector<8x384xf32> to vector<8x128xf32>
    %297 = arith.addf %295, %296 : vector<8x128xf32>
    %298 = arith.negf %297 : vector<8x128xf32>
    %299 = math.exp %298 : vector<8x128xf32>
    %cst_53 = arith.constant 1.000000e+00 : f32
    %300 = vector.broadcast %cst_53 : f32 to vector<8x128xf32>
    %301 = arith.addf %300, %299 : vector<8x128xf32>
    %302 = arith.divf %300, %301 : vector<8x128xf32>
    %303 = vector.extract_strided_slice %284 {offsets = [0, 256], sizes = [8, 128], strides = [1, 1]} : vector<8x384xf32> to vector<8x128xf32>
    %304 = vector.extract_strided_slice %286 {offsets = [0, 256], sizes = [8, 128], strides = [1, 1]} : vector<8x384xf32> to vector<8x128xf32>
    %305 = arith.addf %304, %20 : vector<8x128xf32>
    %306 = arith.mulf %294, %305 : vector<8x128xf32>
    %307 = arith.addf %303, %306 : vector<8x128xf32>
    %308 = math.tanh %307 : vector<8x128xf32>
    %cst_54 = arith.constant 1.000000e+00 : f32
    %309 = vector.broadcast %cst_54 : f32 to vector<8x128xf32>
    %310 = arith.subf %309, %302 : vector<8x128xf32>
    %311 = arith.mulf %310, %308 : vector<8x128xf32>
    %312 = arith.mulf %302, %189 : vector<8x128xf32>
    %313 = arith.addf %311, %312 : vector<8x128xf32>
    %314 = arith.truncf %157 : vector<8x128xf32> to vector<8x128xbf16>
    %cst_55 = arith.constant dense<0.000000e+00> : vector<8x384xf32>
    %315 = tpu.matmul %314, %6, %cst_55 {dimension_numbers = #tpu.dot_dimension_numbers<[1], [0], [0], [1], [0, 0, 1, 1], [], []>} : vector<8x128xbf16>, vector<128x384xbf16>, vector<8x384xf32> -> vector<8x384xf32>
    %316 = arith.addf %315, %14 : vector<8x384xf32>
    %317 = arith.truncf %221 : vector<8x128xf32> to vector<8x128xbf16>
    %cst_56 = arith.constant dense<0.000000e+00> : vector<8x384xf32>
    %318 = tpu.matmul %317, %7, %cst_56 {dimension_numbers = #tpu.dot_dimension_numbers<[1], [0], [0], [1], [0, 0, 1, 1], [], []>} : vector<8x128xbf16>, vector<128x384xbf16>, vector<8x384xf32> -> vector<8x384xf32>
    %319 = vector.extract_strided_slice %316 {offsets = [0, 0], sizes = [8, 128], strides = [1, 1]} : vector<8x384xf32> to vector<8x128xf32>
    %320 = vector.extract_strided_slice %318 {offsets = [0, 0], sizes = [8, 128], strides = [1, 1]} : vector<8x384xf32> to vector<8x128xf32>
    %321 = arith.addf %319, %320 : vector<8x128xf32>
    %322 = arith.negf %321 : vector<8x128xf32>
    %323 = math.exp %322 : vector<8x128xf32>
    %cst_57 = arith.constant 1.000000e+00 : f32
    %324 = vector.broadcast %cst_57 : f32 to vector<8x128xf32>
    %325 = arith.addf %324, %323 : vector<8x128xf32>
    %326 = arith.divf %324, %325 : vector<8x128xf32>
    %327 = vector.extract_strided_slice %316 {offsets = [0, 128], sizes = [8, 128], strides = [1, 1]} : vector<8x384xf32> to vector<8x128xf32>
    %328 = vector.extract_strided_slice %318 {offsets = [0, 128], sizes = [8, 128], strides = [1, 1]} : vector<8x384xf32> to vector<8x128xf32>
    %329 = arith.addf %327, %328 : vector<8x128xf32>
    %330 = arith.negf %329 : vector<8x128xf32>
    %331 = math.exp %330 : vector<8x128xf32>
    %cst_58 = arith.constant 1.000000e+00 : f32
    %332 = vector.broadcast %cst_58 : f32 to vector<8x128xf32>
    %333 = arith.addf %332, %331 : vector<8x128xf32>
    %334 = arith.divf %332, %333 : vector<8x128xf32>
    %335 = vector.extract_strided_slice %316 {offsets = [0, 256], sizes = [8, 128], strides = [1, 1]} : vector<8x384xf32> to vector<8x128xf32>
    %336 = vector.extract_strided_slice %318 {offsets = [0, 256], sizes = [8, 128], strides = [1, 1]} : vector<8x384xf32> to vector<8x128xf32>
    %337 = arith.addf %336, %26 : vector<8x128xf32>
    %338 = arith.mulf %326, %337 : vector<8x128xf32>
    %339 = arith.addf %335, %338 : vector<8x128xf32>
    %340 = math.tanh %339 : vector<8x128xf32>
    %cst_59 = arith.constant 1.000000e+00 : f32
    %341 = vector.broadcast %cst_59 : f32 to vector<8x128xf32>
    %342 = arith.subf %341, %334 : vector<8x128xf32>
    %343 = arith.mulf %342, %340 : vector<8x128xf32>
    %344 = arith.mulf %334, %221 : vector<8x128xf32>
    %345 = arith.addf %343, %344 : vector<8x128xf32>
    %346 = vector.extract_strided_slice %31 {offsets = [24, 0], sizes = [8, 384], strides = [1, 1]} : vector<64x384xf32> to vector<8x384xf32>
    %347 = arith.truncf %251 : vector<8x128xf32> to vector<8x128xbf16>
    %cst_60 = arith.constant dense<0.000000e+00> : vector<8x384xf32>
    %348 = tpu.matmul %347, %1, %cst_60 {dimension_numbers = #tpu.dot_dimension_numbers<[1], [0], [0], [1], [0, 0, 1, 1], [], []>} : vector<8x128xbf16>, vector<128x384xbf16>, vector<8x384xf32> -> vector<8x384xf32>
    %349 = vector.extract_strided_slice %346 {offsets = [0, 0], sizes = [8, 128], strides = [1, 1]} : vector<8x384xf32> to vector<8x128xf32>
    %350 = vector.extract_strided_slice %348 {offsets = [0, 0], sizes = [8, 128], strides = [1, 1]} : vector<8x384xf32> to vector<8x128xf32>
    %351 = arith.addf %349, %350 : vector<8x128xf32>
    %352 = arith.negf %351 : vector<8x128xf32>
    %353 = math.exp %352 : vector<8x128xf32>
    %cst_61 = arith.constant 1.000000e+00 : f32
    %354 = vector.broadcast %cst_61 : f32 to vector<8x128xf32>
    %355 = arith.addf %354, %353 : vector<8x128xf32>
    %356 = arith.divf %354, %355 : vector<8x128xf32>
    %357 = vector.extract_strided_slice %346 {offsets = [0, 128], sizes = [8, 128], strides = [1, 1]} : vector<8x384xf32> to vector<8x128xf32>
    %358 = vector.extract_strided_slice %348 {offsets = [0, 128], sizes = [8, 128], strides = [1, 1]} : vector<8x384xf32> to vector<8x128xf32>
    %359 = arith.addf %357, %358 : vector<8x128xf32>
    %360 = arith.negf %359 : vector<8x128xf32>
    %361 = math.exp %360 : vector<8x128xf32>
    %cst_62 = arith.constant 1.000000e+00 : f32
    %362 = vector.broadcast %cst_62 : f32 to vector<8x128xf32>
    %363 = arith.addf %362, %361 : vector<8x128xf32>
    %364 = arith.divf %362, %363 : vector<8x128xf32>
    %365 = vector.extract_strided_slice %346 {offsets = [0, 256], sizes = [8, 128], strides = [1, 1]} : vector<8x384xf32> to vector<8x128xf32>
    %366 = vector.extract_strided_slice %348 {offsets = [0, 256], sizes = [8, 128], strides = [1, 1]} : vector<8x384xf32> to vector<8x128xf32>
    %367 = arith.addf %366, %17 : vector<8x128xf32>
    %368 = arith.mulf %356, %367 : vector<8x128xf32>
    %369 = arith.addf %365, %368 : vector<8x128xf32>
    %370 = math.tanh %369 : vector<8x128xf32>
    %cst_63 = arith.constant 1.000000e+00 : f32
    %371 = vector.broadcast %cst_63 : f32 to vector<8x128xf32>
    %372 = arith.subf %371, %364 : vector<8x128xf32>
    %373 = arith.mulf %372, %370 : vector<8x128xf32>
    %374 = arith.mulf %364, %251 : vector<8x128xf32>
    %375 = arith.addf %373, %374 : vector<8x128xf32>
    %376 = vector.extract_strided_slice %36 {offsets = [24, 0], sizes = [8, 384], strides = [1, 1]} : vector<48x384xf32> to vector<8x384xf32>
    %377 = arith.truncf %281 : vector<8x128xf32> to vector<8x128xbf16>
    %cst_64 = arith.constant dense<0.000000e+00> : vector<8x384xf32>
    %378 = tpu.matmul %377, %5, %cst_64 {dimension_numbers = #tpu.dot_dimension_numbers<[1], [0], [0], [1], [0, 0, 1, 1], [], []>} : vector<8x128xbf16>, vector<128x384xbf16>, vector<8x384xf32> -> vector<8x384xf32>
    %379 = vector.extract_strided_slice %376 {offsets = [0, 0], sizes = [8, 128], strides = [1, 1]} : vector<8x384xf32> to vector<8x128xf32>
    %380 = vector.extract_strided_slice %378 {offsets = [0, 0], sizes = [8, 128], strides = [1, 1]} : vector<8x384xf32> to vector<8x128xf32>
    %381 = arith.addf %379, %380 : vector<8x128xf32>
    %382 = arith.negf %381 : vector<8x128xf32>
    %383 = math.exp %382 : vector<8x128xf32>
    %cst_65 = arith.constant 1.000000e+00 : f32
    %384 = vector.broadcast %cst_65 : f32 to vector<8x128xf32>
    %385 = arith.addf %384, %383 : vector<8x128xf32>
    %386 = arith.divf %384, %385 : vector<8x128xf32>
    %387 = vector.extract_strided_slice %376 {offsets = [0, 128], sizes = [8, 128], strides = [1, 1]} : vector<8x384xf32> to vector<8x128xf32>
    %388 = vector.extract_strided_slice %378 {offsets = [0, 128], sizes = [8, 128], strides = [1, 1]} : vector<8x384xf32> to vector<8x128xf32>
    %389 = arith.addf %387, %388 : vector<8x128xf32>
    %390 = arith.negf %389 : vector<8x128xf32>
    %391 = math.exp %390 : vector<8x128xf32>
    %cst_66 = arith.constant 1.000000e+00 : f32
    %392 = vector.broadcast %cst_66 : f32 to vector<8x128xf32>
    %393 = arith.addf %392, %391 : vector<8x128xf32>
    %394 = arith.divf %392, %393 : vector<8x128xf32>
    %395 = vector.extract_strided_slice %376 {offsets = [0, 256], sizes = [8, 128], strides = [1, 1]} : vector<8x384xf32> to vector<8x128xf32>
    %396 = vector.extract_strided_slice %378 {offsets = [0, 256], sizes = [8, 128], strides = [1, 1]} : vector<8x384xf32> to vector<8x128xf32>
    %397 = arith.addf %396, %23 : vector<8x128xf32>
    %398 = arith.mulf %386, %397 : vector<8x128xf32>
    %399 = arith.addf %395, %398 : vector<8x128xf32>
    %400 = math.tanh %399 : vector<8x128xf32>
    %cst_67 = arith.constant 1.000000e+00 : f32
    %401 = vector.broadcast %cst_67 : f32 to vector<8x128xf32>
    %402 = arith.subf %401, %394 : vector<8x128xf32>
    %403 = arith.mulf %402, %400 : vector<8x128xf32>
    %404 = arith.mulf %394, %281 : vector<8x128xf32>
    %405 = arith.addf %403, %404 : vector<8x128xf32>
    %406 = arith.truncf %251 : vector<8x128xf32> to vector<8x128xbf16>
    %cst_68 = arith.constant dense<0.000000e+00> : vector<8x384xf32>
    %407 = tpu.matmul %406, %2, %cst_68 {dimension_numbers = #tpu.dot_dimension_numbers<[1], [0], [0], [1], [0, 0, 1, 1], [], []>} : vector<8x128xbf16>, vector<128x384xbf16>, vector<8x384xf32> -> vector<8x384xf32>
    %408 = arith.addf %407, %11 : vector<8x384xf32>
    %409 = arith.truncf %313 : vector<8x128xf32> to vector<8x128xbf16>
    %cst_69 = arith.constant dense<0.000000e+00> : vector<8x384xf32>
    %410 = tpu.matmul %409, %3, %cst_69 {dimension_numbers = #tpu.dot_dimension_numbers<[1], [0], [0], [1], [0, 0, 1, 1], [], []>} : vector<8x128xbf16>, vector<128x384xbf16>, vector<8x384xf32> -> vector<8x384xf32>
    %411 = vector.extract_strided_slice %408 {offsets = [0, 0], sizes = [8, 128], strides = [1, 1]} : vector<8x384xf32> to vector<8x128xf32>
    %412 = vector.extract_strided_slice %410 {offsets = [0, 0], sizes = [8, 128], strides = [1, 1]} : vector<8x384xf32> to vector<8x128xf32>
    %413 = arith.addf %411, %412 : vector<8x128xf32>
    %414 = arith.negf %413 : vector<8x128xf32>
    %415 = math.exp %414 : vector<8x128xf32>
    %cst_70 = arith.constant 1.000000e+00 : f32
    %416 = vector.broadcast %cst_70 : f32 to vector<8x128xf32>
    %417 = arith.addf %416, %415 : vector<8x128xf32>
    %418 = arith.divf %416, %417 : vector<8x128xf32>
    %419 = vector.extract_strided_slice %408 {offsets = [0, 128], sizes = [8, 128], strides = [1, 1]} : vector<8x384xf32> to vector<8x128xf32>
    %420 = vector.extract_strided_slice %410 {offsets = [0, 128], sizes = [8, 128], strides = [1, 1]} : vector<8x384xf32> to vector<8x128xf32>
    %421 = arith.addf %419, %420 : vector<8x128xf32>
    %422 = arith.negf %421 : vector<8x128xf32>
    %423 = math.exp %422 : vector<8x128xf32>
    %cst_71 = arith.constant 1.000000e+00 : f32
    %424 = vector.broadcast %cst_71 : f32 to vector<8x128xf32>
    %425 = arith.addf %424, %423 : vector<8x128xf32>
    %426 = arith.divf %424, %425 : vector<8x128xf32>
    %427 = vector.extract_strided_slice %408 {offsets = [0, 256], sizes = [8, 128], strides = [1, 1]} : vector<8x384xf32> to vector<8x128xf32>
    %428 = vector.extract_strided_slice %410 {offsets = [0, 256], sizes = [8, 128], strides = [1, 1]} : vector<8x384xf32> to vector<8x128xf32>
    %429 = arith.addf %428, %20 : vector<8x128xf32>
    %430 = arith.mulf %418, %429 : vector<8x128xf32>
    %431 = arith.addf %427, %430 : vector<8x128xf32>
    %432 = math.tanh %431 : vector<8x128xf32>
    %cst_72 = arith.constant 1.000000e+00 : f32
    %433 = vector.broadcast %cst_72 : f32 to vector<8x128xf32>
    %434 = arith.subf %433, %426 : vector<8x128xf32>
    %435 = arith.mulf %434, %432 : vector<8x128xf32>
    %436 = arith.mulf %426, %313 : vector<8x128xf32>
    %437 = arith.addf %435, %436 : vector<8x128xf32>
    %438 = arith.truncf %281 : vector<8x128xf32> to vector<8x128xbf16>
    %cst_73 = arith.constant dense<0.000000e+00> : vector<8x384xf32>
    %439 = tpu.matmul %438, %6, %cst_73 {dimension_numbers = #tpu.dot_dimension_numbers<[1], [0], [0], [1], [0, 0, 1, 1], [], []>} : vector<8x128xbf16>, vector<128x384xbf16>, vector<8x384xf32> -> vector<8x384xf32>
    %440 = arith.addf %439, %14 : vector<8x384xf32>
    %441 = arith.truncf %345 : vector<8x128xf32> to vector<8x128xbf16>
    %cst_74 = arith.constant dense<0.000000e+00> : vector<8x384xf32>
    %442 = tpu.matmul %441, %7, %cst_74 {dimension_numbers = #tpu.dot_dimension_numbers<[1], [0], [0], [1], [0, 0, 1, 1], [], []>} : vector<8x128xbf16>, vector<128x384xbf16>, vector<8x384xf32> -> vector<8x384xf32>
    %443 = vector.extract_strided_slice %440 {offsets = [0, 0], sizes = [8, 128], strides = [1, 1]} : vector<8x384xf32> to vector<8x128xf32>
    %444 = vector.extract_strided_slice %442 {offsets = [0, 0], sizes = [8, 128], strides = [1, 1]} : vector<8x384xf32> to vector<8x128xf32>
    %445 = arith.addf %443, %444 : vector<8x128xf32>
    %446 = arith.negf %445 : vector<8x128xf32>
    %447 = math.exp %446 : vector<8x128xf32>
    %cst_75 = arith.constant 1.000000e+00 : f32
    %448 = vector.broadcast %cst_75 : f32 to vector<8x128xf32>
    %449 = arith.addf %448, %447 : vector<8x128xf32>
    %450 = arith.divf %448, %449 : vector<8x128xf32>
    %451 = vector.extract_strided_slice %440 {offsets = [0, 128], sizes = [8, 128], strides = [1, 1]} : vector<8x384xf32> to vector<8x128xf32>
    %452 = vector.extract_strided_slice %442 {offsets = [0, 128], sizes = [8, 128], strides = [1, 1]} : vector<8x384xf32> to vector<8x128xf32>
    %453 = arith.addf %451, %452 : vector<8x128xf32>
    %454 = arith.negf %453 : vector<8x128xf32>
    %455 = math.exp %454 : vector<8x128xf32>
    %cst_76 = arith.constant 1.000000e+00 : f32
    %456 = vector.broadcast %cst_76 : f32 to vector<8x128xf32>
    %457 = arith.addf %456, %455 : vector<8x128xf32>
    %458 = arith.divf %456, %457 : vector<8x128xf32>
    %459 = vector.extract_strided_slice %440 {offsets = [0, 256], sizes = [8, 128], strides = [1, 1]} : vector<8x384xf32> to vector<8x128xf32>
    %460 = vector.extract_strided_slice %442 {offsets = [0, 256], sizes = [8, 128], strides = [1, 1]} : vector<8x384xf32> to vector<8x128xf32>
    %461 = arith.addf %460, %26 : vector<8x128xf32>
    %462 = arith.mulf %450, %461 : vector<8x128xf32>
    %463 = arith.addf %459, %462 : vector<8x128xf32>
    %464 = math.tanh %463 : vector<8x128xf32>
    %cst_77 = arith.constant 1.000000e+00 : f32
    %465 = vector.broadcast %cst_77 : f32 to vector<8x128xf32>
    %466 = arith.subf %465, %458 : vector<8x128xf32>
    %467 = arith.mulf %466, %464 : vector<8x128xf32>
    %468 = arith.mulf %458, %345 : vector<8x128xf32>
    %469 = arith.addf %467, %468 : vector<8x128xf32>
    %470 = vector.extract_strided_slice %31 {offsets = [32, 0], sizes = [8, 384], strides = [1, 1]} : vector<64x384xf32> to vector<8x384xf32>
    %471 = arith.truncf %375 : vector<8x128xf32> to vector<8x128xbf16>
    %cst_78 = arith.constant dense<0.000000e+00> : vector<8x384xf32>
    %472 = tpu.matmul %471, %1, %cst_78 {dimension_numbers = #tpu.dot_dimension_numbers<[1], [0], [0], [1], [0, 0, 1, 1], [], []>} : vector<8x128xbf16>, vector<128x384xbf16>, vector<8x384xf32> -> vector<8x384xf32>
    %473 = vector.extract_strided_slice %470 {offsets = [0, 0], sizes = [8, 128], strides = [1, 1]} : vector<8x384xf32> to vector<8x128xf32>
    %474 = vector.extract_strided_slice %472 {offsets = [0, 0], sizes = [8, 128], strides = [1, 1]} : vector<8x384xf32> to vector<8x128xf32>
    %475 = arith.addf %473, %474 : vector<8x128xf32>
    %476 = arith.negf %475 : vector<8x128xf32>
    %477 = math.exp %476 : vector<8x128xf32>
    %cst_79 = arith.constant 1.000000e+00 : f32
    %478 = vector.broadcast %cst_79 : f32 to vector<8x128xf32>
    %479 = arith.addf %478, %477 : vector<8x128xf32>
    %480 = arith.divf %478, %479 : vector<8x128xf32>
    %481 = vector.extract_strided_slice %470 {offsets = [0, 128], sizes = [8, 128], strides = [1, 1]} : vector<8x384xf32> to vector<8x128xf32>
    %482 = vector.extract_strided_slice %472 {offsets = [0, 128], sizes = [8, 128], strides = [1, 1]} : vector<8x384xf32> to vector<8x128xf32>
    %483 = arith.addf %481, %482 : vector<8x128xf32>
    %484 = arith.negf %483 : vector<8x128xf32>
    %485 = math.exp %484 : vector<8x128xf32>
    %cst_80 = arith.constant 1.000000e+00 : f32
    %486 = vector.broadcast %cst_80 : f32 to vector<8x128xf32>
    %487 = arith.addf %486, %485 : vector<8x128xf32>
    %488 = arith.divf %486, %487 : vector<8x128xf32>
    %489 = vector.extract_strided_slice %470 {offsets = [0, 256], sizes = [8, 128], strides = [1, 1]} : vector<8x384xf32> to vector<8x128xf32>
    %490 = vector.extract_strided_slice %472 {offsets = [0, 256], sizes = [8, 128], strides = [1, 1]} : vector<8x384xf32> to vector<8x128xf32>
    %491 = arith.addf %490, %17 : vector<8x128xf32>
    %492 = arith.mulf %480, %491 : vector<8x128xf32>
    %493 = arith.addf %489, %492 : vector<8x128xf32>
    %494 = math.tanh %493 : vector<8x128xf32>
    %cst_81 = arith.constant 1.000000e+00 : f32
    %495 = vector.broadcast %cst_81 : f32 to vector<8x128xf32>
    %496 = arith.subf %495, %488 : vector<8x128xf32>
    %497 = arith.mulf %496, %494 : vector<8x128xf32>
    %498 = arith.mulf %488, %375 : vector<8x128xf32>
    %499 = arith.addf %497, %498 : vector<8x128xf32>
    %500 = vector.extract_strided_slice %36 {offsets = [32, 0], sizes = [8, 384], strides = [1, 1]} : vector<48x384xf32> to vector<8x384xf32>
    %501 = arith.truncf %405 : vector<8x128xf32> to vector<8x128xbf16>
    %cst_82 = arith.constant dense<0.000000e+00> : vector<8x384xf32>
    %502 = tpu.matmul %501, %5, %cst_82 {dimension_numbers = #tpu.dot_dimension_numbers<[1], [0], [0], [1], [0, 0, 1, 1], [], []>} : vector<8x128xbf16>, vector<128x384xbf16>, vector<8x384xf32> -> vector<8x384xf32>
    %503 = vector.extract_strided_slice %500 {offsets = [0, 0], sizes = [8, 128], strides = [1, 1]} : vector<8x384xf32> to vector<8x128xf32>
    %504 = vector.extract_strided_slice %502 {offsets = [0, 0], sizes = [8, 128], strides = [1, 1]} : vector<8x384xf32> to vector<8x128xf32>
    %505 = arith.addf %503, %504 : vector<8x128xf32>
    %506 = arith.negf %505 : vector<8x128xf32>
    %507 = math.exp %506 : vector<8x128xf32>
    %cst_83 = arith.constant 1.000000e+00 : f32
    %508 = vector.broadcast %cst_83 : f32 to vector<8x128xf32>
    %509 = arith.addf %508, %507 : vector<8x128xf32>
    %510 = arith.divf %508, %509 : vector<8x128xf32>
    %511 = vector.extract_strided_slice %500 {offsets = [0, 128], sizes = [8, 128], strides = [1, 1]} : vector<8x384xf32> to vector<8x128xf32>
    %512 = vector.extract_strided_slice %502 {offsets = [0, 128], sizes = [8, 128], strides = [1, 1]} : vector<8x384xf32> to vector<8x128xf32>
    %513 = arith.addf %511, %512 : vector<8x128xf32>
    %514 = arith.negf %513 : vector<8x128xf32>
    %515 = math.exp %514 : vector<8x128xf32>
    %cst_84 = arith.constant 1.000000e+00 : f32
    %516 = vector.broadcast %cst_84 : f32 to vector<8x128xf32>
    %517 = arith.addf %516, %515 : vector<8x128xf32>
    %518 = arith.divf %516, %517 : vector<8x128xf32>
    %519 = vector.extract_strided_slice %500 {offsets = [0, 256], sizes = [8, 128], strides = [1, 1]} : vector<8x384xf32> to vector<8x128xf32>
    %520 = vector.extract_strided_slice %502 {offsets = [0, 256], sizes = [8, 128], strides = [1, 1]} : vector<8x384xf32> to vector<8x128xf32>
    %521 = arith.addf %520, %23 : vector<8x128xf32>
    %522 = arith.mulf %510, %521 : vector<8x128xf32>
    %523 = arith.addf %519, %522 : vector<8x128xf32>
    %524 = math.tanh %523 : vector<8x128xf32>
    %cst_85 = arith.constant 1.000000e+00 : f32
    %525 = vector.broadcast %cst_85 : f32 to vector<8x128xf32>
    %526 = arith.subf %525, %518 : vector<8x128xf32>
    %527 = arith.mulf %526, %524 : vector<8x128xf32>
    %528 = arith.mulf %518, %405 : vector<8x128xf32>
    %529 = arith.addf %527, %528 : vector<8x128xf32>
    %530 = arith.truncf %375 : vector<8x128xf32> to vector<8x128xbf16>
    %cst_86 = arith.constant dense<0.000000e+00> : vector<8x384xf32>
    %531 = tpu.matmul %530, %2, %cst_86 {dimension_numbers = #tpu.dot_dimension_numbers<[1], [0], [0], [1], [0, 0, 1, 1], [], []>} : vector<8x128xbf16>, vector<128x384xbf16>, vector<8x384xf32> -> vector<8x384xf32>
    %532 = arith.addf %531, %11 : vector<8x384xf32>
    %533 = arith.truncf %437 : vector<8x128xf32> to vector<8x128xbf16>
    %cst_87 = arith.constant dense<0.000000e+00> : vector<8x384xf32>
    %534 = tpu.matmul %533, %3, %cst_87 {dimension_numbers = #tpu.dot_dimension_numbers<[1], [0], [0], [1], [0, 0, 1, 1], [], []>} : vector<8x128xbf16>, vector<128x384xbf16>, vector<8x384xf32> -> vector<8x384xf32>
    %535 = vector.extract_strided_slice %532 {offsets = [0, 0], sizes = [8, 128], strides = [1, 1]} : vector<8x384xf32> to vector<8x128xf32>
    %536 = vector.extract_strided_slice %534 {offsets = [0, 0], sizes = [8, 128], strides = [1, 1]} : vector<8x384xf32> to vector<8x128xf32>
    %537 = arith.addf %535, %536 : vector<8x128xf32>
    %538 = arith.negf %537 : vector<8x128xf32>
    %539 = math.exp %538 : vector<8x128xf32>
    %cst_88 = arith.constant 1.000000e+00 : f32
    %540 = vector.broadcast %cst_88 : f32 to vector<8x128xf32>
    %541 = arith.addf %540, %539 : vector<8x128xf32>
    %542 = arith.divf %540, %541 : vector<8x128xf32>
    %543 = vector.extract_strided_slice %532 {offsets = [0, 128], sizes = [8, 128], strides = [1, 1]} : vector<8x384xf32> to vector<8x128xf32>
    %544 = vector.extract_strided_slice %534 {offsets = [0, 128], sizes = [8, 128], strides = [1, 1]} : vector<8x384xf32> to vector<8x128xf32>
    %545 = arith.addf %543, %544 : vector<8x128xf32>
    %546 = arith.negf %545 : vector<8x128xf32>
    %547 = math.exp %546 : vector<8x128xf32>
    %cst_89 = arith.constant 1.000000e+00 : f32
    %548 = vector.broadcast %cst_89 : f32 to vector<8x128xf32>
    %549 = arith.addf %548, %547 : vector<8x128xf32>
    %550 = arith.divf %548, %549 : vector<8x128xf32>
    %551 = vector.extract_strided_slice %532 {offsets = [0, 256], sizes = [8, 128], strides = [1, 1]} : vector<8x384xf32> to vector<8x128xf32>
    %552 = vector.extract_strided_slice %534 {offsets = [0, 256], sizes = [8, 128], strides = [1, 1]} : vector<8x384xf32> to vector<8x128xf32>
    %553 = arith.addf %552, %20 : vector<8x128xf32>
    %554 = arith.mulf %542, %553 : vector<8x128xf32>
    %555 = arith.addf %551, %554 : vector<8x128xf32>
    %556 = math.tanh %555 : vector<8x128xf32>
    %cst_90 = arith.constant 1.000000e+00 : f32
    %557 = vector.broadcast %cst_90 : f32 to vector<8x128xf32>
    %558 = arith.subf %557, %550 : vector<8x128xf32>
    %559 = arith.mulf %558, %556 : vector<8x128xf32>
    %560 = arith.mulf %550, %437 : vector<8x128xf32>
    %561 = arith.addf %559, %560 : vector<8x128xf32>
    %562 = arith.truncf %405 : vector<8x128xf32> to vector<8x128xbf16>
    %cst_91 = arith.constant dense<0.000000e+00> : vector<8x384xf32>
    %563 = tpu.matmul %562, %6, %cst_91 {dimension_numbers = #tpu.dot_dimension_numbers<[1], [0], [0], [1], [0, 0, 1, 1], [], []>} : vector<8x128xbf16>, vector<128x384xbf16>, vector<8x384xf32> -> vector<8x384xf32>
    %564 = arith.addf %563, %14 : vector<8x384xf32>
    %565 = arith.truncf %469 : vector<8x128xf32> to vector<8x128xbf16>
    %cst_92 = arith.constant dense<0.000000e+00> : vector<8x384xf32>
    %566 = tpu.matmul %565, %7, %cst_92 {dimension_numbers = #tpu.dot_dimension_numbers<[1], [0], [0], [1], [0, 0, 1, 1], [], []>} : vector<8x128xbf16>, vector<128x384xbf16>, vector<8x384xf32> -> vector<8x384xf32>
    %567 = vector.extract_strided_slice %564 {offsets = [0, 0], sizes = [8, 128], strides = [1, 1]} : vector<8x384xf32> to vector<8x128xf32>
    %568 = vector.extract_strided_slice %566 {offsets = [0, 0], sizes = [8, 128], strides = [1, 1]} : vector<8x384xf32> to vector<8x128xf32>
    %569 = arith.addf %567, %568 : vector<8x128xf32>
    %570 = arith.negf %569 : vector<8x128xf32>
    %571 = math.exp %570 : vector<8x128xf32>
    %cst_93 = arith.constant 1.000000e+00 : f32
    %572 = vector.broadcast %cst_93 : f32 to vector<8x128xf32>
    %573 = arith.addf %572, %571 : vector<8x128xf32>
    %574 = arith.divf %572, %573 : vector<8x128xf32>
    %575 = vector.extract_strided_slice %564 {offsets = [0, 128], sizes = [8, 128], strides = [1, 1]} : vector<8x384xf32> to vector<8x128xf32>
    %576 = vector.extract_strided_slice %566 {offsets = [0, 128], sizes = [8, 128], strides = [1, 1]} : vector<8x384xf32> to vector<8x128xf32>
    %577 = arith.addf %575, %576 : vector<8x128xf32>
    %578 = arith.negf %577 : vector<8x128xf32>
    %579 = math.exp %578 : vector<8x128xf32>
    %cst_94 = arith.constant 1.000000e+00 : f32
    %580 = vector.broadcast %cst_94 : f32 to vector<8x128xf32>
    %581 = arith.addf %580, %579 : vector<8x128xf32>
    %582 = arith.divf %580, %581 : vector<8x128xf32>
    %583 = vector.extract_strided_slice %564 {offsets = [0, 256], sizes = [8, 128], strides = [1, 1]} : vector<8x384xf32> to vector<8x128xf32>
    %584 = vector.extract_strided_slice %566 {offsets = [0, 256], sizes = [8, 128], strides = [1, 1]} : vector<8x384xf32> to vector<8x128xf32>
    %585 = arith.addf %584, %26 : vector<8x128xf32>
    %586 = arith.mulf %574, %585 : vector<8x128xf32>
    %587 = arith.addf %583, %586 : vector<8x128xf32>
    %588 = math.tanh %587 : vector<8x128xf32>
    %cst_95 = arith.constant 1.000000e+00 : f32
    %589 = vector.broadcast %cst_95 : f32 to vector<8x128xf32>
    %590 = arith.subf %589, %582 : vector<8x128xf32>
    %591 = arith.mulf %590, %588 : vector<8x128xf32>
    %592 = arith.mulf %582, %469 : vector<8x128xf32>
    %593 = arith.addf %591, %592 : vector<8x128xf32>
    %594 = vector.extract_strided_slice %31 {offsets = [40, 0], sizes = [8, 384], strides = [1, 1]} : vector<64x384xf32> to vector<8x384xf32>
    %595 = arith.truncf %499 : vector<8x128xf32> to vector<8x128xbf16>
    %cst_96 = arith.constant dense<0.000000e+00> : vector<8x384xf32>
    %596 = tpu.matmul %595, %1, %cst_96 {dimension_numbers = #tpu.dot_dimension_numbers<[1], [0], [0], [1], [0, 0, 1, 1], [], []>} : vector<8x128xbf16>, vector<128x384xbf16>, vector<8x384xf32> -> vector<8x384xf32>
    %597 = vector.extract_strided_slice %594 {offsets = [0, 0], sizes = [8, 128], strides = [1, 1]} : vector<8x384xf32> to vector<8x128xf32>
    %598 = vector.extract_strided_slice %596 {offsets = [0, 0], sizes = [8, 128], strides = [1, 1]} : vector<8x384xf32> to vector<8x128xf32>
    %599 = arith.addf %597, %598 : vector<8x128xf32>
    %600 = arith.negf %599 : vector<8x128xf32>
    %601 = math.exp %600 : vector<8x128xf32>
    %cst_97 = arith.constant 1.000000e+00 : f32
    %602 = vector.broadcast %cst_97 : f32 to vector<8x128xf32>
    %603 = arith.addf %602, %601 : vector<8x128xf32>
    %604 = arith.divf %602, %603 : vector<8x128xf32>
    %605 = vector.extract_strided_slice %594 {offsets = [0, 128], sizes = [8, 128], strides = [1, 1]} : vector<8x384xf32> to vector<8x128xf32>
    %606 = vector.extract_strided_slice %596 {offsets = [0, 128], sizes = [8, 128], strides = [1, 1]} : vector<8x384xf32> to vector<8x128xf32>
    %607 = arith.addf %605, %606 : vector<8x128xf32>
    %608 = arith.negf %607 : vector<8x128xf32>
    %609 = math.exp %608 : vector<8x128xf32>
    %cst_98 = arith.constant 1.000000e+00 : f32
    %610 = vector.broadcast %cst_98 : f32 to vector<8x128xf32>
    %611 = arith.addf %610, %609 : vector<8x128xf32>
    %612 = arith.divf %610, %611 : vector<8x128xf32>
    %613 = vector.extract_strided_slice %594 {offsets = [0, 256], sizes = [8, 128], strides = [1, 1]} : vector<8x384xf32> to vector<8x128xf32>
    %614 = vector.extract_strided_slice %596 {offsets = [0, 256], sizes = [8, 128], strides = [1, 1]} : vector<8x384xf32> to vector<8x128xf32>
    %615 = arith.addf %614, %17 : vector<8x128xf32>
    %616 = arith.mulf %604, %615 : vector<8x128xf32>
    %617 = arith.addf %613, %616 : vector<8x128xf32>
    %618 = math.tanh %617 : vector<8x128xf32>
    %cst_99 = arith.constant 1.000000e+00 : f32
    %619 = vector.broadcast %cst_99 : f32 to vector<8x128xf32>
    %620 = arith.subf %619, %612 : vector<8x128xf32>
    %621 = arith.mulf %620, %618 : vector<8x128xf32>
    %622 = arith.mulf %612, %499 : vector<8x128xf32>
    %623 = arith.addf %621, %622 : vector<8x128xf32>
    %624 = vector.extract_strided_slice %36 {offsets = [40, 0], sizes = [8, 384], strides = [1, 1]} : vector<48x384xf32> to vector<8x384xf32>
    %625 = arith.truncf %529 : vector<8x128xf32> to vector<8x128xbf16>
    %cst_100 = arith.constant dense<0.000000e+00> : vector<8x384xf32>
    %626 = tpu.matmul %625, %5, %cst_100 {dimension_numbers = #tpu.dot_dimension_numbers<[1], [0], [0], [1], [0, 0, 1, 1], [], []>} : vector<8x128xbf16>, vector<128x384xbf16>, vector<8x384xf32> -> vector<8x384xf32>
    %627 = vector.extract_strided_slice %624 {offsets = [0, 0], sizes = [8, 128], strides = [1, 1]} : vector<8x384xf32> to vector<8x128xf32>
    %628 = vector.extract_strided_slice %626 {offsets = [0, 0], sizes = [8, 128], strides = [1, 1]} : vector<8x384xf32> to vector<8x128xf32>
    %629 = arith.addf %627, %628 : vector<8x128xf32>
    %630 = arith.negf %629 : vector<8x128xf32>
    %631 = math.exp %630 : vector<8x128xf32>
    %cst_101 = arith.constant 1.000000e+00 : f32
    %632 = vector.broadcast %cst_101 : f32 to vector<8x128xf32>
    %633 = arith.addf %632, %631 : vector<8x128xf32>
    %634 = arith.divf %632, %633 : vector<8x128xf32>
    %635 = vector.extract_strided_slice %624 {offsets = [0, 128], sizes = [8, 128], strides = [1, 1]} : vector<8x384xf32> to vector<8x128xf32>
    %636 = vector.extract_strided_slice %626 {offsets = [0, 128], sizes = [8, 128], strides = [1, 1]} : vector<8x384xf32> to vector<8x128xf32>
    %637 = arith.addf %635, %636 : vector<8x128xf32>
    %638 = arith.negf %637 : vector<8x128xf32>
    %639 = math.exp %638 : vector<8x128xf32>
    %cst_102 = arith.constant 1.000000e+00 : f32
    %640 = vector.broadcast %cst_102 : f32 to vector<8x128xf32>
    %641 = arith.addf %640, %639 : vector<8x128xf32>
    %642 = arith.divf %640, %641 : vector<8x128xf32>
    %643 = vector.extract_strided_slice %624 {offsets = [0, 256], sizes = [8, 128], strides = [1, 1]} : vector<8x384xf32> to vector<8x128xf32>
    %644 = vector.extract_strided_slice %626 {offsets = [0, 256], sizes = [8, 128], strides = [1, 1]} : vector<8x384xf32> to vector<8x128xf32>
    %645 = arith.addf %644, %23 : vector<8x128xf32>
    %646 = arith.mulf %634, %645 : vector<8x128xf32>
    %647 = arith.addf %643, %646 : vector<8x128xf32>
    %648 = math.tanh %647 : vector<8x128xf32>
    %cst_103 = arith.constant 1.000000e+00 : f32
    %649 = vector.broadcast %cst_103 : f32 to vector<8x128xf32>
    %650 = arith.subf %649, %642 : vector<8x128xf32>
    %651 = arith.mulf %650, %648 : vector<8x128xf32>
    %652 = arith.mulf %642, %529 : vector<8x128xf32>
    %653 = arith.addf %651, %652 : vector<8x128xf32>
    %654 = arith.truncf %499 : vector<8x128xf32> to vector<8x128xbf16>
    %cst_104 = arith.constant dense<0.000000e+00> : vector<8x384xf32>
    %655 = tpu.matmul %654, %2, %cst_104 {dimension_numbers = #tpu.dot_dimension_numbers<[1], [0], [0], [1], [0, 0, 1, 1], [], []>} : vector<8x128xbf16>, vector<128x384xbf16>, vector<8x384xf32> -> vector<8x384xf32>
    %656 = arith.addf %655, %11 : vector<8x384xf32>
    %657 = arith.truncf %561 : vector<8x128xf32> to vector<8x128xbf16>
    %cst_105 = arith.constant dense<0.000000e+00> : vector<8x384xf32>
    %658 = tpu.matmul %657, %3, %cst_105 {dimension_numbers = #tpu.dot_dimension_numbers<[1], [0], [0], [1], [0, 0, 1, 1], [], []>} : vector<8x128xbf16>, vector<128x384xbf16>, vector<8x384xf32> -> vector<8x384xf32>
    %659 = vector.extract_strided_slice %656 {offsets = [0, 0], sizes = [8, 128], strides = [1, 1]} : vector<8x384xf32> to vector<8x128xf32>
    %660 = vector.extract_strided_slice %658 {offsets = [0, 0], sizes = [8, 128], strides = [1, 1]} : vector<8x384xf32> to vector<8x128xf32>
    %661 = arith.addf %659, %660 : vector<8x128xf32>
    %662 = arith.negf %661 : vector<8x128xf32>
    %663 = math.exp %662 : vector<8x128xf32>
    %cst_106 = arith.constant 1.000000e+00 : f32
    %664 = vector.broadcast %cst_106 : f32 to vector<8x128xf32>
    %665 = arith.addf %664, %663 : vector<8x128xf32>
    %666 = arith.divf %664, %665 : vector<8x128xf32>
    %667 = vector.extract_strided_slice %656 {offsets = [0, 128], sizes = [8, 128], strides = [1, 1]} : vector<8x384xf32> to vector<8x128xf32>
    %668 = vector.extract_strided_slice %658 {offsets = [0, 128], sizes = [8, 128], strides = [1, 1]} : vector<8x384xf32> to vector<8x128xf32>
    %669 = arith.addf %667, %668 : vector<8x128xf32>
    %670 = arith.negf %669 : vector<8x128xf32>
    %671 = math.exp %670 : vector<8x128xf32>
    %cst_107 = arith.constant 1.000000e+00 : f32
    %672 = vector.broadcast %cst_107 : f32 to vector<8x128xf32>
    %673 = arith.addf %672, %671 : vector<8x128xf32>
    %674 = arith.divf %672, %673 : vector<8x128xf32>
    %675 = vector.extract_strided_slice %656 {offsets = [0, 256], sizes = [8, 128], strides = [1, 1]} : vector<8x384xf32> to vector<8x128xf32>
    %676 = vector.extract_strided_slice %658 {offsets = [0, 256], sizes = [8, 128], strides = [1, 1]} : vector<8x384xf32> to vector<8x128xf32>
    %677 = arith.addf %676, %20 : vector<8x128xf32>
    %678 = arith.mulf %666, %677 : vector<8x128xf32>
    %679 = arith.addf %675, %678 : vector<8x128xf32>
    %680 = math.tanh %679 : vector<8x128xf32>
    %cst_108 = arith.constant 1.000000e+00 : f32
    %681 = vector.broadcast %cst_108 : f32 to vector<8x128xf32>
    %682 = arith.subf %681, %674 : vector<8x128xf32>
    %683 = arith.mulf %682, %680 : vector<8x128xf32>
    %684 = arith.mulf %674, %561 : vector<8x128xf32>
    %685 = arith.addf %683, %684 : vector<8x128xf32>
    %686 = arith.truncf %529 : vector<8x128xf32> to vector<8x128xbf16>
    %cst_109 = arith.constant dense<0.000000e+00> : vector<8x384xf32>
    %687 = tpu.matmul %686, %6, %cst_109 {dimension_numbers = #tpu.dot_dimension_numbers<[1], [0], [0], [1], [0, 0, 1, 1], [], []>} : vector<8x128xbf16>, vector<128x384xbf16>, vector<8x384xf32> -> vector<8x384xf32>
    %688 = arith.addf %687, %14 : vector<8x384xf32>
    %689 = arith.truncf %593 : vector<8x128xf32> to vector<8x128xbf16>
    %cst_110 = arith.constant dense<0.000000e+00> : vector<8x384xf32>
    %690 = tpu.matmul %689, %7, %cst_110 {dimension_numbers = #tpu.dot_dimension_numbers<[1], [0], [0], [1], [0, 0, 1, 1], [], []>} : vector<8x128xbf16>, vector<128x384xbf16>, vector<8x384xf32> -> vector<8x384xf32>
    %691 = vector.extract_strided_slice %688 {offsets = [0, 0], sizes = [8, 128], strides = [1, 1]} : vector<8x384xf32> to vector<8x128xf32>
    %692 = vector.extract_strided_slice %690 {offsets = [0, 0], sizes = [8, 128], strides = [1, 1]} : vector<8x384xf32> to vector<8x128xf32>
    %693 = arith.addf %691, %692 : vector<8x128xf32>
    %694 = arith.negf %693 : vector<8x128xf32>
    %695 = math.exp %694 : vector<8x128xf32>
    %cst_111 = arith.constant 1.000000e+00 : f32
    %696 = vector.broadcast %cst_111 : f32 to vector<8x128xf32>
    %697 = arith.addf %696, %695 : vector<8x128xf32>
    %698 = arith.divf %696, %697 : vector<8x128xf32>
    %699 = vector.extract_strided_slice %688 {offsets = [0, 128], sizes = [8, 128], strides = [1, 1]} : vector<8x384xf32> to vector<8x128xf32>
    %700 = vector.extract_strided_slice %690 {offsets = [0, 128], sizes = [8, 128], strides = [1, 1]} : vector<8x384xf32> to vector<8x128xf32>
    %701 = arith.addf %699, %700 : vector<8x128xf32>
    %702 = arith.negf %701 : vector<8x128xf32>
    %703 = math.exp %702 : vector<8x128xf32>
    %cst_112 = arith.constant 1.000000e+00 : f32
    %704 = vector.broadcast %cst_112 : f32 to vector<8x128xf32>
    %705 = arith.addf %704, %703 : vector<8x128xf32>
    %706 = arith.divf %704, %705 : vector<8x128xf32>
    %707 = vector.extract_strided_slice %688 {offsets = [0, 256], sizes = [8, 128], strides = [1, 1]} : vector<8x384xf32> to vector<8x128xf32>
    %708 = vector.extract_strided_slice %690 {offsets = [0, 256], sizes = [8, 128], strides = [1, 1]} : vector<8x384xf32> to vector<8x128xf32>
    %709 = arith.addf %708, %26 : vector<8x128xf32>
    %710 = arith.mulf %698, %709 : vector<8x128xf32>
    %711 = arith.addf %707, %710 : vector<8x128xf32>
    %712 = math.tanh %711 : vector<8x128xf32>
    %cst_113 = arith.constant 1.000000e+00 : f32
    %713 = vector.broadcast %cst_113 : f32 to vector<8x128xf32>
    %714 = arith.subf %713, %706 : vector<8x128xf32>
    %715 = arith.mulf %714, %712 : vector<8x128xf32>
    %716 = arith.mulf %706, %593 : vector<8x128xf32>
    %717 = arith.addf %715, %716 : vector<8x128xf32>
    %718 = vector.extract_strided_slice %31 {offsets = [48, 0], sizes = [8, 384], strides = [1, 1]} : vector<64x384xf32> to vector<8x384xf32>
    %719 = arith.truncf %623 : vector<8x128xf32> to vector<8x128xbf16>
    %cst_114 = arith.constant dense<0.000000e+00> : vector<8x384xf32>
    %720 = tpu.matmul %719, %1, %cst_114 {dimension_numbers = #tpu.dot_dimension_numbers<[1], [0], [0], [1], [0, 0, 1, 1], [], []>} : vector<8x128xbf16>, vector<128x384xbf16>, vector<8x384xf32> -> vector<8x384xf32>
    %721 = vector.extract_strided_slice %718 {offsets = [0, 0], sizes = [8, 128], strides = [1, 1]} : vector<8x384xf32> to vector<8x128xf32>
    %722 = vector.extract_strided_slice %720 {offsets = [0, 0], sizes = [8, 128], strides = [1, 1]} : vector<8x384xf32> to vector<8x128xf32>
    %723 = arith.addf %721, %722 : vector<8x128xf32>
    %724 = arith.negf %723 : vector<8x128xf32>
    %725 = math.exp %724 : vector<8x128xf32>
    %cst_115 = arith.constant 1.000000e+00 : f32
    %726 = vector.broadcast %cst_115 : f32 to vector<8x128xf32>
    %727 = arith.addf %726, %725 : vector<8x128xf32>
    %728 = arith.divf %726, %727 : vector<8x128xf32>
    %729 = vector.extract_strided_slice %718 {offsets = [0, 128], sizes = [8, 128], strides = [1, 1]} : vector<8x384xf32> to vector<8x128xf32>
    %730 = vector.extract_strided_slice %720 {offsets = [0, 128], sizes = [8, 128], strides = [1, 1]} : vector<8x384xf32> to vector<8x128xf32>
    %731 = arith.addf %729, %730 : vector<8x128xf32>
    %732 = arith.negf %731 : vector<8x128xf32>
    %733 = math.exp %732 : vector<8x128xf32>
    %cst_116 = arith.constant 1.000000e+00 : f32
    %734 = vector.broadcast %cst_116 : f32 to vector<8x128xf32>
    %735 = arith.addf %734, %733 : vector<8x128xf32>
    %736 = arith.divf %734, %735 : vector<8x128xf32>
    %737 = vector.extract_strided_slice %718 {offsets = [0, 256], sizes = [8, 128], strides = [1, 1]} : vector<8x384xf32> to vector<8x128xf32>
    %738 = vector.extract_strided_slice %720 {offsets = [0, 256], sizes = [8, 128], strides = [1, 1]} : vector<8x384xf32> to vector<8x128xf32>
    %739 = arith.addf %738, %17 : vector<8x128xf32>
    %740 = arith.mulf %728, %739 : vector<8x128xf32>
    %741 = arith.addf %737, %740 : vector<8x128xf32>
    %742 = math.tanh %741 : vector<8x128xf32>
    %cst_117 = arith.constant 1.000000e+00 : f32
    %743 = vector.broadcast %cst_117 : f32 to vector<8x128xf32>
    %744 = arith.subf %743, %736 : vector<8x128xf32>
    %745 = arith.mulf %744, %742 : vector<8x128xf32>
    %746 = arith.mulf %736, %623 : vector<8x128xf32>
    %747 = arith.addf %745, %746 : vector<8x128xf32>
    %748 = arith.truncf %623 : vector<8x128xf32> to vector<8x128xbf16>
    %cst_118 = arith.constant dense<0.000000e+00> : vector<8x384xf32>
    %749 = tpu.matmul %748, %2, %cst_118 {dimension_numbers = #tpu.dot_dimension_numbers<[1], [0], [0], [1], [0, 0, 1, 1], [], []>} : vector<8x128xbf16>, vector<128x384xbf16>, vector<8x384xf32> -> vector<8x384xf32>
    %750 = arith.addf %749, %11 : vector<8x384xf32>
    %751 = arith.truncf %685 : vector<8x128xf32> to vector<8x128xbf16>
    %cst_119 = arith.constant dense<0.000000e+00> : vector<8x384xf32>
    %752 = tpu.matmul %751, %3, %cst_119 {dimension_numbers = #tpu.dot_dimension_numbers<[1], [0], [0], [1], [0, 0, 1, 1], [], []>} : vector<8x128xbf16>, vector<128x384xbf16>, vector<8x384xf32> -> vector<8x384xf32>
    %753 = vector.extract_strided_slice %750 {offsets = [0, 0], sizes = [8, 128], strides = [1, 1]} : vector<8x384xf32> to vector<8x128xf32>
    %754 = vector.extract_strided_slice %752 {offsets = [0, 0], sizes = [8, 128], strides = [1, 1]} : vector<8x384xf32> to vector<8x128xf32>
    %755 = arith.addf %753, %754 : vector<8x128xf32>
    %756 = arith.negf %755 : vector<8x128xf32>
    %757 = math.exp %756 : vector<8x128xf32>
    %cst_120 = arith.constant 1.000000e+00 : f32
    %758 = vector.broadcast %cst_120 : f32 to vector<8x128xf32>
    %759 = arith.addf %758, %757 : vector<8x128xf32>
    %760 = arith.divf %758, %759 : vector<8x128xf32>
    %761 = vector.extract_strided_slice %750 {offsets = [0, 128], sizes = [8, 128], strides = [1, 1]} : vector<8x384xf32> to vector<8x128xf32>
    %762 = vector.extract_strided_slice %752 {offsets = [0, 128], sizes = [8, 128], strides = [1, 1]} : vector<8x384xf32> to vector<8x128xf32>
    %763 = arith.addf %761, %762 : vector<8x128xf32>
    %764 = arith.negf %763 : vector<8x128xf32>
    %765 = math.exp %764 : vector<8x128xf32>
    %cst_121 = arith.constant 1.000000e+00 : f32
    %766 = vector.broadcast %cst_121 : f32 to vector<8x128xf32>
    %767 = arith.addf %766, %765 : vector<8x128xf32>
    %768 = arith.divf %766, %767 : vector<8x128xf32>
    %769 = vector.extract_strided_slice %750 {offsets = [0, 256], sizes = [8, 128], strides = [1, 1]} : vector<8x384xf32> to vector<8x128xf32>
    %770 = vector.extract_strided_slice %752 {offsets = [0, 256], sizes = [8, 128], strides = [1, 1]} : vector<8x384xf32> to vector<8x128xf32>
    %771 = arith.addf %770, %20 : vector<8x128xf32>
    %772 = arith.mulf %760, %771 : vector<8x128xf32>
    %773 = arith.addf %769, %772 : vector<8x128xf32>
    %774 = math.tanh %773 : vector<8x128xf32>
    %cst_122 = arith.constant 1.000000e+00 : f32
    %775 = vector.broadcast %cst_122 : f32 to vector<8x128xf32>
    %776 = arith.subf %775, %768 : vector<8x128xf32>
    %777 = arith.mulf %776, %774 : vector<8x128xf32>
    %778 = arith.mulf %768, %685 : vector<8x128xf32>
    %779 = arith.addf %777, %778 : vector<8x128xf32>
    %780 = arith.truncf %653 : vector<8x128xf32> to vector<8x128xbf16>
    %cst_123 = arith.constant dense<0.000000e+00> : vector<8x384xf32>
    %781 = tpu.matmul %780, %6, %cst_123 {dimension_numbers = #tpu.dot_dimension_numbers<[1], [0], [0], [1], [0, 0, 1, 1], [], []>} : vector<8x128xbf16>, vector<128x384xbf16>, vector<8x384xf32> -> vector<8x384xf32>
    %782 = arith.addf %781, %14 : vector<8x384xf32>
    %783 = arith.truncf %717 : vector<8x128xf32> to vector<8x128xbf16>
    %cst_124 = arith.constant dense<0.000000e+00> : vector<8x384xf32>
    %784 = tpu.matmul %783, %7, %cst_124 {dimension_numbers = #tpu.dot_dimension_numbers<[1], [0], [0], [1], [0, 0, 1, 1], [], []>} : vector<8x128xbf16>, vector<128x384xbf16>, vector<8x384xf32> -> vector<8x384xf32>
    %785 = vector.extract_strided_slice %782 {offsets = [0, 0], sizes = [8, 128], strides = [1, 1]} : vector<8x384xf32> to vector<8x128xf32>
    %786 = vector.extract_strided_slice %784 {offsets = [0, 0], sizes = [8, 128], strides = [1, 1]} : vector<8x384xf32> to vector<8x128xf32>
    %787 = arith.addf %785, %786 : vector<8x128xf32>
    %788 = arith.negf %787 : vector<8x128xf32>
    %789 = math.exp %788 : vector<8x128xf32>
    %cst_125 = arith.constant 1.000000e+00 : f32
    %790 = vector.broadcast %cst_125 : f32 to vector<8x128xf32>
    %791 = arith.addf %790, %789 : vector<8x128xf32>
    %792 = arith.divf %790, %791 : vector<8x128xf32>
    %793 = vector.extract_strided_slice %782 {offsets = [0, 128], sizes = [8, 128], strides = [1, 1]} : vector<8x384xf32> to vector<8x128xf32>
    %794 = vector.extract_strided_slice %784 {offsets = [0, 128], sizes = [8, 128], strides = [1, 1]} : vector<8x384xf32> to vector<8x128xf32>
    %795 = arith.addf %793, %794 : vector<8x128xf32>
    %796 = arith.negf %795 : vector<8x128xf32>
    %797 = math.exp %796 : vector<8x128xf32>
    %cst_126 = arith.constant 1.000000e+00 : f32
    %798 = vector.broadcast %cst_126 : f32 to vector<8x128xf32>
    %799 = arith.addf %798, %797 : vector<8x128xf32>
    %800 = arith.divf %798, %799 : vector<8x128xf32>
    %801 = vector.extract_strided_slice %782 {offsets = [0, 256], sizes = [8, 128], strides = [1, 1]} : vector<8x384xf32> to vector<8x128xf32>
    %802 = vector.extract_strided_slice %784 {offsets = [0, 256], sizes = [8, 128], strides = [1, 1]} : vector<8x384xf32> to vector<8x128xf32>
    %803 = arith.addf %802, %26 : vector<8x128xf32>
    %804 = arith.mulf %792, %803 : vector<8x128xf32>
    %805 = arith.addf %801, %804 : vector<8x128xf32>
    %806 = math.tanh %805 : vector<8x128xf32>
    %cst_127 = arith.constant 1.000000e+00 : f32
    %807 = vector.broadcast %cst_127 : f32 to vector<8x128xf32>
    %808 = arith.subf %807, %800 : vector<8x128xf32>
    %809 = arith.mulf %808, %806 : vector<8x128xf32>
    %810 = arith.mulf %800, %717 : vector<8x128xf32>
    %811 = arith.addf %809, %810 : vector<8x128xf32>
    %812 = vector.extract_strided_slice %31 {offsets = [56, 0], sizes = [8, 384], strides = [1, 1]} : vector<64x384xf32> to vector<8x384xf32>
    %813 = arith.truncf %747 : vector<8x128xf32> to vector<8x128xbf16>
    %cst_128 = arith.constant dense<0.000000e+00> : vector<8x384xf32>
    %814 = tpu.matmul %813, %1, %cst_128 {dimension_numbers = #tpu.dot_dimension_numbers<[1], [0], [0], [1], [0, 0, 1, 1], [], []>} : vector<8x128xbf16>, vector<128x384xbf16>, vector<8x384xf32> -> vector<8x384xf32>
    %815 = vector.extract_strided_slice %812 {offsets = [0, 0], sizes = [8, 128], strides = [1, 1]} : vector<8x384xf32> to vector<8x128xf32>
    %816 = vector.extract_strided_slice %814 {offsets = [0, 0], sizes = [8, 128], strides = [1, 1]} : vector<8x384xf32> to vector<8x128xf32>
    %817 = arith.addf %815, %816 : vector<8x128xf32>
    %818 = arith.negf %817 : vector<8x128xf32>
    %819 = math.exp %818 : vector<8x128xf32>
    %cst_129 = arith.constant 1.000000e+00 : f32
    %820 = vector.broadcast %cst_129 : f32 to vector<8x128xf32>
    %821 = arith.addf %820, %819 : vector<8x128xf32>
    %822 = arith.divf %820, %821 : vector<8x128xf32>
    %823 = vector.extract_strided_slice %812 {offsets = [0, 128], sizes = [8, 128], strides = [1, 1]} : vector<8x384xf32> to vector<8x128xf32>
    %824 = vector.extract_strided_slice %814 {offsets = [0, 128], sizes = [8, 128], strides = [1, 1]} : vector<8x384xf32> to vector<8x128xf32>
    %825 = arith.addf %823, %824 : vector<8x128xf32>
    %826 = arith.negf %825 : vector<8x128xf32>
    %827 = math.exp %826 : vector<8x128xf32>
    %cst_130 = arith.constant 1.000000e+00 : f32
    %828 = vector.broadcast %cst_130 : f32 to vector<8x128xf32>
    %829 = arith.addf %828, %827 : vector<8x128xf32>
    %830 = arith.divf %828, %829 : vector<8x128xf32>
    %831 = vector.extract_strided_slice %812 {offsets = [0, 256], sizes = [8, 128], strides = [1, 1]} : vector<8x384xf32> to vector<8x128xf32>
    %832 = vector.extract_strided_slice %814 {offsets = [0, 256], sizes = [8, 128], strides = [1, 1]} : vector<8x384xf32> to vector<8x128xf32>
    %833 = arith.addf %832, %17 : vector<8x128xf32>
    %834 = arith.mulf %822, %833 : vector<8x128xf32>
    %835 = arith.addf %831, %834 : vector<8x128xf32>
    %836 = math.tanh %835 : vector<8x128xf32>
    %cst_131 = arith.constant 1.000000e+00 : f32
    %837 = vector.broadcast %cst_131 : f32 to vector<8x128xf32>
    %838 = arith.subf %837, %830 : vector<8x128xf32>
    %839 = arith.mulf %838, %836 : vector<8x128xf32>
    %840 = arith.mulf %830, %747 : vector<8x128xf32>
    %841 = arith.addf %839, %840 : vector<8x128xf32>
    %842 = arith.truncf %747 : vector<8x128xf32> to vector<8x128xbf16>
    %cst_132 = arith.constant dense<0.000000e+00> : vector<8x384xf32>
    %843 = tpu.matmul %842, %2, %cst_132 {dimension_numbers = #tpu.dot_dimension_numbers<[1], [0], [0], [1], [0, 0, 1, 1], [], []>} : vector<8x128xbf16>, vector<128x384xbf16>, vector<8x384xf32> -> vector<8x384xf32>
    %844 = arith.addf %843, %11 : vector<8x384xf32>
    %845 = arith.truncf %779 : vector<8x128xf32> to vector<8x128xbf16>
    %cst_133 = arith.constant dense<0.000000e+00> : vector<8x384xf32>
    %846 = tpu.matmul %845, %3, %cst_133 {dimension_numbers = #tpu.dot_dimension_numbers<[1], [0], [0], [1], [0, 0, 1, 1], [], []>} : vector<8x128xbf16>, vector<128x384xbf16>, vector<8x384xf32> -> vector<8x384xf32>
    %847 = vector.extract_strided_slice %844 {offsets = [0, 0], sizes = [8, 128], strides = [1, 1]} : vector<8x384xf32> to vector<8x128xf32>
    %848 = vector.extract_strided_slice %846 {offsets = [0, 0], sizes = [8, 128], strides = [1, 1]} : vector<8x384xf32> to vector<8x128xf32>
    %849 = arith.addf %847, %848 : vector<8x128xf32>
    %850 = arith.negf %849 : vector<8x128xf32>
    %851 = math.exp %850 : vector<8x128xf32>
    %cst_134 = arith.constant 1.000000e+00 : f32
    %852 = vector.broadcast %cst_134 : f32 to vector<8x128xf32>
    %853 = arith.addf %852, %851 : vector<8x128xf32>
    %854 = arith.divf %852, %853 : vector<8x128xf32>
    %855 = vector.extract_strided_slice %844 {offsets = [0, 128], sizes = [8, 128], strides = [1, 1]} : vector<8x384xf32> to vector<8x128xf32>
    %856 = vector.extract_strided_slice %846 {offsets = [0, 128], sizes = [8, 128], strides = [1, 1]} : vector<8x384xf32> to vector<8x128xf32>
    %857 = arith.addf %855, %856 : vector<8x128xf32>
    %858 = arith.negf %857 : vector<8x128xf32>
    %859 = math.exp %858 : vector<8x128xf32>
    %cst_135 = arith.constant 1.000000e+00 : f32
    %860 = vector.broadcast %cst_135 : f32 to vector<8x128xf32>
    %861 = arith.addf %860, %859 : vector<8x128xf32>
    %862 = arith.divf %860, %861 : vector<8x128xf32>
    %863 = vector.extract_strided_slice %844 {offsets = [0, 256], sizes = [8, 128], strides = [1, 1]} : vector<8x384xf32> to vector<8x128xf32>
    %864 = vector.extract_strided_slice %846 {offsets = [0, 256], sizes = [8, 128], strides = [1, 1]} : vector<8x384xf32> to vector<8x128xf32>
    %865 = arith.addf %864, %20 : vector<8x128xf32>
    %866 = arith.mulf %854, %865 : vector<8x128xf32>
    %867 = arith.addf %863, %866 : vector<8x128xf32>
    %868 = math.tanh %867 : vector<8x128xf32>
    %cst_136 = arith.constant 1.000000e+00 : f32
    %869 = vector.broadcast %cst_136 : f32 to vector<8x128xf32>
    %870 = arith.subf %869, %862 : vector<8x128xf32>
    %871 = arith.mulf %870, %868 : vector<8x128xf32>
    %872 = arith.mulf %862, %779 : vector<8x128xf32>
    %873 = arith.addf %871, %872 : vector<8x128xf32>
    %874 = arith.truncf %841 : vector<8x128xf32> to vector<8x128xbf16>
    %cst_137 = arith.constant dense<0.000000e+00> : vector<8x384xf32>
    %875 = tpu.matmul %874, %2, %cst_137 {dimension_numbers = #tpu.dot_dimension_numbers<[1], [0], [0], [1], [0, 0, 1, 1], [], []>} : vector<8x128xbf16>, vector<128x384xbf16>, vector<8x384xf32> -> vector<8x384xf32>
    %876 = arith.addf %875, %11 : vector<8x384xf32>
    %877 = arith.truncf %873 : vector<8x128xf32> to vector<8x128xbf16>
    %cst_138 = arith.constant dense<0.000000e+00> : vector<8x384xf32>
    %878 = tpu.matmul %877, %3, %cst_138 {dimension_numbers = #tpu.dot_dimension_numbers<[1], [0], [0], [1], [0, 0, 1, 1], [], []>} : vector<8x128xbf16>, vector<128x384xbf16>, vector<8x384xf32> -> vector<8x384xf32>
    %879 = vector.extract_strided_slice %876 {offsets = [0, 0], sizes = [8, 128], strides = [1, 1]} : vector<8x384xf32> to vector<8x128xf32>
    %880 = vector.extract_strided_slice %878 {offsets = [0, 0], sizes = [8, 128], strides = [1, 1]} : vector<8x384xf32> to vector<8x128xf32>
    %881 = arith.addf %879, %880 : vector<8x128xf32>
    %882 = arith.negf %881 : vector<8x128xf32>
    %883 = math.exp %882 : vector<8x128xf32>
    %cst_139 = arith.constant 1.000000e+00 : f32
    %884 = vector.broadcast %cst_139 : f32 to vector<8x128xf32>
    %885 = arith.addf %884, %883 : vector<8x128xf32>
    %886 = arith.divf %884, %885 : vector<8x128xf32>
    %887 = vector.extract_strided_slice %876 {offsets = [0, 128], sizes = [8, 128], strides = [1, 1]} : vector<8x384xf32> to vector<8x128xf32>
    %888 = vector.extract_strided_slice %878 {offsets = [0, 128], sizes = [8, 128], strides = [1, 1]} : vector<8x384xf32> to vector<8x128xf32>
    %889 = arith.addf %887, %888 : vector<8x128xf32>
    %890 = arith.negf %889 : vector<8x128xf32>
    %891 = math.exp %890 : vector<8x128xf32>
    %cst_140 = arith.constant 1.000000e+00 : f32
    %892 = vector.broadcast %cst_140 : f32 to vector<8x128xf32>
    %893 = arith.addf %892, %891 : vector<8x128xf32>
    %894 = arith.divf %892, %893 : vector<8x128xf32>
    %895 = vector.extract_strided_slice %876 {offsets = [0, 256], sizes = [8, 128], strides = [1, 1]} : vector<8x384xf32> to vector<8x128xf32>
    %896 = vector.extract_strided_slice %878 {offsets = [0, 256], sizes = [8, 128], strides = [1, 1]} : vector<8x384xf32> to vector<8x128xf32>
    %897 = arith.addf %896, %20 : vector<8x128xf32>
    %898 = arith.mulf %886, %897 : vector<8x128xf32>
    %899 = arith.addf %895, %898 : vector<8x128xf32>
    %900 = math.tanh %899 : vector<8x128xf32>
    %cst_141 = arith.constant 1.000000e+00 : f32
    %901 = vector.broadcast %cst_141 : f32 to vector<8x128xf32>
    %902 = arith.subf %901, %894 : vector<8x128xf32>
    %903 = arith.mulf %902, %900 : vector<8x128xf32>
    %904 = arith.mulf %894, %873 : vector<8x128xf32>
    %905 = arith.addf %903, %904 : vector<8x128xf32>
    %c0_142 = arith.constant 0 : index
    %c0_143 = arith.constant 0 : index
    %906 = vector.load %arg4[%c0_142, %c0_143] : memref<264x64xf32, #tpu.memory_space<vmem>>, vector<8x64xf32>
    %907 = vector.extract_strided_slice %906 {offsets = [0, 0], sizes = [1, 64], strides = [1, 1]} : vector<8x64xf32> to vector<1x64xf32>
    %908 = vector.extract_strided_slice %906 {offsets = [1, 0], sizes = [1, 64], strides = [1, 1]} : vector<8x64xf32> to vector<1x64xf32>
    %909 = vector.extract_strided_slice %906 {offsets = [2, 0], sizes = [1, 1], strides = [1, 1]} : vector<8x64xf32> to vector<1x1xf32>
    %c8_144 = arith.constant 8 : index
    %c0_145 = arith.constant 0 : index
    %910 = vector.load %arg4[%c8_144, %c0_145] : memref<264x64xf32, #tpu.memory_space<vmem>>, vector<128x64xf32>
    %c136_146 = arith.constant 136 : index
    %c0_147 = arith.constant 0 : index
    %911 = vector.load %arg4[%c136_146, %c0_147] : memref<264x64xf32, #tpu.memory_space<vmem>>, vector<128x64xf32>
    %cst_148 = arith.constant dense<0.000000e+00> : vector<8x64xf32>
    %912 = tpu.matmul %905, %910, %cst_148 {dimension_numbers = #tpu.dot_dimension_numbers<[1], [0], [0], [1], [0, 0, 1, 1], [], []>} : vector<8x128xf32>, vector<128x64xf32>, vector<8x64xf32> -> vector<8x64xf32>
    %cst_149 = arith.constant dense<0.000000e+00> : vector<8x64xf32>
    %913 = tpu.matmul %811, %911, %cst_149 {dimension_numbers = #tpu.dot_dimension_numbers<[1], [0], [0], [1], [0, 0, 1, 1], [], []>} : vector<8x128xf32>, vector<128x64xf32>, vector<8x64xf32> -> vector<8x64xf32>
    %914 = arith.addf %912, %913 : vector<8x64xf32>
    %915 = vector.broadcast %907 : vector<1x64xf32> to vector<8x64xf32>
    %916 = arith.addf %914, %915 : vector<8x64xf32>
    %cst_150 = arith.constant 0.000000e+00 : f32
    %917 = vector.broadcast %cst_150 : f32 to vector<8x64xf32>
    %918 = arith.maximumf %916, %917 : vector<8x64xf32>
    %919 = vector.broadcast %908 : vector<1x64xf32> to vector<8x64xf32>
    %920 = arith.mulf %918, %919 : vector<8x64xf32>
    %cst_151 = arith.constant dense<0.000000e+00> : vector<8xf32>
    %921 = vector.multi_reduction <add>, %920, %cst_151 [1] : vector<8x64xf32> to vector<8xf32>
    %922 = vector.shape_cast %921 : vector<8xf32> to vector<8x1xf32>
    %923 = vector.broadcast %909 : vector<1x1xf32> to vector<8x1xf32>
    %924 = arith.addf %922, %923 : vector<8x1xf32>
    %925 = arith.negf %924 : vector<8x1xf32>
    %926 = math.exp %925 : vector<8x1xf32>
    %cst_152 = arith.constant 1.000000e+00 : f32
    %927 = vector.broadcast %cst_152 : f32 to vector<8x1xf32>
    %928 = arith.addf %927, %926 : vector<8x1xf32>
    %929 = arith.divf %927, %928 : vector<8x1xf32>
    %c0_153 = arith.constant 0 : index
    %c0_154 = arith.constant 0 : index
    %930 = vector.load %arg5[%c0_153, %c0_154] : memref<8x1xf32, #tpu.memory_space<vmem>>, vector<8x1xf32>
    tpu.vector_store %arg5[%c0_153, %c0_154], %929 {strides = array<i32>} : memref<8x1xf32, #tpu.memory_space<vmem>>, vector<8x1xf32>,
    return
  }
}

</mosaic_0001>

<llo_original>
// kernel: tpu_custom_call.1
$region0: #{tpu_custom_call.1}
  #allocation0 [shape = 'u32[]', space=smem, size = 0x4, offset = 0x4, fixed_abs, tag = 'smem constant byte address 0x4 - core index']
  #allocation1 [shape = 'u32[72,128]{1,0:T(1,128)}', space=vmem, size = 0x9000, scoped, tag = 'internal scratch']
  %s0 = inlined_call_operand.vmem [shape: bf16[64,8], index: 0, kind: input, shape index: {}]
  %s1 = inlined_call_operand.vmem [shape: bf16[48,16], index: 1, kind: input, shape index: {}]
  %s2 = inlined_call_operand.hbm [shape: bf16[792,384], index: 2, kind: input, shape index: {}]
  %s3 = inlined_call_operand.vmem [shape: f32[8,384], index: 3, kind: input, shape index: {}]
  %s4 = inlined_call_operand.vmem [shape: f32[264,64], index: 4, kind: input, shape index: {}]
  %s5 = inlined_call_operand.vmem [shape: f32[8,1], index: 5, kind: output, shape index: {}]
  %s6 = sld [smem:[#allocation0]]
  $region34: #{tpu_custom_call.1} parent=0
    _
  %s8 = ssub.s32 1, %s6
  %s9 = scalar_select 0, %s8, %s6
  $region1: #{tpu_custom_call.1} parent=0
    #allocation2 [shape = 'u8[608256]{0}', space=vmem, size = 0x94800, scoped, tag = 'input window, operand 2, single buffered']
    #allocation3 [shape = 's32[1]{0}', space=sflag, size = 0x4, scoped, tag = 'scoped memory for tpu_custom_call.1']
    %10 = vsyncpa [#allocation3], 0
    // Predicated region
    $region2: #{tpu_custom_call.1} parent=1 // pred_check
      _
    $region3: #{tpu_custom_call.1} parent=1 // pred_check_branch
      %12 = sbr.rel (0) target = $region5
    $region4: #{tpu_custom_call.1} parent=1 // pred_region
      _
    $region5: #{tpu_custom_call.1} parent=1 // pred_fallthru
      _
    // Predicated region
    $region6: #{tpu_custom_call.1} parent=1 // pred_check
      _
    $region7: #{tpu_custom_call.1} parent=1 // pred_check_branch
      %14 = sbr.rel (0) target = $region9
    $region8: #{tpu_custom_call.1} parent=1 // pred_region
      _
    $region9: #{tpu_custom_call.1} parent=1 // pred_fallthru
      _
    // Predicated region
    $region10: #{tpu_custom_call.1} parent=1 // pred_check
      _
    $region11: #{tpu_custom_call.1} parent=1 // pred_check_branch
      %16 = sbr.rel (0) target = $region13
    $region12: #{tpu_custom_call.1} parent=1 // pred_region
      %18 = vsyncadd [#allocation3], 0
      %s19 = sshll.u32 %s2, 4
      %s20 = int_to_ptr.hbm [resolvable:$true] %s19
      %s21 = sshll.u32 [#allocation2], 4
      %s22 = int_to_ptr.vmem [resolvable:$true] %s21
      %27 = dma.hbm_to_vmem [thread:$0]  %s20, 19008, %s22, [#allocation3], 192, 192, 12
    $region13: #{tpu_custom_call.1} parent=1 // pred_fallthru
      _
    // Predicated region
    $region14: #{tpu_custom_call.1} parent=1 // pred_check
      _
    $region15: #{tpu_custom_call.1} parent=1 // pred_check_branch
      %29 = sbr.rel (0) target = $region17
    $region16: #{tpu_custom_call.1} parent=1 // pred_region
      _
    $region17: #{tpu_custom_call.1} parent=1 // pred_fallthru
      _
    // Predicated region
    $region18: #{tpu_custom_call.1} parent=1 // pred_check
      _
    $region19: #{tpu_custom_call.1} parent=1 // pred_check_branch
      %31 = sbr.rel (0) target = $region21
    $region20: #{tpu_custom_call.1} parent=1 // pred_region
      _
    $region21: #{tpu_custom_call.1} parent=1 // pred_fallthru
      _
    // Predicated region
    $region22: #{tpu_custom_call.1} parent=1 // pred_check
      _
    $region23: #{tpu_custom_call.1} parent=1 // pred_check_branch
      %33 = sbr.rel (0) target = $region25
    $region24: #{tpu_custom_call.1} parent=1 // pred_region
      %35 = dma.done [#allocation3], 19008
    $region25: #{tpu_custom_call.1} parent=1 // pred_fallthru
      _
    %v37 = vld [vmem:[#allocation2] sm:$0xff]
    %v38 = vld [vmem:[#allocation2 + $0x8] sm:$0xf]
    %v39 = vld [vmem:[#allocation2 + $0xc] sm:$0xff]
    %v40 = vld [vmem:[#allocation2 + $0x14] sm:$0xf]
    %v41 = vld [vmem:[#allocation2 + $0x18] sm:$0xff]
    %v42 = vld [vmem:[#allocation2 + $0x20] sm:$0xf]
    %v43 = vld [vmem:[#allocation2 + $0x24] sm:$0xff]
    %v44 = vld [vmem:[#allocation2 + $0x2c] sm:$0xf]
    %v45 = vld [vmem:[#allocation2 + $0x30] sm:$0xff]
    %v46 = vld [vmem:[#allocation2 + $0x38] sm:$0xf]
    %v47 = vld [vmem:[#allocation2 + $0x3c] sm:$0xff]
    %v48 = vld [vmem:[#allocation2 + $0x44] sm:$0xf]
    %v49 = vld [vmem:[#allocation2 + $0x48] sm:$0xff]
    %v50 = vld [vmem:[#allocation2 + $0x50] sm:$0xf]
    %v51 = vld [vmem:[#allocation2 + $0x54] sm:$0xff]
    %v52 = vld [vmem:[#allocation2 + $0x5c] sm:$0xf]
    %v53 = vld [vmem:[#allocation2 + $0x60] sm:$0xff]
    %v54 = vld [vmem:[#allocation2 + $0x68] sm:$0xf]
    %v55 = vld [vmem:[#allocation2 + $0x6c] sm:$0xff]
    %v56 = vld [vmem:[#allocation2 + $0x74] sm:$0xf]
    %v57 = vld [vmem:[#allocation2 + $0x78] sm:$0xff]
    %v58 = vld [vmem:[#allocation2 + $0x80] sm:$0xf]
    %v59 = vld [vmem:[#allocation2 + $0x84] sm:$0xff]
    %v60 = vld [vmem:[#allocation2 + $0x8c] sm:$0xf]
    %v61 = vld [vmem:[#allocation2 + $0x90] sm:$0xff]
    %v62 = vld [vmem:[#allocation2 + $0x98] sm:$0xf]
    %v63 = vld [vmem:[#allocation2 + $0x9c] sm:$0xff]
    %v64 = vld [vmem:[#allocation2 + $0xa4] sm:$0xf]
    %v65 = vld [vmem:[#allocation2 + $0xa8] sm:$0xff]
    %v66 = vld [vmem:[#allocation2 + $0xb0] sm:$0xf]
    %v67 = vld [vmem:[#allocation2 + $0xb4] sm:$0xff]
    %v68 = vld [vmem:[#allocation2 + $0xbc] sm:$0xf]
    %v69 = vld [vmem:[#allocation2 + $0xc0] sm:$0xff]
    %v70 = vld [vmem:[#allocation2 + $0xc8] sm:$0xf]
    %v71 = vld [vmem:[#allocation2 + $0xcc] sm:$0xff]
    %v72 = vld [vmem:[#allocation2 + $0xd4] sm:$0xf]
    %v73 = vld [vmem:[#allocation2 + $0xd8] sm:$0xff]
    %v74 = vld [vmem:[#allocation2 + $0xe0] sm:$0xf]
    %v75 = vld [vmem:[#allocation2 + $0xe4] sm:$0xff]
    %v76 = vld [vmem:[#allocation2 + $0xec] sm:$0xf]
    %v77 = vld [vmem:[#allocation2 + $0xf0] sm:$0xff]
    %v78 = vld [vmem:[#allocation2 + $0xf8] sm:$0xf]
    %v79 = vld [vmem:[#allocation2 + $0xfc] sm:$0xff]
    %v80 = vld [vmem:[#allocation2 + $0x104] sm:$0xf]
    %v81 = vld [vmem:[#allocation2 + $0x108] sm:$0xff]
    %v82 = vld [vmem:[#allocation2 + $0x110] sm:$0xf]
    %v83 = vld [vmem:[#allocation2 + $0x114] sm:$0xff]
    %v84 = vld [vmem:[#allocation2 + $0x11c] sm:$0xf]
    %v85 = vld [vmem:[#allocation2 + $0x120] sm:$0xff]
    %v86 = vld [vmem:[#allocation2 + $0x128] sm:$0xf]
    %v87 = vld [vmem:[#allocation2 + $0x12c] sm:$0xff]
    %v88 = vld [vmem:[#allocation2 + $0x134] sm:$0xf]
    %v89 = vld [vmem:[#allocation2 + $0x138] sm:$0xff]
    %v90 = vld [vmem:[#allocation2 + $0x140] sm:$0xf]
    %v91 = vld [vmem:[#allocation2 + $0x144] sm:$0xff]
    %v92 = vld [vmem:[#allocation2 + $0x14c] sm:$0xf]
    %v93 = vld [vmem:[#allocation2 + $0x150] sm:$0xff]
    %v94 = vld [vmem:[#allocation2 + $0x158] sm:$0xf]
    %v95 = vld [vmem:[#allocation2 + $0x15c] sm:$0xff]
    %v96 = vld [vmem:[#allocation2 + $0x164] sm:$0xf]
    %v97 = vld [vmem:[#allocation2 + $0x168] sm:$0xff]
    %v98 = vld [vmem:[#allocation2 + $0x170] sm:$0xf]
    %v99 = vld [vmem:[#allocation2 + $0x174] sm:$0xff]
    %v100 = vld [vmem:[#allocation2 + $0x17c] sm:$0xf]
    %v101 = vld [vmem:[#allocation2 + $0x180] sm:$0xff]
    %v102 = vld [vmem:[#allocation2 + $0x188] sm:$0xf]
    %v103 = vld [vmem:[#allocation2 + $0x18c] sm:$0xff]
    %v104 = vld [vmem:[#allocation2 + $0x194] sm:$0xf]
    %v105 = vld [vmem:[#allocation2 + $0x198] sm:$0xff]
    %v106 = vld [vmem:[#allocation2 + $0x1a0] sm:$0xf]
    %v107 = vld [vmem:[#allocation2 + $0x1a4] sm:$0xff]
    %v108 = vld [vmem:[#allocation2 + $0x1ac] sm:$0xf]
    %v109 = vld [vmem:[#allocation2 + $0x1b0] sm:$0xff]
    %v110 = vld [vmem:[#allocation2 + $0x1b8] sm:$0xf]
    %v111 = vld [vmem:[#allocation2 + $0x1bc] sm:$0xff]
    %v112 = vld [vmem:[#allocation2 + $0x1c4] sm:$0xf]
    %v113 = vld [vmem:[#allocation2 + $0x1c8] sm:$0xff]
    %v114 = vld [vmem:[#allocation2 + $0x1d0] sm:$0xf]
    %v115 = vld [vmem:[#allocation2 + $0x1d4] sm:$0xff]
    %v116 = vld [vmem:[#allocation2 + $0x1dc] sm:$0xf]
    %v117 = vld [vmem:[#allocation2 + $0x1e0] sm:$0xff]
    %v118 = vld [vmem:[#allocation2 + $0x1e8] sm:$0xf]
    %v119 = vld [vmem:[#allocation2 + $0x1ec] sm:$0xff]
    %v120 = vld [vmem:[#allocation2 + $0x1f4] sm:$0xf]
    %v121 = vld [vmem:[#allocation2 + $0x1f8] sm:$0xff]
    %v122 = vld [vmem:[#allocation2 + $0x200] sm:$0xf]
    %v123 = vld [vmem:[#allocation2 + $0x204] sm:$0xff]
    %v124 = vld [vmem:[#allocation2 + $0x20c] sm:$0xf]
    %v125 = vld [vmem:[#allocation2 + $0x210] sm:$0xff]
    %v126 = vld [vmem:[#allocation2 + $0x218] sm:$0xf]
    %v127 = vld [vmem:[#allocation2 + $0x21c] sm:$0xff]
    %v128 = vld [vmem:[#allocation2 + $0x224] sm:$0xf]
    %v129 = vld [vmem:[#allocation2 + $0x228] sm:$0xff]
    %v130 = vld [vmem:[#allocation2 + $0x230] sm:$0xf]
    %v131 = vld [vmem:[#allocation2 + $0x234] sm:$0xff]
    %v132 = vld [vmem:[#allocation2 + $0x23c] sm:$0xf]
    %v133 = vld [vmem:[#allocation2 + $0x240] sm:$0xff]
    %v134 = vld [vmem:[#allocation2 + $0x248] sm:$0xf]
    %v135 = vld [vmem:[#allocation2 + $0x24c] sm:$0xff]
    %v136 = vld [vmem:[#allocation2 + $0x254] sm:$0xf]
    %v137 = vld [vmem:[#allocation2 + $0x258] sm:$0xff]
    %v138 = vld [vmem:[#allocation2 + $0x260] sm:$0xf]
    %v139 = vld [vmem:[#allocation2 + $0x264] sm:$0xff]
    %v140 = vld [vmem:[#allocation2 + $0x26c] sm:$0xf]
    %v141 = vld [vmem:[#allocation2 + $0x270] sm:$0xff]
    %v142 = vld [vmem:[#allocation2 + $0x278] sm:$0xf]
    %v143 = vld [vmem:[#allocation2 + $0x27c] sm:$0xff]
    %v144 = vld [vmem:[#allocation2 + $0x284] sm:$0xf]
    %v145 = vld [vmem:[#allocation2 + $0x288] sm:$0xff]
    %v146 = vld [vmem:[#allocation2 + $0x290] sm:$0xf]
    %v147 = vld [vmem:[#allocation2 + $0x294] sm:$0xff]
    %v148 = vld [vmem:[#allocation2 + $0x29c] sm:$0xf]
    %v149 = vld [vmem:[#allocation2 + $0x2a0] sm:$0xff]
    %v150 = vld [vmem:[#allocation2 + $0x2a8] sm:$0xf]
    %v151 = vld [vmem:[#allocation2 + $0x2ac] sm:$0xff]
    %v152 = vld [vmem:[#allocation2 + $0x2b4] sm:$0xf]
    %v153 = vld [vmem:[#allocation2 + $0x2b8] sm:$0xff]
    %v154 = vld [vmem:[#allocation2 + $0x2c0] sm:$0xf]
    %v155 = vld [vmem:[#allocation2 + $0x2c4] sm:$0xff]
    %v156 = vld [vmem:[#allocation2 + $0x2cc] sm:$0xf]
    %v157 = vld [vmem:[#allocation2 + $0x2d0] sm:$0xff]
    %v158 = vld [vmem:[#allocation2 + $0x2d8] sm:$0xf]
    %v159 = vld [vmem:[#allocation2 + $0x2dc] sm:$0xff]
    %v160 = vld [vmem:[#allocation2 + $0x2e4] sm:$0xf]
    %v161 = vld [vmem:[#allocation2 + $0x2e8] sm:$0xff]
    %v162 = vld [vmem:[#allocation2 + $0x2f0] sm:$0xf]
    %v163 = vld [vmem:[#allocation2 + $0x2f4] sm:$0xff]
    %v164 = vld [vmem:[#allocation2 + $0x2fc] sm:$0xf]
    %v165 = vld [vmem:[#allocation2 + $0x300] sm:$0xff]
    %v166 = vld [vmem:[#allocation2 + $0x308] sm:$0xf]
    %v167 = vld [vmem:[#allocation2 + $0x30c] sm:$0xff]
    %v168 = vld [vmem:[#allocation2 + $0x314] sm:$0xf]
    %v169 = vld [vmem:[#allocation2 + $0x318] sm:$0xff]
    %v170 = vld [vmem:[#allocation2 + $0x320] sm:$0xf]
    %v171 = vld [vmem:[#allocation2 + $0x324] sm:$0xff]
    %v172 = vld [vmem:[#allocation2 + $0x32c] sm:$0xf]
    %v173 = vld [vmem:[#allocation2 + $0x330] sm:$0xff]
    %v174 = vld [vmem:[#allocation2 + $0x338] sm:$0xf]
    %v175 = vld [vmem:[#allocation2 + $0x33c] sm:$0xff]
    %v176 = vld [vmem:[#allocation2 + $0x344] sm:$0xf]
    %v177 = vld [vmem:[#allocation2 + $0x348] sm:$0xff]
    %v178 = vld [vmem:[#allocation2 + $0x350] sm:$0xf]
    %v179 = vld [vmem:[#allocation2 + $0x354] sm:$0xff]
    %v180 = vld [vmem:[#allocation2 + $0x35c] sm:$0xf]
    %v181 = vld [vmem:[#allocation2 + $0x360] sm:$0xff]
    %v182 = vld [vmem:[#allocation2 + $0x368] sm:$0xf]
    %v183 = vld [vmem:[#allocation2 + $0x36c] sm:$0xff]
    %v184 = vld [vmem:[#allocation2 + $0x374] sm:$0xf]
    %v185 = vld [vmem:[#allocation2 + $0x378] sm:$0xff]
    %v186 = vld [vmem:[#allocation2 + $0x380] sm:$0xf]
    %v187 = vld [vmem:[#allocation2 + $0x384] sm:$0xff]
    %v188 = vld [vmem:[#allocation2 + $0x38c] sm:$0xf]
    %v189 = vld [vmem:[#allocation2 + $0x390] sm:$0xff]
    %v190 = vld [vmem:[#allocation2 + $0x398] sm:$0xf]
    %v191 = vld [vmem:[#allocation2 + $0x39c] sm:$0xff]
    %v192 = vld [vmem:[#allocation2 + $0x3a4] sm:$0xf]
    %v193 = vld [vmem:[#allocation2 + $0x3a8] sm:$0xff]
    %v194 = vld [vmem:[#allocation2 + $0x3b0] sm:$0xf]
    %v195 = vld [vmem:[#allocation2 + $0x3b4] sm:$0xff]
    %v196 = vld [vmem:[#allocation2 + $0x3bc] sm:$0xf]
    %v197 = vld [vmem:[#allocation2 + $0x3c0] sm:$0xff]
    %v198 = vld [vmem:[#allocation2 + $0x3c8] sm:$0xf]
    %v199 = vld [vmem:[#allocation2 + $0x3cc] sm:$0xff]
    %v200 = vld [vmem:[#allocation2 + $0x3d4] sm:$0xf]
    %v201 = vld [vmem:[#allocation2 + $0x3d8] sm:$0xff]
    %v202 = vld [vmem:[#allocation2 + $0x3e0] sm:$0xf]
    %v203 = vld [vmem:[#allocation2 + $0x3e4] sm:$0xff]
    %v204 = vld [vmem:[#allocation2 + $0x3ec] sm:$0xf]
    %v205 = vld [vmem:[#allocation2 + $0x3f0] sm:$0xff]
    %v206 = vld [vmem:[#allocation2 + $0x3f8] sm:$0xf]
    %v207 = vld [vmem:[#allocation2 + $0x3fc] sm:$0xff]
    %v208 = vld [vmem:[#allocation2 + $0x404] sm:$0xf]
    %v209 = vld [vmem:[#allocation2 + $0x408] sm:$0xff]
    %v210 = vld [vmem:[#allocation2 + $0x410] sm:$0xf]
    %v211 = vld [vmem:[#allocation2 + $0x414] sm:$0xff]
    %v212 = vld [vmem:[#allocation2 + $0x41c] sm:$0xf]
    %v213 = vld [vmem:[#allocation2 + $0x420] sm:$0xff]
    %v214 = vld [vmem:[#allocation2 + $0x428] sm:$0xf]
    %v215 = vld [vmem:[#allocation2 + $0x42c] sm:$0xff]
    %v216 = vld [vmem:[#allocation2 + $0x434] sm:$0xf]
    %v217 = vld [vmem:[#allocation2 + $0x438] sm:$0xff]
    %v218 = vld [vmem:[#allocation2 + $0x440] sm:$0xf]
    %v219 = vld [vmem:[#allocation2 + $0x444] sm:$0xff]
    %v220 = vld [vmem:[#allocation2 + $0x44c] sm:$0xf]
    %v221 = vld [vmem:[#allocation2 + $0x450] sm:$0xff]
    %v222 = vld [vmem:[#allocation2 + $0x458] sm:$0xf]
    %v223 = vld [vmem:[#allocation2 + $0x45c] sm:$0xff]
    %v224 = vld [vmem:[#allocation2 + $0x464] sm:$0xf]
    %v225 = vld [vmem:[#allocation2 + $0x468] sm:$0xff]
    %v226 = vld [vmem:[#allocation2 + $0x470] sm:$0xf]
    %v227 = vld [vmem:[#allocation2 + $0x474] sm:$0xff]
    %v228 = vld [vmem:[#allocation2 + $0x47c] sm:$0xf]
    %v229 = vld [vmem:[#allocation2 + $0x480] sm:$0xff]
    %v230 = vld [vmem:[#allocation2 + $0x488] sm:$0xf]
    %v231 = vld [vmem:[#allocation2 + $0x48c] sm:$0xff]
    %v232 = vld [vmem:[#allocation2 + $0x494] sm:$0xf]
    %v233 = vld [vmem:[#allocation2 + $0x498] sm:$0xff]
    %v234 = vld [vmem:[#allocation2 + $0x4a0] sm:$0xf]
    %v235 = vld [vmem:[%s3] sm:$0xff]
    %v236 = vld [vmem:[%s3 + $0x8] sm:$0xff]
    %v237 = vld [vmem:[%s3 + $0x10] sm:$0xff]
    %v238 = vperm.slane %v235, 1
    %v239 = vperm.slane %v236, 1
    %v240 = vperm.slane %v237, 1
    %v241 = vperm.slane %v235, 3
    %v242 = vperm.slane %v236, 3
    %v243 = vperm.slane %v237, 3
    %v244 = vperm.slane %v235, 4
    %v245 = vperm.slane %v235, 5
    %v246 = vperm.slane %v235, 6
    %v247 = vperm.slane %v235, 7
    %v248 = vld [vmem:[%s0] sm:$0xf]
    %v249 = vld [vmem:[%s0 + $0x4] sm:$0xf]
    %v250 = vld [vmem:[%s0 + $0x8] sm:$0xf]
    %v251 = vld [vmem:[%s0 + $0xc] sm:$0xf]
    %v252 = vld [vmem:[%s0 + $0x10] sm:$0xf]
    %v253 = vld [vmem:[%s0 + $0x14] sm:$0xf]
    %v254 = vld [vmem:[%s0 + $0x18] sm:$0xf]
    %v255 = vld [vmem:[%s0 + $0x1c] sm:$0xf]
    %v256 = vperm.slane %v235, 0
    %v257 = vperm.slane %v236, 0
    %v258 = vperm.slane %v237, 0
    %v267 = vunpack.c.l.b16 %v248
    %v268 = vunpack.c.l.b16 %v249
    %v269 = vunpack.c.l.b16 %v250
    %v270 = vunpack.c.l.b16 %v251
    %v271 = vunpack.c.l.b16 %v252
    %v272 = vunpack.c.l.b16 %v253
    %v273 = vunpack.c.l.b16 %v254
    %v274 = vunpack.c.l.b16 %v255
    %v275 = vpack.c.b16 %v268, %v267
    %v276 = vpack.c.b16 %v270, %v269
    %v277 = vpack.c.b16 %v272, %v271
    %v278 = vpack.c.b16 %v274, %v273
    %v281 = vunpack.c.l.b16 %v37
    %v282 = vunpack.c.h.b16 %v37
    %v283 = vunpack.c.l.b16 %v38
    %v284 = vpack.c.b16 %v281, %v281
    %v285 = vpack.c.b16 %v282, %v282
    %v286 = vpack.c.b16 %v283, %v283
    %vm287 = vcmask 64512
    %v289 = vsel %vm287, %v275, 0
    %v292 = vsel %vm287, %v276, 0
    %v295 = vsel %vm287, %v277, 0
    %v298 = vsel %vm287, %v278, 0
    %vm300 = vcmask 1043456
    %v302 = vsel %vm300, %v284, 0
    %v305 = vsel %vm300, %v285, 0
    %v308 = vsel %vm300, %v286, 0
    %310 = vmatpush.bf16.msra.mxu0 0
    %311 = vmatpush.bf16.msra.mxu0 0
    %312 = vmatpush.bf16.msra.mxu0 0
    %313 = vmatpush.bf16.msra.mxu0 0
    %314 = vmatpush.bf16.msra.mxu0 0
    %315 = vmatpush.bf16.msra.mxu0 0
    %316 = vmatpush.bf16.msra.mxu0 0
    %317 = vmatpush.bf16.msra.mxu0 %v302
    %318 = vmatmul.bf16.gmra.mxu0 %v289
    %v319 = vpop.f32.mrf.mxu0
    %v320 = vadd.f32 %v256, %v319
    %v321 = vpop.f32.mrf.mxu0
    %v322 = vadd.f32 %v256, %v321
    %323 = vmatmul.bf16.gmra.mxu0 %v292
    %v324 = vpop.f32.mrf.mxu0
    %v325 = vadd.f32 %v256, %v324
    %v326 = vpop.f32.mrf.mxu0
    %v327 = vadd.f32 %v256, %v326
    %328 = vmatmul.bf16.gmra.mxu0 %v295
    %v329 = vpop.f32.mrf.mxu0
    %v330 = vadd.f32 %v256, %v329
    %v331 = vpop.f32.mrf.mxu0
    %v332 = vadd.f32 %v256, %v331
    %333 = vmatmul.bf16.gmra.mxu0 %v298
    %v334 = vpop.f32.mrf.mxu0
    %v335 = vadd.f32 %v256, %v334
    %v336 = vpop.f32.mrf.mxu0
    %v337 = vadd.f32 %v256, %v336
    %338 = vdwg.mxu0
    %339 = vmatpush.bf16.msra.mxu0 0
    %340 = vmatpush.bf16.msra.mxu0 0
    %341 = vmatpush.bf16.msra.mxu0 0
    %342 = vmatpush.bf16.msra.mxu0 0
    %343 = vmatpush.bf16.msra.mxu0 0
    %344 = vmatpush.bf16.msra.mxu0 0
    %345 = vmatpush.bf16.msra.mxu0 0
    %346 = vmatpush.bf16.msra.mxu0 %v305
    %347 = vmatmul.bf16.gmra.mxu0 %v289
    %v348 = vpop.f32.mrf.mxu0
    %v349 = vadd.f32 %v257, %v348
    %v350 = vpop.f32.mrf.mxu0
    %v351 = vadd.f32 %v257, %v350
    %352 = vmatmul.bf16.gmra.mxu0 %v292
    %v353 = vpop.f32.mrf.mxu0
    %v354 = vadd.f32 %v257, %v353
    %v355 = vpop.f32.mrf.mxu0
    %v356 = vadd.f32 %v257, %v355
    %357 = vmatmul.bf16.gmra.mxu0 %v295
    %v358 = vpop.f32.mrf.mxu0
    %v359 = vadd.f32 %v257, %v358
    %v360 = vpop.f32.mrf.mxu0
    %v361 = vadd.f32 %v257, %v360
    %362 = vmatmul.bf16.gmra.mxu0 %v298
    %v363 = vpop.f32.mrf.mxu0
    %v364 = vadd.f32 %v257, %v363
    %v365 = vpop.f32.mrf.mxu0
    %v366 = vadd.f32 %v257, %v365
    %367 = vdwg.mxu0
    %368 = vmatpush.bf16.msra.mxu0 0
    %369 = vmatpush.bf16.msra.mxu0 0
    %370 = vmatpush.bf16.msra.mxu0 0
    %371 = vmatpush.bf16.msra.mxu0 0
    %372 = vmatpush.bf16.msra.mxu0 0
    %373 = vmatpush.bf16.msra.mxu0 0
    %374 = vmatpush.bf16.msra.mxu0 0
    %375 = vmatpush.bf16.msra.mxu0 %v308
    %376 = vmatmul.bf16.gmra.mxu0 %v289
    %v377 = vpop.f32.mrf.mxu0
    %v378 = vadd.f32 %v258, %v377
    %v379 = vpop.f32.mrf.mxu0
    %v380 = vadd.f32 %v258, %v379
    %381 = vmatmul.bf16.gmra.mxu0 %v292
    %v382 = vpop.f32.mrf.mxu0
    %v383 = vadd.f32 %v258, %v382
    %v384 = vpop.f32.mrf.mxu0
    %v385 = vadd.f32 %v258, %v384
    %386 = vmatmul.bf16.gmra.mxu0 %v295
    %v387 = vpop.f32.mrf.mxu0
    %v388 = vadd.f32 %v258, %v387
    %v389 = vpop.f32.mrf.mxu0
    %v390 = vadd.f32 %v258, %v389
    %391 = vmatmul.bf16.gmra.mxu0 %v298
    %v392 = vpop.f32.mrf.mxu0
    %v393 = vadd.f32 %v258, %v392
    %v394 = vpop.f32.mrf.mxu0
    %v395 = vadd.f32 %v258, %v394
    %396 = vdwg.mxu0
    %v397 = vld [vmem:[%s1] sm:$0xf]
    %v398 = vld [vmem:[%s1 + $0x4] sm:$0xf]
    %v399 = vld [vmem:[%s1 + $0x8] sm:$0xf]
    %v400 = vld [vmem:[%s1 + $0xc] sm:$0xf]
    %v401 = vld [vmem:[%s1 + $0x10] sm:$0xf]
    %v402 = vld [vmem:[%s1 + $0x14] sm:$0xf]
    %v403 = vperm.slane %v235, 2
    %v404 = vperm.slane %v236, 2
    %v405 = vperm.slane %v237, 2
    %v412 = vunpack.c.l.b16 %v397
    %v413 = vunpack.c.l.b16 %v398
    %v414 = vunpack.c.l.b16 %v399
    %v415 = vunpack.c.l.b16 %v400
    %v416 = vunpack.c.l.b16 %v401
    %v417 = vunpack.c.l.b16 %v402
    %v418 = vpack.c.b16 %v413, %v412
    %v419 = vpack.c.b16 %v415, %v414
    %v420 = vpack.c.b16 %v417, %v416
    %v425 = vunpack.c.l.b16 %v135
    %v426 = vunpack.c.h.b16 %v135
    %v427 = vunpack.c.l.b16 %v136
    %v428 = vunpack.c.l.b16 %v137
    %v429 = vunpack.c.h.b16 %v137
    %v430 = vunpack.c.l.b16 %v138
    %v431 = vpack.c.b16 %v428, %v425
    %v432 = vpack.c.b16 %v429, %v426
    %v433 = vpack.c.b16 %v430, %v427
    %vm437 = vcmask 130048
    %v439 = vsel %vm437, %v418, 0
    %v442 = vsel %vm437, %v419, 0
    %v445 = vsel %vm437, %v420, 0
    %447 = vmatpush.bf16.msra.mxu0 0
    %448 = vmatpush.bf16.msra.mxu0 0
    %449 = vmatpush.bf16.msra.mxu0 0
    %450 = vmatpush.bf16.msra.mxu0 0
    %451 = vmatpush.bf16.msra.mxu0 0
    %452 = vmatpush.bf16.msra.mxu0 0
    %453 = vmatpush.bf16.msra.mxu0 0
    %454 = vmatpush.bf16.msra.mxu0 %v431
    %455 = vmatmul.bf16.gmra.mxu0 %v439
    %v456 = vpop.f32.mrf.mxu0
    %v457 = vadd.f32 %v403, %v456
    %v458 = vpop.f32.mrf.mxu0
    %v459 = vadd.f32 %v403, %v458
    %460 = vmatmul.bf16.gmra.mxu0 %v442
    %v461 = vpop.f32.mrf.mxu0
    %v462 = vadd.f32 %v403, %v461
    %v463 = vpop.f32.mrf.mxu0
    %v464 = vadd.f32 %v403, %v463
    %465 = vmatmul.bf16.gmra.mxu0 %v445
    %v466 = vpop.f32.mrf.mxu0
    %v467 = vadd.f32 %v403, %v466
    %v468 = vpop.f32.mrf.mxu0
    %v469 = vadd.f32 %v403, %v468
    %470 = vdwg.mxu0
    %471 = vmatpush.bf16.msra.mxu0 0
    %472 = vmatpush.bf16.msra.mxu0 0
    %473 = vmatpush.bf16.msra.mxu0 0
    %474 = vmatpush.bf16.msra.mxu0 0
    %475 = vmatpush.bf16.msra.mxu0 0
    %476 = vmatpush.bf16.msra.mxu0 0
    %477 = vmatpush.bf16.msra.mxu0 0
    %478 = vmatpush.bf16.msra.mxu0 %v432
    %479 = vmatmul.bf16.gmra.mxu0 %v439
    %v480 = vpop.f32.mrf.mxu0
    %v481 = vadd.f32 %v404, %v480
    %v482 = vpop.f32.mrf.mxu0
    %v483 = vadd.f32 %v404, %v482
    %484 = vmatmul.bf16.gmra.mxu0 %v442
    %v485 = vpop.f32.mrf.mxu0
    %v486 = vadd.f32 %v404, %v485
    %v487 = vpop.f32.mrf.mxu0
    %v488 = vadd.f32 %v404, %v487
    %489 = vmatmul.bf16.gmra.mxu0 %v445
    %v490 = vpop.f32.mrf.mxu0
    %v491 = vadd.f32 %v404, %v490
    %v492 = vpop.f32.mrf.mxu0
    %v493 = vadd.f32 %v404, %v492
    %494 = vdwg.mxu0
    %495 = vmatpush.bf16.msra.mxu0 0
    %496 = vmatpush.bf16.msra.mxu0 0
    %497 = vmatpush.bf16.msra.mxu0 0
    %498 = vmatpush.bf16.msra.mxu0 0
    %499 = vmatpush.bf16.msra.mxu0 0
    %500 = vmatpush.bf16.msra.mxu0 0
    %501 = vmatpush.bf16.msra.mxu0 0
    %502 = vmatpush.bf16.msra.mxu0 %v433
    %503 = vmatmul.bf16.gmra.mxu0 %v439
    %v504 = vpop.f32.mrf.mxu0
    %v505 = vadd.f32 %v405, %v504
    %v506 = vpop.f32.mrf.mxu0
    %v507 = vadd.f32 %v405, %v506
    %508 = vmatmul.bf16.gmra.mxu0 %v442
    %v509 = vpop.f32.mrf.mxu0
    %v510 = vadd.f32 %v405, %v509
    %v511 = vpop.f32.mrf.mxu0
    %v512 = vadd.f32 %v405, %v511
    %513 = vmatmul.bf16.gmra.mxu0 %v445
    %v514 = vpop.f32.mrf.mxu0
    %v515 = vadd.f32 %v405, %v514
    %v516 = vpop.f32.mrf.mxu0
    %v517 = vadd.f32 %v405, %v516
    %518 = vdwg.mxu0
    %v551 = vunpack.c.l.b16 %v39
    %v552 = vunpack.c.h.b16 %v39
    %v553 = vunpack.c.l.b16 %v40
    %v554 = vunpack.c.l.b16 %v41
    %v555 = vunpack.c.h.b16 %v41
    %v556 = vunpack.c.l.b16 %v42
    %v557 = vunpack.c.l.b16 %v43
    %v558 = vunpack.c.h.b16 %v43
    %v559 = vunpack.c.l.b16 %v44
    %v560 = vunpack.c.l.b16 %v45
    %v561 = vunpack.c.h.b16 %v45
    %v562 = vunpack.c.l.b16 %v46
    %v563 = vunpack.c.l.b16 %v47
    %v564 = vunpack.c.h.b16 %v47
    %v565 = vunpack.c.l.b16 %v48
    %v566 = vunpack.c.l.b16 %v49
    %v567 = vunpack.c.h.b16 %v49
    %v568 = vunpack.c.l.b16 %v50
    %v569 = vunpack.c.l.b16 %v51
    %v570 = vunpack.c.h.b16 %v51
    %v571 = vunpack.c.l.b16 %v52
    %v572 = vunpack.c.l.b16 %v53
    %v573 = vunpack.c.h.b16 %v53
    %v574 = vunpack.c.l.b16 %v54
    %v575 = vunpack.c.l.b16 %v55
    %v576 = vunpack.c.h.b16 %v55
    %v577 = vunpack.c.l.b16 %v56
    %v578 = vunpack.c.l.b16 %v57
    %v579 = vunpack.c.h.b16 %v57
    %v580 = vunpack.c.l.b16 %v58
    %v581 = vunpack.c.l.b16 %v59
    %v582 = vunpack.c.h.b16 %v59
    %v583 = vunpack.c.l.b16 %v60
    %v584 = vunpack.c.l.b16 %v61
    %v585 = vunpack.c.h.b16 %v61
    %v586 = vunpack.c.l.b16 %v62
    %v587 = vunpack.c.l.b16 %v63
    %v588 = vunpack.c.h.b16 %v63
    %v589 = vunpack.c.l.b16 %v64
    %v590 = vunpack.c.l.b16 %v65
    %v591 = vunpack.c.h.b16 %v65
    %v592 = vunpack.c.l.b16 %v66
    %v593 = vunpack.c.l.b16 %v67
    %v594 = vunpack.c.h.b16 %v67
    %v595 = vunpack.c.l.b16 %v68
    %v596 = vunpack.c.l.b16 %v69
    %v597 = vunpack.c.h.b16 %v69
    %v598 = vunpack.c.l.b16 %v70
    %v599 = vpack.c.b16 %v554, %v551
    %v600 = vpack.c.b16 %v555, %v552
    %v601 = vpack.c.b16 %v556, %v553
    %v602 = vpack.c.b16 %v560, %v557
    %v603 = vpack.c.b16 %v561, %v558
    %v604 = vpack.c.b16 %v562, %v559
    %v605 = vpack.c.b16 %v566, %v563
    %v606 = vpack.c.b16 %v567, %v564
    %v607 = vpack.c.b16 %v568, %v565
    %v608 = vpack.c.b16 %v572, %v569
    %v609 = vpack.c.b16 %v573, %v570
    %v610 = vpack.c.b16 %v574, %v571
    %v611 = vpack.c.b16 %v578, %v575
    %v612 = vpack.c.b16 %v579, %v576
    %v613 = vpack.c.b16 %v580, %v577
    %v614 = vpack.c.b16 %v584, %v581
    %v615 = vpack.c.b16 %v585, %v582
    %v616 = vpack.c.b16 %v586, %v583
    %v617 = vpack.c.b16 %v590, %v587
    %v618 = vpack.c.b16 %v591, %v588
    %v619 = vpack.c.b16 %v592, %v589
    %v620 = vpack.c.b16 %v596, %v593
    %v621 = vpack.c.b16 %v597, %v594
    %v622 = vpack.c.b16 %v598, %v595
    %647 = vmatpush.bf16.msra.mxu0 %v620
    %648 = vmatpush.bf16.msra.mxu0 %v617
    %649 = vmatpush.bf16.msra.mxu0 %v614
    %650 = vmatpush.bf16.msra.mxu0 %v611
    %651 = vmatpush.bf16.msra.mxu0 %v608
    %652 = vmatpush.bf16.msra.mxu0 %v605
    %653 = vmatpush.bf16.msra.mxu0 %v602
    %654 = vmatpush.bf16.msra.mxu0 %v599
    %655 = vmatmul.bf16.gmra.mxu0 0
    %v656 = vpop.f32.mrf.mxu0
    %v657 = vadd.f32 0.0, %v656
    %v658 = vpop.f32.mrf.mxu0
    %659 = vdwg.mxu0
    %660 = vmatpush.bf16.msra.mxu0 %v621
    %661 = vmatpush.bf16.msra.mxu0 %v618
    %662 = vmatpush.bf16.msra.mxu0 %v615
    %663 = vmatpush.bf16.msra.mxu0 %v612
    %664 = vmatpush.bf16.msra.mxu0 %v609
    %665 = vmatpush.bf16.msra.mxu0 %v606
    %666 = vmatpush.bf16.msra.mxu0 %v603
    %667 = vmatpush.bf16.msra.mxu0 %v600
    %668 = vmatmul.bf16.gmra.mxu0 0
    %v669 = vpop.f32.mrf.mxu0
    %v670 = vadd.f32 0.0, %v669
    %v671 = vpop.f32.mrf.mxu0
    %672 = vdwg.mxu0
    %673 = vmatpush.bf16.msra.mxu0 %v622
    %674 = vmatpush.bf16.msra.mxu0 %v619
    %675 = vmatpush.bf16.msra.mxu0 %v616
    %676 = vmatpush.bf16.msra.mxu0 %v613
    %677 = vmatpush.bf16.msra.mxu0 %v610
    %678 = vmatpush.bf16.msra.mxu0 %v607
    %679 = vmatpush.bf16.msra.mxu0 %v604
    %680 = vmatpush.bf16.msra.mxu0 %v601
    %681 = vmatmul.bf16.gmra.mxu0 0
    %v682 = vpop.f32.mrf.mxu0
    %v683 = vadd.f32 0.0, %v682
    %v684 = vpop.f32.mrf.mxu0
    %685 = vdwg.mxu0
    %v686 = vadd.f32 %v320, %v657
    %v687 = vxor.u32 %v686, 2147483648
    %v688 = vmul.f32 %v687, 1.442695
    %v689 = vpow.pop %v688
    %v690 = vadd.f32 %v689, 1.0
    %v691 = vrcp.pop %v690
    %v692 = vmul.f32 %v690, %v691
    %v693 = vsub.f32 1.0, %v692
    %v694 = vmul.f32 %v691, %v693
    %v695 = vadd.f32 %v691, %v694
    %vm696 = vweird.f32 %v690
    %vm697 = vweird.f32 %v691
    %vm698 = vmor %vm696, %vm697
    %v699 = vsel %vm698, %v691, %v695
    %v700 = vand.u32 2147483647, %v690
    %vm701 = vcmp.eq.f32.partialorder %v700, 8.507059e+37
    %v702 = vand.u32 %v690, 2147483648
    %v703 = vor.u32 1.1754944e-38, %v702
    %v704 = vsel %vm701, %v703, %v699
    %v705 = vmul.f32 1.0, %v704
    %v706 = vadd.f32 %v349, %v670
    %v707 = vxor.u32 %v706, 2147483648
    %v708 = vmul.f32 %v707, 1.442695
    %v709 = vpow.pop %v708
    %v710 = vadd.f32 %v709, 1.0
    %v711 = vrcp.pop %v710
    %v712 = vmul.f32 %v710, %v711
    %v713 = vsub.f32 1.0, %v712
    %v714 = vmul.f32 %v711, %v713
    %v715 = vadd.f32 %v711, %v714
    %vm716 = vweird.f32 %v710
    %vm717 = vweird.f32 %v711
    %vm718 = vmor %vm716, %vm717
    %v719 = vsel %vm718, %v711, %v715
    %v720 = vand.u32 2147483647, %v710
    %vm721 = vcmp.eq.f32.partialorder %v720, 8.507059e+37
    %v722 = vand.u32 %v710, 2147483648
    %v723 = vor.u32 1.1754944e-38, %v722
    %v724 = vsel %vm721, %v723, %v719
    %v725 = vmul.f32 1.0, %v724
    %v726 = vadd.f32 %v683, %v244
    %v727 = vmul.f32 %v705, %v726
    %v728 = vadd.f32 %v378, %v727
    %v729 = vtanh.pop %v728
    %v730 = vsub.f32 1.0, %v725
    %v731 = vmul.f32 %v730, %v729
    %v732 = vmul.f32 %v725, 0.0
    %v733 = vadd.f32 %v731, %v732
    %v766 = vunpack.c.l.b16 %v139
    %v767 = vunpack.c.h.b16 %v139
    %v768 = vunpack.c.l.b16 %v140
    %v769 = vunpack.c.l.b16 %v141
    %v770 = vunpack.c.h.b16 %v141
    %v771 = vunpack.c.l.b16 %v142
    %v772 = vunpack.c.l.b16 %v143
    %v773 = vunpack.c.h.b16 %v143
    %v774 = vunpack.c.l.b16 %v144
    %v775 = vunpack.c.l.b16 %v145
    %v776 = vunpack.c.h.b16 %v145
    %v777 = vunpack.c.l.b16 %v146
    %v778 = vunpack.c.l.b16 %v147
    %v779 = vunpack.c.h.b16 %v147
    %v780 = vunpack.c.l.b16 %v148
    %v781 = vunpack.c.l.b16 %v149
    %v782 = vunpack.c.h.b16 %v149
    %v783 = vunpack.c.l.b16 %v150
    %v784 = vunpack.c.l.b16 %v151
    %v785 = vunpack.c.h.b16 %v151
    %v786 = vunpack.c.l.b16 %v152
    %v787 = vunpack.c.l.b16 %v153
    %v788 = vunpack.c.h.b16 %v153
    %v789 = vunpack.c.l.b16 %v154
    %v790 = vunpack.c.l.b16 %v155
    %v791 = vunpack.c.h.b16 %v155
    %v792 = vunpack.c.l.b16 %v156
    %v793 = vunpack.c.l.b16 %v157
    %v794 = vunpack.c.h.b16 %v157
    %v795 = vunpack.c.l.b16 %v158
    %v796 = vunpack.c.l.b16 %v159
    %v797 = vunpack.c.h.b16 %v159
    %v798 = vunpack.c.l.b16 %v160
    %v799 = vunpack.c.l.b16 %v161
    %v800 = vunpack.c.h.b16 %v161
    %v801 = vunpack.c.l.b16 %v162
    %v802 = vunpack.c.l.b16 %v163
    %v803 = vunpack.c.h.b16 %v163
    %v804 = vunpack.c.l.b16 %v164
    %v805 = vunpack.c.l.b16 %v165
    %v806 = vunpack.c.h.b16 %v165
    %v807 = vunpack.c.l.b16 %v166
    %v808 = vunpack.c.l.b16 %v167
    %v809 = vunpack.c.h.b16 %v167
    %v810 = vunpack.c.l.b16 %v168
    %v811 = vunpack.c.l.b16 %v169
    %v812 = vunpack.c.h.b16 %v169
    %v813 = vunpack.c.l.b16 %v170
    %v814 = vpack.c.b16 %v769, %v766
    %v815 = vpack.c.b16 %v770, %v767
    %v816 = vpack.c.b16 %v771, %v768
    %v817 = vpack.c.b16 %v775, %v772
    %v818 = vpack.c.b16 %v776, %v773
    %v819 = vpack.c.b16 %v777, %v774
    %v820 = vpack.c.b16 %v781, %v778
    %v821 = vpack.c.b16 %v782, %v779
    %v822 = vpack.c.b16 %v783, %v780
    %v823 = vpack.c.b16 %v787, %v784
    %v824 = vpack.c.b16 %v788, %v785
    %v825 = vpack.c.b16 %v789, %v786
    %v826 = vpack.c.b16 %v793, %v790
    %v827 = vpack.c.b16 %v794, %v791
    %v828 = vpack.c.b16 %v795, %v792
    %v829 = vpack.c.b16 %v799, %v796
    %v830 = vpack.c.b16 %v800, %v797
    %v831 = vpack.c.b16 %v801, %v798
    %v832 = vpack.c.b16 %v805, %v802
    %v833 = vpack.c.b16 %v806, %v803
    %v834 = vpack.c.b16 %v807, %v804
    %v835 = vpack.c.b16 %v811, %v808
    %v836 = vpack.c.b16 %v812, %v809
    %v837 = vpack.c.b16 %v813, %v810
    %862 = vmatpush.bf16.msra.mxu0 %v835
    %863 = vmatpush.bf16.msra.mxu0 %v832
    %864 = vmatpush.bf16.msra.mxu0 %v829
    %865 = vmatpush.bf16.msra.mxu0 %v826
    %866 = vmatpush.bf16.msra.mxu0 %v823
    %867 = vmatpush.bf16.msra.mxu0 %v820
    %868 = vmatpush.bf16.msra.mxu0 %v817
    %869 = vmatpush.bf16.msra.mxu0 %v814
    %870 = vmatmul.bf16.gmra.mxu0 0
    %v871 = vpop.f32.mrf.mxu0
    %v872 = vadd.f32 0.0, %v871
    %v873 = vpop.f32.mrf.mxu0
    %874 = vdwg.mxu0
    %875 = vmatpush.bf16.msra.mxu0 %v836
    %876 = vmatpush.bf16.msra.mxu0 %v833
    %877 = vmatpush.bf16.msra.mxu0 %v830
    %878 = vmatpush.bf16.msra.mxu0 %v827
    %879 = vmatpush.bf16.msra.mxu0 %v824
    %880 = vmatpush.bf16.msra.mxu0 %v821
    %881 = vmatpush.bf16.msra.mxu0 %v818
    %882 = vmatpush.bf16.msra.mxu0 %v815
    %883 = vmatmul.bf16.gmra.mxu0 0
    %v884 = vpop.f32.mrf.mxu0
    %v885 = vadd.f32 0.0, %v884
    %v886 = vpop.f32.mrf.mxu0
    %887 = vdwg.mxu0
    %888 = vmatpush.bf16.msra.mxu0 %v837
    %889 = vmatpush.bf16.msra.mxu0 %v834
    %890 = vmatpush.bf16.msra.mxu0 %v831
    %891 = vmatpush.bf16.msra.mxu0 %v828
    %892 = vmatpush.bf16.msra.mxu0 %v825
    %893 = vmatpush.bf16.msra.mxu0 %v822
    %894 = vmatpush.bf16.msra.mxu0 %v819
    %895 = vmatpush.bf16.msra.mxu0 %v816
    %896 = vmatmul.bf16.gmra.mxu0 0
    %v897 = vpop.f32.mrf.mxu0
    %v898 = vadd.f32 0.0, %v897
    %v899 = vpop.f32.mrf.mxu0
    %900 = vdwg.mxu0
    %v901 = vadd.f32 %v457, %v872
    %v902 = vxor.u32 %v901, 2147483648
    %v903 = vmul.f32 %v902, 1.442695
    %v904 = vpow.pop %v903
    %v905 = vadd.f32 %v904, 1.0
    %v906 = vrcp.pop %v905
    %v907 = vmul.f32 %v905, %v906
    %v908 = vsub.f32 1.0, %v907
    %v909 = vmul.f32 %v906, %v908
    %v910 = vadd.f32 %v906, %v909
    %vm911 = vweird.f32 %v905
    %vm912 = vweird.f32 %v906
    %vm913 = vmor %vm911, %vm912
    %v914 = vsel %vm913, %v906, %v910
    %v915 = vand.u32 2147483647, %v905
    %vm916 = vcmp.eq.f32.partialorder %v915, 8.507059e+37
    %v917 = vand.u32 %v905, 2147483648
    %v918 = vor.u32 1.1754944e-38, %v917
    %v919 = vsel %vm916, %v918, %v914
    %v920 = vmul.f32 1.0, %v919
    %v921 = vadd.f32 %v481, %v885
    %v922 = vxor.u32 %v921, 2147483648
    %v923 = vmul.f32 %v922, 1.442695
    %v924 = vpow.pop %v923
    %v925 = vadd.f32 %v924, 1.0
    %v926 = vrcp.pop %v925
    %v927 = vmul.f32 %v925, %v926
    %v928 = vsub.f32 1.0, %v927
    %v929 = vmul.f32 %v926, %v928
    %v930 = vadd.f32 %v926, %v929
    %vm931 = vweird.f32 %v925
    %vm932 = vweird.f32 %v926
    %vm933 = vmor %vm931, %vm932
    %v934 = vsel %vm933, %v926, %v930
    %v935 = vand.u32 2147483647, %v925
    %vm936 = vcmp.eq.f32.partialorder %v935, 8.507059e+37
    %v937 = vand.u32 %v925, 2147483648
    %v938 = vor.u32 1.1754944e-38, %v937
    %v939 = vsel %vm936, %v938, %v934
    %v940 = vmul.f32 1.0, %v939
    %v941 = vadd.f32 %v898, %v246
    %v942 = vmul.f32 %v920, %v941
    %v943 = vadd.f32 %v505, %v942
    %v944 = vtanh.pop %v943
    %v945 = vsub.f32 1.0, %v940
    %v946 = vmul.f32 %v945, %v944
    %v947 = vmul.f32 %v940, 0.0
    %v948 = vadd.f32 %v946, %v947
    %v949 = vpack.c.bf16 %v733, %v733
    %950 = vmatpush.bf16.msra.mxu0 %v620
    %951 = vmatpush.bf16.msra.mxu0 %v617
    %952 = vmatpush.bf16.msra.mxu0 %v614
    %953 = vmatpush.bf16.msra.mxu0 %v611
    %954 = vmatpush.bf16.msra.mxu0 %v608
    %955 = vmatpush.bf16.msra.mxu0 %v605
    %956 = vmatpush.bf16.msra.mxu0 %v602
    %957 = vmatpush.bf16.msra.mxu0 %v599
    %958 = vmatmul.bf16.gmra.mxu0 %v949
    %v959 = vpop.f32.mrf.mxu0
    %v960 = vadd.f32 0.0, %v959
    %v961 = vpop.f32.mrf.mxu0
    %962 = vdwg.mxu0
    %963 = vmatpush.bf16.msra.mxu0 %v621
    %964 = vmatpush.bf16.msra.mxu0 %v618
    %965 = vmatpush.bf16.msra.mxu0 %v615
    %966 = vmatpush.bf16.msra.mxu0 %v612
    %967 = vmatpush.bf16.msra.mxu0 %v609
    %968 = vmatpush.bf16.msra.mxu0 %v606
    %969 = vmatpush.bf16.msra.mxu0 %v603
    %970 = vmatpush.bf16.msra.mxu0 %v600
    %971 = vmatmul.bf16.gmra.mxu0 %v949
    %v972 = vpop.f32.mrf.mxu0
    %v973 = vadd.f32 0.0, %v972
    %v974 = vpop.f32.mrf.mxu0
    %975 = vdwg.mxu0
    %976 = vmatpush.bf16.msra.mxu0 %v622
    %977 = vmatpush.bf16.msra.mxu0 %v619
    %978 = vmatpush.bf16.msra.mxu0 %v616
    %979 = vmatpush.bf16.msra.mxu0 %v613
    %980 = vmatpush.bf16.msra.mxu0 %v610
    %981 = vmatpush.bf16.msra.mxu0 %v607
    %982 = vmatpush.bf16.msra.mxu0 %v604
    %983 = vmatpush.bf16.msra.mxu0 %v601
    %984 = vmatmul.bf16.gmra.mxu0 %v949
    %v985 = vpop.f32.mrf.mxu0
    %v986 = vadd.f32 0.0, %v985
    %v987 = vpop.f32.mrf.mxu0
    %988 = vdwg.mxu0
    %v989 = vadd.f32 %v322, %v960
    %v990 = vxor.u32 %v989, 2147483648
    %v991 = vmul.f32 %v990, 1.442695
    %v992 = vpow.pop %v991
    %v993 = vadd.f32 %v992, 1.0
    %v994 = vrcp.pop %v993
    %v995 = vmul.f32 %v993, %v994
    %v996 = vsub.f32 1.0, %v995
    %v997 = vmul.f32 %v994, %v996
    %v998 = vadd.f32 %v994, %v997
    %vm999 = vweird.f32 %v993
    %vm1000 = vweird.f32 %v994
    %vm1001 = vmor %vm999, %vm1000
    %v1002 = vsel %vm1001, %v994, %v998
    %v1003 = vand.u32 2147483647, %v993
    %vm1004 = vcmp.eq.f32.partialorder %v1003, 8.507059e+37
    %v1005 = vand.u32 %v993, 2147483648
    %v1006 = vor.u32 1.1754944e-38, %v1005
    %v1007 = vsel %vm1004, %v1006, %v1002
    %v1008 = vmul.f32 1.0, %v1007
    %v1009 = vadd.f32 %v351, %v973
    %v1010 = vxor.u32 %v1009, 2147483648
    %v1011 = vmul.f32 %v1010, 1.442695
    %v1012 = vpow.pop %v1011
    %v1013 = vadd.f32 %v1012, 1.0
    %v1014 = vrcp.pop %v1013
    %v1015 = vmul.f32 %v1013, %v1014
    %v1016 = vsub.f32 1.0, %v1015
    %v1017 = vmul.f32 %v1014, %v1016
    %v1018 = vadd.f32 %v1014, %v1017
    %vm1019 = vweird.f32 %v1013
    %vm1020 = vweird.f32 %v1014
    %vm1021 = vmor %vm1019, %vm1020
    %v1022 = vsel %vm1021, %v1014, %v1018
    %v1023 = vand.u32 2147483647, %v1013
    %vm1024 = vcmp.eq.f32.partialorder %v1023, 8.507059e+37
    %v1025 = vand.u32 %v1013, 2147483648
    %v1026 = vor.u32 1.1754944e-38, %v1025
    %v1027 = vsel %vm1024, %v1026, %v1022
    %v1028 = vmul.f32 1.0, %v1027
    %v1029 = vadd.f32 %v986, %v244
    %v1030 = vmul.f32 %v1008, %v1029
    %v1031 = vadd.f32 %v380, %v1030
    %v1032 = vtanh.pop %v1031
    %v1033 = vsub.f32 1.0, %v1028
    %v1034 = vmul.f32 %v1033, %v1032
    %v1035 = vmul.f32 %v1028, %v733
    %v1036 = vadd.f32 %v1034, %v1035
    %v1037 = vpack.c.bf16 %v948, %v948
    %1038 = vmatpush.bf16.msra.mxu0 %v835
    %1039 = vmatpush.bf16.msra.mxu0 %v832
    %1040 = vmatpush.bf16.msra.mxu0 %v829
    %1041 = vmatpush.bf16.msra.mxu0 %v826
    %1042 = vmatpush.bf16.msra.mxu0 %v823
    %1043 = vmatpush.bf16.msra.mxu0 %v820
    %1044 = vmatpush.bf16.msra.mxu0 %v817
    %1045 = vmatpush.bf16.msra.mxu0 %v814
    %1046 = vmatmul.bf16.gmra.mxu0 %v1037
    %v1047 = vpop.f32.mrf.mxu0
    %v1048 = vadd.f32 0.0, %v1047
    %v1049 = vpop.f32.mrf.mxu0
    %1050 = vdwg.mxu0
    %1051 = vmatpush.bf16.msra.mxu0 %v836
    %1052 = vmatpush.bf16.msra.mxu0 %v833
    %1053 = vmatpush.bf16.msra.mxu0 %v830
    %1054 = vmatpush.bf16.msra.mxu0 %v827
    %1055 = vmatpush.bf16.msra.mxu0 %v824
    %1056 = vmatpush.bf16.msra.mxu0 %v821
    %1057 = vmatpush.bf16.msra.mxu0 %v818
    %1058 = vmatpush.bf16.msra.mxu0 %v815
    %1059 = vmatmul.bf16.gmra.mxu0 %v1037
    %v1060 = vpop.f32.mrf.mxu0
    %v1061 = vadd.f32 0.0, %v1060
    %v1062 = vpop.f32.mrf.mxu0
    %1063 = vdwg.mxu0
    %1064 = vmatpush.bf16.msra.mxu0 %v837
    %1065 = vmatpush.bf16.msra.mxu0 %v834
    %1066 = vmatpush.bf16.msra.mxu0 %v831
    %1067 = vmatpush.bf16.msra.mxu0 %v828
    %1068 = vmatpush.bf16.msra.mxu0 %v825
    %1069 = vmatpush.bf16.msra.mxu0 %v822
    %1070 = vmatpush.bf16.msra.mxu0 %v819
    %1071 = vmatpush.bf16.msra.mxu0 %v816
    %1072 = vmatmul.bf16.gmra.mxu0 %v1037
    %v1073 = vpop.f32.mrf.mxu0
    %v1074 = vadd.f32 0.0, %v1073
    %v1075 = vpop.f32.mrf.mxu0
    %1076 = vdwg.mxu0
    %v1077 = vadd.f32 %v459, %v1048
    %v1078 = vxor.u32 %v1077, 2147483648
    %v1079 = vmul.f32 %v1078, 1.442695
    %v1080 = vpow.pop %v1079
    %v1081 = vadd.f32 %v1080, 1.0
    %v1082 = vrcp.pop %v1081
    %v1083 = vmul.f32 %v1081, %v1082
    %v1084 = vsub.f32 1.0, %v1083
    %v1085 = vmul.f32 %v1082, %v1084
    %v1086 = vadd.f32 %v1082, %v1085
    %vm1087 = vweird.f32 %v1081
    %vm1088 = vweird.f32 %v1082
    %vm1089 = vmor %vm1087, %vm1088
    %v1090 = vsel %vm1089, %v1082, %v1086
    %v1091 = vand.u32 2147483647, %v1081
    %vm1092 = vcmp.eq.f32.partialorder %v1091, 8.507059e+37
    %v1093 = vand.u32 %v1081, 2147483648
    %v1094 = vor.u32 1.1754944e-38, %v1093
    %v1095 = vsel %vm1092, %v1094, %v1090
    %v1096 = vmul.f32 1.0, %v1095
    %v1097 = vadd.f32 %v483, %v1061
    %v1098 = vxor.u32 %v1097, 2147483648
    %v1099 = vmul.f32 %v1098, 1.442695
    %v1100 = vpow.pop %v1099
    %v1101 = vadd.f32 %v1100, 1.0
    %v1102 = vrcp.pop %v1101
    %v1103 = vmul.f32 %v1101, %v1102
    %v1104 = vsub.f32 1.0, %v1103
    %v1105 = vmul.f32 %v1102, %v1104
    %v1106 = vadd.f32 %v1102, %v1105
    %vm1107 = vweird.f32 %v1101
    %vm1108 = vweird.f32 %v1102
    %vm1109 = vmor %vm1107, %vm1108
    %v1110 = vsel %vm1109, %v1102, %v1106
    %v1111 = vand.u32 2147483647, %v1101
    %vm1112 = vcmp.eq.f32.partialorder %v1111, 8.507059e+37
    %v1113 = vand.u32 %v1101, 2147483648
    %v1114 = vor.u32 1.1754944e-38, %v1113
    %v1115 = vsel %vm1112, %v1114, %v1110
    %v1116 = vmul.f32 1.0, %v1115
    %v1117 = vadd.f32 %v1074, %v246
    %v1118 = vmul.f32 %v1096, %v1117
    %v1119 = vadd.f32 %v507, %v1118
    %v1120 = vtanh.pop %v1119
    %v1121 = vsub.f32 1.0, %v1116
    %v1122 = vmul.f32 %v1121, %v1120
    %v1123 = vmul.f32 %v1116, %v948
    %v1124 = vadd.f32 %v1122, %v1123
    %v1157 = vunpack.c.l.b16 %v71
    %v1158 = vunpack.c.h.b16 %v71
    %v1159 = vunpack.c.l.b16 %v72
    %v1160 = vunpack.c.l.b16 %v73
    %v1161 = vunpack.c.h.b16 %v73
    %v1162 = vunpack.c.l.b16 %v74
    %v1163 = vunpack.c.l.b16 %v75
    %v1164 = vunpack.c.h.b16 %v75
    %v1165 = vunpack.c.l.b16 %v76
    %v1166 = vunpack.c.l.b16 %v77
    %v1167 = vunpack.c.h.b16 %v77
    %v1168 = vunpack.c.l.b16 %v78
    %v1169 = vunpack.c.l.b16 %v79
    %v1170 = vunpack.c.h.b16 %v79
    %v1171 = vunpack.c.l.b16 %v80
    %v1172 = vunpack.c.l.b16 %v81
    %v1173 = vunpack.c.h.b16 %v81
    %v1174 = vunpack.c.l.b16 %v82
    %v1175 = vunpack.c.l.b16 %v83
    %v1176 = vunpack.c.h.b16 %v83
    %v1177 = vunpack.c.l.b16 %v84
    %v1178 = vunpack.c.l.b16 %v85
    %v1179 = vunpack.c.h.b16 %v85
    %v1180 = vunpack.c.l.b16 %v86
    %v1181 = vunpack.c.l.b16 %v87
    %v1182 = vunpack.c.h.b16 %v87
    %v1183 = vunpack.c.l.b16 %v88
    %v1184 = vunpack.c.l.b16 %v89
    %v1185 = vunpack.c.h.b16 %v89
    %v1186 = vunpack.c.l.b16 %v90
    %v1187 = vunpack.c.l.b16 %v91
    %v1188 = vunpack.c.h.b16 %v91
    %v1189 = vunpack.c.l.b16 %v92
    %v1190 = vunpack.c.l.b16 %v93
    %v1191 = vunpack.c.h.b16 %v93
    %v1192 = vunpack.c.l.b16 %v94
    %v1193 = vunpack.c.l.b16 %v95
    %v1194 = vunpack.c.h.b16 %v95
    %v1195 = vunpack.c.l.b16 %v96
    %v1196 = vunpack.c.l.b16 %v97
    %v1197 = vunpack.c.h.b16 %v97
    %v1198 = vunpack.c.l.b16 %v98
    %v1199 = vunpack.c.l.b16 %v99
    %v1200 = vunpack.c.h.b16 %v99
    %v1201 = vunpack.c.l.b16 %v100
    %v1202 = vunpack.c.l.b16 %v101
    %v1203 = vunpack.c.h.b16 %v101
    %v1204 = vunpack.c.l.b16 %v102
    %v1205 = vpack.c.b16 %v1160, %v1157
    %v1206 = vpack.c.b16 %v1161, %v1158
    %v1207 = vpack.c.b16 %v1162, %v1159
    %v1208 = vpack.c.b16 %v1166, %v1163
    %v1209 = vpack.c.b16 %v1167, %v1164
    %v1210 = vpack.c.b16 %v1168, %v1165
    %v1211 = vpack.c.b16 %v1172, %v1169
    %v1212 = vpack.c.b16 %v1173, %v1170
    %v1213 = vpack.c.b16 %v1174, %v1171
    %v1214 = vpack.c.b16 %v1178, %v1175
    %v1215 = vpack.c.b16 %v1179, %v1176
    %v1216 = vpack.c.b16 %v1180, %v1177
    %v1217 = vpack.c.b16 %v1184, %v1181
    %v1218 = vpack.c.b16 %v1185, %v1182
    %v1219 = vpack.c.b16 %v1186, %v1183
    %v1220 = vpack.c.b16 %v1190, %v1187
    %v1221 = vpack.c.b16 %v1191, %v1188
    %v1222 = vpack.c.b16 %v1192, %v1189
    %v1223 = vpack.c.b16 %v1196, %v1193
    %v1224 = vpack.c.b16 %v1197, %v1194
    %v1225 = vpack.c.b16 %v1198, %v1195
    %v1226 = vpack.c.b16 %v1202, %v1199
    %v1227 = vpack.c.b16 %v1203, %v1200
    %v1228 = vpack.c.b16 %v1204, %v1201
    %1253 = vmatpush.bf16.msra.mxu0 %v1226
    %1254 = vmatpush.bf16.msra.mxu0 %v1223
    %1255 = vmatpush.bf16.msra.mxu0 %v1220
    %1256 = vmatpush.bf16.msra.mxu0 %v1217
    %1257 = vmatpush.bf16.msra.mxu0 %v1214
    %1258 = vmatpush.bf16.msra.mxu0 %v1211
    %1259 = vmatpush.bf16.msra.mxu0 %v1208
    %1260 = vmatpush.bf16.msra.mxu0 %v1205
    %1261 = vmatmul.bf16.gmra.mxu0 %v949
    %v1262 = vpop.f32.mrf.mxu0
    %v1263 = vadd.f32 %v238, %v1262
    %v1264 = vpop.f32.mrf.mxu0
    %1265 = vdwg.mxu0
    %1266 = vmatpush.bf16.msra.mxu0 %v1227
    %1267 = vmatpush.bf16.msra.mxu0 %v1224
    %1268 = vmatpush.bf16.msra.mxu0 %v1221
    %1269 = vmatpush.bf16.msra.mxu0 %v1218
    %1270 = vmatpush.bf16.msra.mxu0 %v1215
    %1271 = vmatpush.bf16.msra.mxu0 %v1212
    %1272 = vmatpush.bf16.msra.mxu0 %v1209
    %1273 = vmatpush.bf16.msra.mxu0 %v1206
    %1274 = vmatmul.bf16.gmra.mxu0 %v949
    %v1275 = vpop.f32.mrf.mxu0
    %v1276 = vadd.f32 %v239, %v1275
    %v1277 = vpop.f32.mrf.mxu0
    %1278 = vdwg.mxu0
    %1279 = vmatpush.bf16.msra.mxu0 %v1228
    %1280 = vmatpush.bf16.msra.mxu0 %v1225
    %1281 = vmatpush.bf16.msra.mxu0 %v1222
    %1282 = vmatpush.bf16.msra.mxu0 %v1219
    %1283 = vmatpush.bf16.msra.mxu0 %v1216
    %1284 = vmatpush.bf16.msra.mxu0 %v1213
    %1285 = vmatpush.bf16.msra.mxu0 %v1210
    %1286 = vmatpush.bf16.msra.mxu0 %v1207
    %1287 = vmatmul.bf16.gmra.mxu0 %v949
    %v1288 = vpop.f32.mrf.mxu0
    %v1289 = vadd.f32 %v240, %v1288
    %v1290 = vpop.f32.mrf.mxu0
    %1291 = vdwg.mxu0
    %v1324 = vunpack.c.l.b16 %v103
    %v1325 = vunpack.c.h.b16 %v103
    %v1326 = vunpack.c.l.b16 %v104
    %v1327 = vunpack.c.l.b16 %v105
    %v1328 = vunpack.c.h.b16 %v105
    %v1329 = vunpack.c.l.b16 %v106
    %v1330 = vunpack.c.l.b16 %v107
    %v1331 = vunpack.c.h.b16 %v107
    %v1332 = vunpack.c.l.b16 %v108
    %v1333 = vunpack.c.l.b16 %v109
    %v1334 = vunpack.c.h.b16 %v109
    %v1335 = vunpack.c.l.b16 %v110
    %v1336 = vunpack.c.l.b16 %v111
    %v1337 = vunpack.c.h.b16 %v111
    %v1338 = vunpack.c.l.b16 %v112
    %v1339 = vunpack.c.l.b16 %v113
    %v1340 = vunpack.c.h.b16 %v113
    %v1341 = vunpack.c.l.b16 %v114
    %v1342 = vunpack.c.l.b16 %v115
    %v1343 = vunpack.c.h.b16 %v115
    %v1344 = vunpack.c.l.b16 %v116
    %v1345 = vunpack.c.l.b16 %v117
    %v1346 = vunpack.c.h.b16 %v117
    %v1347 = vunpack.c.l.b16 %v118
    %v1348 = vunpack.c.l.b16 %v119
    %v1349 = vunpack.c.h.b16 %v119
    %v1350 = vunpack.c.l.b16 %v120
    %v1351 = vunpack.c.l.b16 %v121
    %v1352 = vunpack.c.h.b16 %v121
    %v1353 = vunpack.c.l.b16 %v122
    %v1354 = vunpack.c.l.b16 %v123
    %v1355 = vunpack.c.h.b16 %v123
    %v1356 = vunpack.c.l.b16 %v124
    %v1357 = vunpack.c.l.b16 %v125
    %v1358 = vunpack.c.h.b16 %v125
    %v1359 = vunpack.c.l.b16 %v126
    %v1360 = vunpack.c.l.b16 %v127
    %v1361 = vunpack.c.h.b16 %v127
    %v1362 = vunpack.c.l.b16 %v128
    %v1363 = vunpack.c.l.b16 %v129
    %v1364 = vunpack.c.h.b16 %v129
    %v1365 = vunpack.c.l.b16 %v130
    %v1366 = vunpack.c.l.b16 %v131
    %v1367 = vunpack.c.h.b16 %v131
    %v1368 = vunpack.c.l.b16 %v132
    %v1369 = vunpack.c.l.b16 %v133
    %v1370 = vunpack.c.h.b16 %v133
    %v1371 = vunpack.c.l.b16 %v134
    %v1372 = vpack.c.b16 %v1327, %v1324
    %v1373 = vpack.c.b16 %v1328, %v1325
    %v1374 = vpack.c.b16 %v1329, %v1326
    %v1375 = vpack.c.b16 %v1333, %v1330
    %v1376 = vpack.c.b16 %v1334, %v1331
    %v1377 = vpack.c.b16 %v1335, %v1332
    %v1378 = vpack.c.b16 %v1339, %v1336
    %v1379 = vpack.c.b16 %v1340, %v1337
    %v1380 = vpack.c.b16 %v1341, %v1338
    %v1381 = vpack.c.b16 %v1345, %v1342
    %v1382 = vpack.c.b16 %v1346, %v1343
    %v1383 = vpack.c.b16 %v1347, %v1344
    %v1384 = vpack.c.b16 %v1351, %v1348
    %v1385 = vpack.c.b16 %v1352, %v1349
    %v1386 = vpack.c.b16 %v1353, %v1350
    %v1387 = vpack.c.b16 %v1357, %v1354
    %v1388 = vpack.c.b16 %v1358, %v1355
    %v1389 = vpack.c.b16 %v1359, %v1356
    %v1390 = vpack.c.b16 %v1363, %v1360
    %v1391 = vpack.c.b16 %v1364, %v1361
    %v1392 = vpack.c.b16 %v1365, %v1362
    %v1393 = vpack.c.b16 %v1369, %v1366
    %v1394 = vpack.c.b16 %v1370, %v1367
    %v1395 = vpack.c.b16 %v1371, %v1368
    %1420 = vmatpush.bf16.msra.mxu0 %v1393
    %1421 = vmatpush.bf16.msra.mxu0 %v1390
    %1422 = vmatpush.bf16.msra.mxu0 %v1387
    %1423 = vmatpush.bf16.msra.mxu0 %v1384
    %1424 = vmatpush.bf16.msra.mxu0 %v1381
    %1425 = vmatpush.bf16.msra.mxu0 %v1378
    %1426 = vmatpush.bf16.msra.mxu0 %v1375
    %1427 = vmatpush.bf16.msra.mxu0 %v1372
    %1428 = vmatmul.bf16.gmra.mxu0 0
    %v1429 = vpop.f32.mrf.mxu0
    %v1430 = vadd.f32 0.0, %v1429
    %v1431 = vpop.f32.mrf.mxu0
    %1432 = vdwg.mxu0
    %1433 = vmatpush.bf16.msra.mxu0 %v1394
    %1434 = vmatpush.bf16.msra.mxu0 %v1391
    %1435 = vmatpush.bf16.msra.mxu0 %v1388
    %1436 = vmatpush.bf16.msra.mxu0 %v1385
    %1437 = vmatpush.bf16.msra.mxu0 %v1382
    %1438 = vmatpush.bf16.msra.mxu0 %v1379
    %1439 = vmatpush.bf16.msra.mxu0 %v1376
    %1440 = vmatpush.bf16.msra.mxu0 %v1373
    %1441 = vmatmul.bf16.gmra.mxu0 0
    %v1442 = vpop.f32.mrf.mxu0
    %v1443 = vadd.f32 0.0, %v1442
    %v1444 = vpop.f32.mrf.mxu0
    %1445 = vdwg.mxu0
    %1446 = vmatpush.bf16.msra.mxu0 %v1395
    %1447 = vmatpush.bf16.msra.mxu0 %v1392
    %1448 = vmatpush.bf16.msra.mxu0 %v1389
    %1449 = vmatpush.bf16.msra.mxu0 %v1386
    %1450 = vmatpush.bf16.msra.mxu0 %v1383
    %1451 = vmatpush.bf16.msra.mxu0 %v1380
    %1452 = vmatpush.bf16.msra.mxu0 %v1377
    %1453 = vmatpush.bf16.msra.mxu0 %v1374
    %1454 = vmatmul.bf16.gmra.mxu0 0
    %v1455 = vpop.f32.mrf.mxu0
    %v1456 = vadd.f32 0.0, %v1455
    %v1457 = vpop.f32.mrf.mxu0
    %1458 = vdwg.mxu0
    %v1459 = vadd.f32 %v1263, %v1430
    %v1460 = vxor.u32 %v1459, 2147483648
    %v1461 = vmul.f32 %v1460, 1.442695
    %v1462 = vpow.pop %v1461
    %v1463 = vadd.f32 %v1462, 1.0
    %v1464 = vrcp.pop %v1463
    %v1465 = vmul.f32 %v1463, %v1464
    %v1466 = vsub.f32 1.0, %v1465
    %v1467 = vmul.f32 %v1464, %v1466
    %v1468 = vadd.f32 %v1464, %v1467
    %vm1469 = vweird.f32 %v1463
    %vm1470 = vweird.f32 %v1464
    %vm1471 = vmor %vm1469, %vm1470
    %v1472 = vsel %vm1471, %v1464, %v1468
    %v1473 = vand.u32 2147483647, %v1463
    %vm1474 = vcmp.eq.f32.partialorder %v1473, 8.507059e+37
    %v1475 = vand.u32 %v1463, 2147483648
    %v1476 = vor.u32 1.1754944e-38, %v1475
    %v1477 = vsel %vm1474, %v1476, %v1472
    %v1478 = vmul.f32 1.0, %v1477
    %v1479 = vadd.f32 %v1276, %v1443
    %v1480 = vxor.u32 %v1479, 2147483648
    %v1481 = vmul.f32 %v1480, 1.442695
    %v1482 = vpow.pop %v1481
    %v1483 = vadd.f32 %v1482, 1.0
    %v1484 = vrcp.pop %v1483
    %v1485 = vmul.f32 %v1483, %v1484
    %v1486 = vsub.f32 1.0, %v1485
    %v1487 = vmul.f32 %v1484, %v1486
    %v1488 = vadd.f32 %v1484, %v1487
    %vm1489 = vweird.f32 %v1483
    %vm1490 = vweird.f32 %v1484
    %vm1491 = vmor %vm1489, %vm1490
    %v1492 = vsel %vm1491, %v1484, %v1488
    %v1493 = vand.u32 2147483647, %v1483
    %vm1494 = vcmp.eq.f32.partialorder %v1493, 8.507059e+37
    %v1495 = vand.u32 %v1483, 2147483648
    %v1496 = vor.u32 1.1754944e-38, %v1495
    %v1497 = vsel %vm1494, %v1496, %v1492
    %v1498 = vmul.f32 1.0, %v1497
    %v1499 = vadd.f32 %v1456, %v245
    %v1500 = vmul.f32 %v1478, %v1499
    %v1501 = vadd.f32 %v1289, %v1500
    %v1502 = vtanh.pop %v1501
    %v1503 = vsub.f32 1.0, %v1498
    %v1504 = vmul.f32 %v1503, %v1502
    %v1505 = vmul.f32 %v1498, 0.0
    %v1506 = vadd.f32 %v1504, %v1505
    %v1539 = vunpack.c.l.b16 %v171
    %v1540 = vunpack.c.h.b16 %v171
    %v1541 = vunpack.c.l.b16 %v172
    %v1542 = vunpack.c.l.b16 %v173
    %v1543 = vunpack.c.h.b16 %v173
    %v1544 = vunpack.c.l.b16 %v174
    %v1545 = vunpack.c.l.b16 %v175
    %v1546 = vunpack.c.h.b16 %v175
    %v1547 = vunpack.c.l.b16 %v176
    %v1548 = vunpack.c.l.b16 %v177
    %v1549 = vunpack.c.h.b16 %v177
    %v1550 = vunpack.c.l.b16 %v178
    %v1551 = vunpack.c.l.b16 %v179
    %v1552 = vunpack.c.h.b16 %v179
    %v1553 = vunpack.c.l.b16 %v180
    %v1554 = vunpack.c.l.b16 %v181
    %v1555 = vunpack.c.h.b16 %v181
    %v1556 = vunpack.c.l.b16 %v182
    %v1557 = vunpack.c.l.b16 %v183
    %v1558 = vunpack.c.h.b16 %v183
    %v1559 = vunpack.c.l.b16 %v184
    %v1560 = vunpack.c.l.b16 %v185
    %v1561 = vunpack.c.h.b16 %v185
    %v1562 = vunpack.c.l.b16 %v186
    %v1563 = vunpack.c.l.b16 %v187
    %v1564 = vunpack.c.h.b16 %v187
    %v1565 = vunpack.c.l.b16 %v188
    %v1566 = vunpack.c.l.b16 %v189
    %v1567 = vunpack.c.h.b16 %v189
    %v1568 = vunpack.c.l.b16 %v190
    %v1569 = vunpack.c.l.b16 %v191
    %v1570 = vunpack.c.h.b16 %v191
    %v1571 = vunpack.c.l.b16 %v192
    %v1572 = vunpack.c.l.b16 %v193
    %v1573 = vunpack.c.h.b16 %v193
    %v1574 = vunpack.c.l.b16 %v194
    %v1575 = vunpack.c.l.b16 %v195
    %v1576 = vunpack.c.h.b16 %v195
    %v1577 = vunpack.c.l.b16 %v196
    %v1578 = vunpack.c.l.b16 %v197
    %v1579 = vunpack.c.h.b16 %v197
    %v1580 = vunpack.c.l.b16 %v198
    %v1581 = vunpack.c.l.b16 %v199
    %v1582 = vunpack.c.h.b16 %v199
    %v1583 = vunpack.c.l.b16 %v200
    %v1584 = vunpack.c.l.b16 %v201
    %v1585 = vunpack.c.h.b16 %v201
    %v1586 = vunpack.c.l.b16 %v202
    %v1587 = vpack.c.b16 %v1542, %v1539
    %v1588 = vpack.c.b16 %v1543, %v1540
    %v1589 = vpack.c.b16 %v1544, %v1541
    %v1590 = vpack.c.b16 %v1548, %v1545
    %v1591 = vpack.c.b16 %v1549, %v1546
    %v1592 = vpack.c.b16 %v1550, %v1547
    %v1593 = vpack.c.b16 %v1554, %v1551
    %v1594 = vpack.c.b16 %v1555, %v1552
    %v1595 = vpack.c.b16 %v1556, %v1553
    %v1596 = vpack.c.b16 %v1560, %v1557
    %v1597 = vpack.c.b16 %v1561, %v1558
    %v1598 = vpack.c.b16 %v1562, %v1559
    %v1599 = vpack.c.b16 %v1566, %v1563
    %v1600 = vpack.c.b16 %v1567, %v1564
    %v1601 = vpack.c.b16 %v1568, %v1565
    %v1602 = vpack.c.b16 %v1572, %v1569
    %v1603 = vpack.c.b16 %v1573, %v1570
    %v1604 = vpack.c.b16 %v1574, %v1571
    %v1605 = vpack.c.b16 %v1578, %v1575
    %v1606 = vpack.c.b16 %v1579, %v1576
    %v1607 = vpack.c.b16 %v1580, %v1577
    %v1608 = vpack.c.b16 %v1584, %v1581
    %v1609 = vpack.c.b16 %v1585, %v1582
    %v1610 = vpack.c.b16 %v1586, %v1583
    %1635 = vmatpush.bf16.msra.mxu0 %v1608
    %1636 = vmatpush.bf16.msra.mxu0 %v1605
    %1637 = vmatpush.bf16.msra.mxu0 %v1602
    %1638 = vmatpush.bf16.msra.mxu0 %v1599
    %1639 = vmatpush.bf16.msra.mxu0 %v1596
    %1640 = vmatpush.bf16.msra.mxu0 %v1593
    %1641 = vmatpush.bf16.msra.mxu0 %v1590
    %1642 = vmatpush.bf16.msra.mxu0 %v1587
    %1643 = vmatmul.bf16.gmra.mxu0 %v1037
    %v1644 = vpop.f32.mrf.mxu0
    %v1645 = vadd.f32 %v241, %v1644
    %v1646 = vpop.f32.mrf.mxu0
    %1647 = vdwg.mxu0
    %1648 = vmatpush.bf16.msra.mxu0 %v1609
    %1649 = vmatpush.bf16.msra.mxu0 %v1606
    %1650 = vmatpush.bf16.msra.mxu0 %v1603
    %1651 = vmatpush.bf16.msra.mxu0 %v1600
    %1652 = vmatpush.bf16.msra.mxu0 %v1597
    %1653 = vmatpush.bf16.msra.mxu0 %v1594
    %1654 = vmatpush.bf16.msra.mxu0 %v1591
    %1655 = vmatpush.bf16.msra.mxu0 %v1588
    %1656 = vmatmul.bf16.gmra.mxu0 %v1037
    %v1657 = vpop.f32.mrf.mxu0
    %v1658 = vadd.f32 %v242, %v1657
    %v1659 = vpop.f32.mrf.mxu0
    %1660 = vdwg.mxu0
    %1661 = vmatpush.bf16.msra.mxu0 %v1610
    %1662 = vmatpush.bf16.msra.mxu0 %v1607
    %1663 = vmatpush.bf16.msra.mxu0 %v1604
    %1664 = vmatpush.bf16.msra.mxu0 %v1601
    %1665 = vmatpush.bf16.msra.mxu0 %v1598
    %1666 = vmatpush.bf16.msra.mxu0 %v1595
    %1667 = vmatpush.bf16.msra.mxu0 %v1592
    %1668 = vmatpush.bf16.msra.mxu0 %v1589
    %1669 = vmatmul.bf16.gmra.mxu0 %v1037
    %v1670 = vpop.f32.mrf.mxu0
    %v1671 = vadd.f32 %v243, %v1670
    %v1672 = vpop.f32.mrf.mxu0
    %1673 = vdwg.mxu0
    %v1706 = vunpack.c.l.b16 %v203
    %v1707 = vunpack.c.h.b16 %v203
    %v1708 = vunpack.c.l.b16 %v204
    %v1709 = vunpack.c.l.b16 %v205
    %v1710 = vunpack.c.h.b16 %v205
    %v1711 = vunpack.c.l.b16 %v206
    %v1712 = vunpack.c.l.b16 %v207
    %v1713 = vunpack.c.h.b16 %v207
    %v1714 = vunpack.c.l.b16 %v208
    %v1715 = vunpack.c.l.b16 %v209
    %v1716 = vunpack.c.h.b16 %v209
    %v1717 = vunpack.c.l.b16 %v210
    %v1718 = vunpack.c.l.b16 %v211
    %v1719 = vunpack.c.h.b16 %v211
    %v1720 = vunpack.c.l.b16 %v212
    %v1721 = vunpack.c.l.b16 %v213
    %v1722 = vunpack.c.h.b16 %v213
    %v1723 = vunpack.c.l.b16 %v214
    %v1724 = vunpack.c.l.b16 %v215
    %v1725 = vunpack.c.h.b16 %v215
    %v1726 = vunpack.c.l.b16 %v216
    %v1727 = vunpack.c.l.b16 %v217
    %v1728 = vunpack.c.h.b16 %v217
    %v1729 = vunpack.c.l.b16 %v218
    %v1730 = vunpack.c.l.b16 %v219
    %v1731 = vunpack.c.h.b16 %v219
    %v1732 = vunpack.c.l.b16 %v220
    %v1733 = vunpack.c.l.b16 %v221
    %v1734 = vunpack.c.h.b16 %v221
    %v1735 = vunpack.c.l.b16 %v222
    %v1736 = vunpack.c.l.b16 %v223
    %v1737 = vunpack.c.h.b16 %v223
    %v1738 = vunpack.c.l.b16 %v224
    %v1739 = vunpack.c.l.b16 %v225
    %v1740 = vunpack.c.h.b16 %v225
    %v1741 = vunpack.c.l.b16 %v226
    %v1742 = vunpack.c.l.b16 %v227
    %v1743 = vunpack.c.h.b16 %v227
    %v1744 = vunpack.c.l.b16 %v228
    %v1745 = vunpack.c.l.b16 %v229
    %v1746 = vunpack.c.h.b16 %v229
    %v1747 = vunpack.c.l.b16 %v230
    %v1748 = vunpack.c.l.b16 %v231
    %v1749 = vunpack.c.h.b16 %v231
    %v1750 = vunpack.c.l.b16 %v232
    %v1751 = vunpack.c.l.b16 %v233
    %v1752 = vunpack.c.h.b16 %v233
    %v1753 = vunpack.c.l.b16 %v234
    %v1754 = vpack.c.b16 %v1709, %v1706
    %v1755 = vpack.c.b16 %v1710, %v1707
    %v1756 = vpack.c.b16 %v1711, %v1708
    %v1757 = vpack.c.b16 %v1715, %v1712
    %v1758 = vpack.c.b16 %v1716, %v1713
    %v1759 = vpack.c.b16 %v1717, %v1714
    %v1760 = vpack.c.b16 %v1721, %v1718
    %v1761 = vpack.c.b16 %v1722, %v1719
    %v1762 = vpack.c.b16 %v1723, %v1720
    %v1763 = vpack.c.b16 %v1727, %v1724
    %v1764 = vpack.c.b16 %v1728, %v1725
    %v1765 = vpack.c.b16 %v1729, %v1726
    %v1766 = vpack.c.b16 %v1733, %v1730
    %v1767 = vpack.c.b16 %v1734, %v1731
    %v1768 = vpack.c.b16 %v1735, %v1732
    %v1769 = vpack.c.b16 %v1739, %v1736
    %v1770 = vpack.c.b16 %v1740, %v1737
    %v1771 = vpack.c.b16 %v1741, %v1738
    %v1772 = vpack.c.b16 %v1745, %v1742
    %v1773 = vpack.c.b16 %v1746, %v1743
    %v1774 = vpack.c.b16 %v1747, %v1744
    %v1775 = vpack.c.b16 %v1751, %v1748
    %v1776 = vpack.c.b16 %v1752, %v1749
    %v1777 = vpack.c.b16 %v1753, %v1750
    %1802 = vmatpush.bf16.msra.mxu0 %v1775
    %1803 = vmatpush.bf16.msra.mxu0 %v1772
    %1804 = vmatpush.bf16.msra.mxu0 %v1769
    %1805 = vmatpush.bf16.msra.mxu0 %v1766
    %1806 = vmatpush.bf16.msra.mxu0 %v1763
    %1807 = vmatpush.bf16.msra.mxu0 %v1760
    %1808 = vmatpush.bf16.msra.mxu0 %v1757
    %1809 = vmatpush.bf16.msra.mxu0 %v1754
    %1810 = vmatmul.bf16.gmra.mxu0 0
    %v1811 = vpop.f32.mrf.mxu0
    %v1812 = vadd.f32 0.0, %v1811
    %v1813 = vpop.f32.mrf.mxu0
    %1814 = vdwg.mxu0
    %1815 = vmatpush.bf16.msra.mxu0 %v1776
    %1816 = vmatpush.bf16.msra.mxu0 %v1773
    %1817 = vmatpush.bf16.msra.mxu0 %v1770
    %1818 = vmatpush.bf16.msra.mxu0 %v1767
    %1819 = vmatpush.bf16.msra.mxu0 %v1764
    %1820 = vmatpush.bf16.msra.mxu0 %v1761
    %1821 = vmatpush.bf16.msra.mxu0 %v1758
    %1822 = vmatpush.bf16.msra.mxu0 %v1755
    %1823 = vmatmul.bf16.gmra.mxu0 0
    %v1824 = vpop.f32.mrf.mxu0
    %v1825 = vadd.f32 0.0, %v1824
    %v1826 = vpop.f32.mrf.mxu0
    %1827 = vdwg.mxu0
    %1828 = vmatpush.bf16.msra.mxu0 %v1777
    %1829 = vmatpush.bf16.msra.mxu0 %v1774
    %1830 = vmatpush.bf16.msra.mxu0 %v1771
    %1831 = vmatpush.bf16.msra.mxu0 %v1768
    %1832 = vmatpush.bf16.msra.mxu0 %v1765
    %1833 = vmatpush.bf16.msra.mxu0 %v1762
    %1834 = vmatpush.bf16.msra.mxu0 %v1759
    %1835 = vmatpush.bf16.msra.mxu0 %v1756
    %1836 = vmatmul.bf16.gmra.mxu0 0
    %v1837 = vpop.f32.mrf.mxu0
    %v1838 = vadd.f32 0.0, %v1837
    %v1839 = vpop.f32.mrf.mxu0
    %1840 = vdwg.mxu0
    %v1841 = vadd.f32 %v1645, %v1812
    %v1842 = vxor.u32 %v1841, 2147483648
    %v1843 = vmul.f32 %v1842, 1.442695
    %v1844 = vpow.pop %v1843
    %v1845 = vadd.f32 %v1844, 1.0
    %v1846 = vrcp.pop %v1845
    %v1847 = vmul.f32 %v1845, %v1846
    %v1848 = vsub.f32 1.0, %v1847
    %v1849 = vmul.f32 %v1846, %v1848
    %v1850 = vadd.f32 %v1846, %v1849
    %vm1851 = vweird.f32 %v1845
    %vm1852 = vweird.f32 %v1846
    %vm1853 = vmor %vm1851, %vm1852
    %v1854 = vsel %vm1853, %v1846, %v1850
    %v1855 = vand.u32 2147483647, %v1845
    %vm1856 = vcmp.eq.f32.partialorder %v1855, 8.507059e+37
    %v1857 = vand.u32 %v1845, 2147483648
    %v1858 = vor.u32 1.1754944e-38, %v1857
    %v1859 = vsel %vm1856, %v1858, %v1854
    %v1860 = vmul.f32 1.0, %v1859
    %v1861 = vadd.f32 %v1658, %v1825
    %v1862 = vxor.u32 %v1861, 2147483648
    %v1863 = vmul.f32 %v1862, 1.442695
    %v1864 = vpow.pop %v1863
    %v1865 = vadd.f32 %v1864, 1.0
    %v1866 = vrcp.pop %v1865
    %v1867 = vmul.f32 %v1865, %v1866
    %v1868 = vsub.f32 1.0, %v1867
    %v1869 = vmul.f32 %v1866, %v1868
    %v1870 = vadd.f32 %v1866, %v1869
    %vm1871 = vweird.f32 %v1865
    %vm1872 = vweird.f32 %v1866
    %vm1873 = vmor %vm1871, %vm1872
    %v1874 = vsel %vm1873, %v1866, %v1870
    %v1875 = vand.u32 2147483647, %v1865
    %vm1876 = vcmp.eq.f32.partialorder %v1875, 8.507059e+37
    %v1877 = vand.u32 %v1865, 2147483648
    %v1878 = vor.u32 1.1754944e-38, %v1877
    %v1879 = vsel %vm1876, %v1878, %v1874
    %v1880 = vmul.f32 1.0, %v1879
    %v1881 = vadd.f32 %v1838, %v247
    %v1882 = vmul.f32 %v1860, %v1881
    %v1883 = vadd.f32 %v1671, %v1882
    %v1884 = vtanh.pop %v1883
    %v1885 = vsub.f32 1.0, %v1880
    %v1886 = vmul.f32 %v1885, %v1884
    %v1887 = vmul.f32 %v1880, 0.0
    %v1888 = vadd.f32 %v1886, %v1887
    %v1889 = vpack.c.bf16 %v1036, %v1036
    %1890 = vmatpush.bf16.msra.mxu0 %v620
    %1891 = vmatpush.bf16.msra.mxu0 %v617
    %1892 = vmatpush.bf16.msra.mxu0 %v614
    %1893 = vmatpush.bf16.msra.mxu0 %v611
    %1894 = vmatpush.bf16.msra.mxu0 %v608
    %1895 = vmatpush.bf16.msra.mxu0 %v605
    %1896 = vmatpush.bf16.msra.mxu0 %v602
    %1897 = vmatpush.bf16.msra.mxu0 %v599
    %1898 = vmatmul.bf16.gmra.mxu0 %v1889
    %v1899 = vpop.f32.mrf.mxu0
    %v1900 = vadd.f32 0.0, %v1899
    %v1901 = vpop.f32.mrf.mxu0
    %1902 = vdwg.mxu0
    %1903 = vmatpush.bf16.msra.mxu0 %v621
    %1904 = vmatpush.bf16.msra.mxu0 %v618
    %1905 = vmatpush.bf16.msra.mxu0 %v615
    %1906 = vmatpush.bf16.msra.mxu0 %v612
    %1907 = vmatpush.bf16.msra.mxu0 %v609
    %1908 = vmatpush.bf16.msra.mxu0 %v606
    %1909 = vmatpush.bf16.msra.mxu0 %v603
    %1910 = vmatpush.bf16.msra.mxu0 %v600
    %1911 = vmatmul.bf16.gmra.mxu0 %v1889
    %v1912 = vpop.f32.mrf.mxu0
    %v1913 = vadd.f32 0.0, %v1912
    %v1914 = vpop.f32.mrf.mxu0
    %1915 = vdwg.mxu0
    %1916 = vmatpush.bf16.msra.mxu0 %v622
    %1917 = vmatpush.bf16.msra.mxu0 %v619
    %1918 = vmatpush.bf16.msra.mxu0 %v616
    %1919 = vmatpush.bf16.msra.mxu0 %v613
    %1920 = vmatpush.bf16.msra.mxu0 %v610
    %1921 = vmatpush.bf16.msra.mxu0 %v607
    %1922 = vmatpush.bf16.msra.mxu0 %v604
    %1923 = vmatpush.bf16.msra.mxu0 %v601
    %1924 = vmatmul.bf16.gmra.mxu0 %v1889
    %v1925 = vpop.f32.mrf.mxu0
    %v1926 = vadd.f32 0.0, %v1925
    %v1927 = vpop.f32.mrf.mxu0
    %1928 = vdwg.mxu0
    %v1929 = vadd.f32 %v325, %v1900
    %v1930 = vxor.u32 %v1929, 2147483648
    %v1931 = vmul.f32 %v1930, 1.442695
    %v1932 = vpow.pop %v1931
    %v1933 = vadd.f32 %v1932, 1.0
    %v1934 = vrcp.pop %v1933
    %v1935 = vmul.f32 %v1933, %v1934
    %v1936 = vsub.f32 1.0, %v1935
    %v1937 = vmul.f32 %v1934, %v1936
    %v1938 = vadd.f32 %v1934, %v1937
    %vm1939 = vweird.f32 %v1933
    %vm1940 = vweird.f32 %v1934
    %vm1941 = vmor %vm1939, %vm1940
    %v1942 = vsel %vm1941, %v1934, %v1938
    %v1943 = vand.u32 2147483647, %v1933
    %vm1944 = vcmp.eq.f32.partialorder %v1943, 8.507059e+37
    %v1945 = vand.u32 %v1933, 2147483648
    %v1946 = vor.u32 1.1754944e-38, %v1945
    %v1947 = vsel %vm1944, %v1946, %v1942
    %v1948 = vmul.f32 1.0, %v1947
    %v1949 = vadd.f32 %v354, %v1913
    %v1950 = vxor.u32 %v1949, 2147483648
    %v1951 = vmul.f32 %v1950, 1.442695
    %v1952 = vpow.pop %v1951
    %v1953 = vadd.f32 %v1952, 1.0
    %v1954 = vrcp.pop %v1953
    %v1955 = vmul.f32 %v1953, %v1954
    %v1956 = vsub.f32 1.0, %v1955
    %v1957 = vmul.f32 %v1954, %v1956
    %v1958 = vadd.f32 %v1954, %v1957
    %vm1959 = vweird.f32 %v1953
    %vm1960 = vweird.f32 %v1954
    %vm1961 = vmor %vm1959, %vm1960
    %v1962 = vsel %vm1961, %v1954, %v1958
    %v1963 = vand.u32 2147483647, %v1953
    %vm1964 = vcmp.eq.f32.partialorder %v1963, 8.507059e+37
    %v1965 = vand.u32 %v1953, 2147483648
    %v1966 = vor.u32 1.1754944e-38, %v1965
    %v1967 = vsel %vm1964, %v1966, %v1962
    %v1968 = vmul.f32 1.0, %v1967
    %v1969 = vadd.f32 %v1926, %v244
    %v1970 = vmul.f32 %v1948, %v1969
    %v1971 = vadd.f32 %v383, %v1970
    %v1972 = vtanh.pop %v1971
    %v1973 = vsub.f32 1.0, %v1968
    %v1974 = vmul.f32 %v1973, %v1972
    %v1975 = vmul.f32 %v1968, %v1036
    %v1976 = vadd.f32 %v1974, %v1975
    %v1977 = vpack.c.bf16 %v1124, %v1124
    %1978 = vmatpush.bf16.msra.mxu0 %v835
    %1979 = vmatpush.bf16.msra.mxu0 %v832
    %1980 = vmatpush.bf16.msra.mxu0 %v829
    %1981 = vmatpush.bf16.msra.mxu0 %v826
    %1982 = vmatpush.bf16.msra.mxu0 %v823
    %1983 = vmatpush.bf16.msra.mxu0 %v820
    %1984 = vmatpush.bf16.msra.mxu0 %v817
    %1985 = vmatpush.bf16.msra.mxu0 %v814
    %1986 = vmatmul.bf16.gmra.mxu0 %v1977
    %v1987 = vpop.f32.mrf.mxu0
    %v1988 = vadd.f32 0.0, %v1987
    %v1989 = vpop.f32.mrf.mxu0
    %1990 = vdwg.mxu0
    %1991 = vmatpush.bf16.msra.mxu0 %v836
    %1992 = vmatpush.bf16.msra.mxu0 %v833
    %1993 = vmatpush.bf16.msra.mxu0 %v830
    %1994 = vmatpush.bf16.msra.mxu0 %v827
    %1995 = vmatpush.bf16.msra.mxu0 %v824
    %1996 = vmatpush.bf16.msra.mxu0 %v821
    %1997 = vmatpush.bf16.msra.mxu0 %v818
    %1998 = vmatpush.bf16.msra.mxu0 %v815
    %1999 = vmatmul.bf16.gmra.mxu0 %v1977
    %v2000 = vpop.f32.mrf.mxu0
    %v2001 = vadd.f32 0.0, %v2000
    %v2002 = vpop.f32.mrf.mxu0
    %2003 = vdwg.mxu0
    %2004 = vmatpush.bf16.msra.mxu0 %v837
    %2005 = vmatpush.bf16.msra.mxu0 %v834
    %2006 = vmatpush.bf16.msra.mxu0 %v831
    %2007 = vmatpush.bf16.msra.mxu0 %v828
    %2008 = vmatpush.bf16.msra.mxu0 %v825
    %2009 = vmatpush.bf16.msra.mxu0 %v822
    %2010 = vmatpush.bf16.msra.mxu0 %v819
    %2011 = vmatpush.bf16.msra.mxu0 %v816
    %2012 = vmatmul.bf16.gmra.mxu0 %v1977
    %v2013 = vpop.f32.mrf.mxu0
    %v2014 = vadd.f32 0.0, %v2013
    %v2015 = vpop.f32.mrf.mxu0
    %2016 = vdwg.mxu0
    %v2017 = vadd.f32 %v462, %v1988
    %v2018 = vxor.u32 %v2017, 2147483648
    %v2019 = vmul.f32 %v2018, 1.442695
    %v2020 = vpow.pop %v2019
    %v2021 = vadd.f32 %v2020, 1.0
    %v2022 = vrcp.pop %v2021
    %v2023 = vmul.f32 %v2021, %v2022
    %v2024 = vsub.f32 1.0, %v2023
    %v2025 = vmul.f32 %v2022, %v2024
    %v2026 = vadd.f32 %v2022, %v2025
    %vm2027 = vweird.f32 %v2021
    %vm2028 = vweird.f32 %v2022
    %vm2029 = vmor %vm2027, %vm2028
    %v2030 = vsel %vm2029, %v2022, %v2026
    %v2031 = vand.u32 2147483647, %v2021
    %vm2032 = vcmp.eq.f32.partialorder %v2031, 8.507059e+37
    %v2033 = vand.u32 %v2021, 2147483648
    %v2034 = vor.u32 1.1754944e-38, %v2033
    %v2035 = vsel %vm2032, %v2034, %v2030
    %v2036 = vmul.f32 1.0, %v2035
    %v2037 = vadd.f32 %v486, %v2001
    %v2038 = vxor.u32 %v2037, 2147483648
    %v2039 = vmul.f32 %v2038, 1.442695
    %v2040 = vpow.pop %v2039
    %v2041 = vadd.f32 %v2040, 1.0
    %v2042 = vrcp.pop %v2041
    %v2043 = vmul.f32 %v2041, %v2042
    %v2044 = vsub.f32 1.0, %v2043
    %v2045 = vmul.f32 %v2042, %v2044
    %v2046 = vadd.f32 %v2042, %v2045
    %vm2047 = vweird.f32 %v2041
    %vm2048 = vweird.f32 %v2042
    %vm2049 = vmor %vm2047, %vm2048
    %v2050 = vsel %vm2049, %v2042, %v2046
    %v2051 = vand.u32 2147483647, %v2041
    %vm2052 = vcmp.eq.f32.partialorder %v2051, 8.507059e+37
    %v2053 = vand.u32 %v2041, 2147483648
    %v2054 = vor.u32 1.1754944e-38, %v2053
    %v2055 = vsel %vm2052, %v2054, %v2050
    %v2056 = vmul.f32 1.0, %v2055
    %v2057 = vadd.f32 %v2014, %v246
    %v2058 = vmul.f32 %v2036, %v2057
    %v2059 = vadd.f32 %v510, %v2058
    %v2060 = vtanh.pop %v2059
    %v2061 = vsub.f32 1.0, %v2056
    %v2062 = vmul.f32 %v2061, %v2060
    %v2063 = vmul.f32 %v2056, %v1124
    %v2064 = vadd.f32 %v2062, %v2063
    %2065 = vmatpush.bf16.msra.mxu0 %v1226
    %2066 = vmatpush.bf16.msra.mxu0 %v1223
    %2067 = vmatpush.bf16.msra.mxu0 %v1220
    %2068 = vmatpush.bf16.msra.mxu0 %v1217
    %2069 = vmatpush.bf16.msra.mxu0 %v1214
    %2070 = vmatpush.bf16.msra.mxu0 %v1211
    %2071 = vmatpush.bf16.msra.mxu0 %v1208
    %2072 = vmatpush.bf16.msra.mxu0 %v1205
    %2073 = vmatmul.bf16.gmra.mxu0 %v1889
    %v2074 = vpop.f32.mrf.mxu0
    %v2075 = vadd.f32 %v238, %v2074
    %v2076 = vpop.f32.mrf.mxu0
    %2077 = vdwg.mxu0
    %2078 = vmatpush.bf16.msra.mxu0 %v1227
    %2079 = vmatpush.bf16.msra.mxu0 %v1224
    %2080 = vmatpush.bf16.msra.mxu0 %v1221
    %2081 = vmatpush.bf16.msra.mxu0 %v1218
    %2082 = vmatpush.bf16.msra.mxu0 %v1215
    %2083 = vmatpush.bf16.msra.mxu0 %v1212
    %2084 = vmatpush.bf16.msra.mxu0 %v1209
    %2085 = vmatpush.bf16.msra.mxu0 %v1206
    %2086 = vmatmul.bf16.gmra.mxu0 %v1889
    %v2087 = vpop.f32.mrf.mxu0
    %v2088 = vadd.f32 %v239, %v2087
    %v2089 = vpop.f32.mrf.mxu0
    %2090 = vdwg.mxu0
    %2091 = vmatpush.bf16.msra.mxu0 %v1228
    %2092 = vmatpush.bf16.msra.mxu0 %v1225
    %2093 = vmatpush.bf16.msra.mxu0 %v1222
    %2094 = vmatpush.bf16.msra.mxu0 %v1219
    %2095 = vmatpush.bf16.msra.mxu0 %v1216
    %2096 = vmatpush.bf16.msra.mxu0 %v1213
    %2097 = vmatpush.bf16.msra.mxu0 %v1210
    %2098 = vmatpush.bf16.msra.mxu0 %v1207
    %2099 = vmatmul.bf16.gmra.mxu0 %v1889
    %v2100 = vpop.f32.mrf.mxu0
    %v2101 = vadd.f32 %v240, %v2100
    %v2102 = vpop.f32.mrf.mxu0
    %2103 = vdwg.mxu0
    %v2104 = vpack.c.bf16 %v1506, %v1506
    %2105 = vmatpush.bf16.msra.mxu0 %v1393
    %2106 = vmatpush.bf16.msra.mxu0 %v1390
    %2107 = vmatpush.bf16.msra.mxu0 %v1387
    %2108 = vmatpush.bf16.msra.mxu0 %v1384
    %2109 = vmatpush.bf16.msra.mxu0 %v1381
    %2110 = vmatpush.bf16.msra.mxu0 %v1378
    %2111 = vmatpush.bf16.msra.mxu0 %v1375
    %2112 = vmatpush.bf16.msra.mxu0 %v1372
    %2113 = vmatmul.bf16.gmra.mxu0 %v2104
    %v2114 = vpop.f32.mrf.mxu0
    %v2115 = vadd.f32 0.0, %v2114
    %v2116 = vpop.f32.mrf.mxu0
    %2117 = vdwg.mxu0
    %2118 = vmatpush.bf16.msra.mxu0 %v1394
    %2119 = vmatpush.bf16.msra.mxu0 %v1391
    %2120 = vmatpush.bf16.msra.mxu0 %v1388
    %2121 = vmatpush.bf16.msra.mxu0 %v1385
    %2122 = vmatpush.bf16.msra.mxu0 %v1382
    %2123 = vmatpush.bf16.msra.mxu0 %v1379
    %2124 = vmatpush.bf16.msra.mxu0 %v1376
    %2125 = vmatpush.bf16.msra.mxu0 %v1373
    %2126 = vmatmul.bf16.gmra.mxu0 %v2104
    %v2127 = vpop.f32.mrf.mxu0
    %v2128 = vadd.f32 0.0, %v2127
    %v2129 = vpop.f32.mrf.mxu0
    %2130 = vdwg.mxu0
    %2131 = vmatpush.bf16.msra.mxu0 %v1395
    %2132 = vmatpush.bf16.msra.mxu0 %v1392
    %2133 = vmatpush.bf16.msra.mxu0 %v1389
    %2134 = vmatpush.bf16.msra.mxu0 %v1386
    %2135 = vmatpush.bf16.msra.mxu0 %v1383
    %2136 = vmatpush.bf16.msra.mxu0 %v1380
    %2137 = vmatpush.bf16.msra.mxu0 %v1377
    %2138 = vmatpush.bf16.msra.mxu0 %v1374
    %2139 = vmatmul.bf16.gmra.mxu0 %v2104
    %v2140 = vpop.f32.mrf.mxu0
    %v2141 = vadd.f32 0.0, %v2140
    %v2142 = vpop.f32.mrf.mxu0
    %2143 = vdwg.mxu0
    %v2144 = vadd.f32 %v2075, %v2115
    %v2145 = vxor.u32 %v2144, 2147483648
    %v2146 = vmul.f32 %v2145, 1.442695
    %v2147 = vpow.pop %v2146
    %v2148 = vadd.f32 %v2147, 1.0
    %v2149 = vrcp.pop %v2148
    %v2150 = vmul.f32 %v2148, %v2149
    %v2151 = vsub.f32 1.0, %v2150
    %v2152 = vmul.f32 %v2149, %v2151
    %v2153 = vadd.f32 %v2149, %v2152
    %vm2154 = vweird.f32 %v2148
    %vm2155 = vweird.f32 %v2149
    %vm2156 = vmor %vm2154, %vm2155
    %v2157 = vsel %vm2156, %v2149, %v2153
    %v2158 = vand.u32 2147483647, %v2148
    %vm2159 = vcmp.eq.f32.partialorder %v2158, 8.507059e+37
    %v2160 = vand.u32 %v2148, 2147483648
    %v2161 = vor.u32 1.1754944e-38, %v2160
    %v2162 = vsel %vm2159, %v2161, %v2157
    %v2163 = vmul.f32 1.0, %v2162
    %v2164 = vadd.f32 %v2088, %v2128
    %v2165 = vxor.u32 %v2164, 2147483648
    %v2166 = vmul.f32 %v2165, 1.442695
    %v2167 = vpow.pop %v2166
    %v2168 = vadd.f32 %v2167, 1.0
    %v2169 = vrcp.pop %v2168
    %v2170 = vmul.f32 %v2168, %v2169
    %v2171 = vsub.f32 1.0, %v2170
    %v2172 = vmul.f32 %v2169, %v2171
    %v2173 = vadd.f32 %v2169, %v2172
    %vm2174 = vweird.f32 %v2168
    %vm2175 = vweird.f32 %v2169
    %vm2176 = vmor %vm2174, %vm2175
    %v2177 = vsel %vm2176, %v2169, %v2173
    %v2178 = vand.u32 2147483647, %v2168
    %vm2179 = vcmp.eq.f32.partialorder %v2178, 8.507059e+37
    %v2180 = vand.u32 %v2168, 2147483648
    %v2181 = vor.u32 1.1754944e-38, %v2180
    %v2182 = vsel %vm2179, %v2181, %v2177
    %v2183 = vmul.f32 1.0, %v2182
    %v2184 = vadd.f32 %v2141, %v245
    %v2185 = vmul.f32 %v2163, %v2184
    %v2186 = vadd.f32 %v2101, %v2185
    %v2187 = vtanh.pop %v2186
    %v2188 = vsub.f32 1.0, %v2183
    %v2189 = vmul.f32 %v2188, %v2187
    %v2190 = vmul.f32 %v2183, %v1506
    %v2191 = vadd.f32 %v2189, %v2190
    %2192 = vmatpush.bf16.msra.mxu0 %v1608
    %2193 = vmatpush.bf16.msra.mxu0 %v1605
    %2194 = vmatpush.bf16.msra.mxu0 %v1602
    %2195 = vmatpush.bf16.msra.mxu0 %v1599
    %2196 = vmatpush.bf16.msra.mxu0 %v1596
    %2197 = vmatpush.bf16.msra.mxu0 %v1593
    %2198 = vmatpush.bf16.msra.mxu0 %v1590
    %2199 = vmatpush.bf16.msra.mxu0 %v1587
    %2200 = vmatmul.bf16.gmra.mxu0 %v1977
    %v2201 = vpop.f32.mrf.mxu0
    %v2202 = vadd.f32 %v241, %v2201
    %v2203 = vpop.f32.mrf.mxu0
    %2204 = vdwg.mxu0
    %2205 = vmatpush.bf16.msra.mxu0 %v1609
    %2206 = vmatpush.bf16.msra.mxu0 %v1606
    %2207 = vmatpush.bf16.msra.mxu0 %v1603
    %2208 = vmatpush.bf16.msra.mxu0 %v1600
    %2209 = vmatpush.bf16.msra.mxu0 %v1597
    %2210 = vmatpush.bf16.msra.mxu0 %v1594
    %2211 = vmatpush.bf16.msra.mxu0 %v1591
    %2212 = vmatpush.bf16.msra.mxu0 %v1588
    %2213 = vmatmul.bf16.gmra.mxu0 %v1977
    %v2214 = vpop.f32.mrf.mxu0
    %v2215 = vadd.f32 %v242, %v2214
    %v2216 = vpop.f32.mrf.mxu0
    %2217 = vdwg.mxu0
    %2218 = vmatpush.bf16.msra.mxu0 %v1610
    %2219 = vmatpush.bf16.msra.mxu0 %v1607
    %2220 = vmatpush.bf16.msra.mxu0 %v1604
    %2221 = vmatpush.bf16.msra.mxu0 %v1601
    %2222 = vmatpush.bf16.msra.mxu0 %v1598
    %2223 = vmatpush.bf16.msra.mxu0 %v1595
    %2224 = vmatpush.bf16.msra.mxu0 %v1592
    %2225 = vmatpush.bf16.msra.mxu0 %v1589
    %2226 = vmatmul.bf16.gmra.mxu0 %v1977
    %v2227 = vpop.f32.mrf.mxu0
    %v2228 = vadd.f32 %v243, %v2227
    %v2229 = vpop.f32.mrf.mxu0
    %2230 = vdwg.mxu0
    %v2231 = vpack.c.bf16 %v1888, %v1888
    %2232 = vmatpush.bf16.msra.mxu0 %v1775
    %2233 = vmatpush.bf16.msra.mxu0 %v1772
    %2234 = vmatpush.bf16.msra.mxu0 %v1769
    %2235 = vmatpush.bf16.msra.mxu0 %v1766
    %2236 = vmatpush.bf16.msra.mxu0 %v1763
    %2237 = vmatpush.bf16.msra.mxu0 %v1760
    %2238 = vmatpush.bf16.msra.mxu0 %v1757
    %2239 = vmatpush.bf16.msra.mxu0 %v1754
    %2240 = vmatmul.bf16.gmra.mxu0 %v2231
    %v2241 = vpop.f32.mrf.mxu0
    %v2242 = vadd.f32 0.0, %v2241
    %v2243 = vpop.f32.mrf.mxu0
    %2244 = vdwg.mxu0
    %2245 = vmatpush.bf16.msra.mxu0 %v1776
    %2246 = vmatpush.bf16.msra.mxu0 %v1773
    %2247 = vmatpush.bf16.msra.mxu0 %v1770
    %2248 = vmatpush.bf16.msra.mxu0 %v1767
    %2249 = vmatpush.bf16.msra.mxu0 %v1764
    %2250 = vmatpush.bf16.msra.mxu0 %v1761
    %2251 = vmatpush.bf16.msra.mxu0 %v1758
    %2252 = vmatpush.bf16.msra.mxu0 %v1755
    %2253 = vmatmul.bf16.gmra.mxu0 %v2231
    %v2254 = vpop.f32.mrf.mxu0
    %v2255 = vadd.f32 0.0, %v2254
    %v2256 = vpop.f32.mrf.mxu0
    %2257 = vdwg.mxu0
    %2258 = vmatpush.bf16.msra.mxu0 %v1777
    %2259 = vmatpush.bf16.msra.mxu0 %v1774
    %2260 = vmatpush.bf16.msra.mxu0 %v1771
    %2261 = vmatpush.bf16.msra.mxu0 %v1768
    %2262 = vmatpush.bf16.msra.mxu0 %v1765
    %2263 = vmatpush.bf16.msra.mxu0 %v1762
    %2264 = vmatpush.bf16.msra.mxu0 %v1759
    %2265 = vmatpush.bf16.msra.mxu0 %v1756
    %2266 = vmatmul.bf16.gmra.mxu0 %v2231
    %v2267 = vpop.f32.mrf.mxu0
    %v2268 = vadd.f32 0.0, %v2267
    %v2269 = vpop.f32.mrf.mxu0
    %2270 = vdwg.mxu0
    %v2271 = vadd.f32 %v2202, %v2242
    %v2272 = vxor.u32 %v2271, 2147483648
    %v2273 = vmul.f32 %v2272, 1.442695
    %v2274 = vpow.pop %v2273
    %v2275 = vadd.f32 %v2274, 1.0
    %v2276 = vrcp.pop %v2275
    %v2277 = vmul.f32 %v2275, %v2276
    %v2278 = vsub.f32 1.0, %v2277
    %v2279 = vmul.f32 %v2276, %v2278
    %v2280 = vadd.f32 %v2276, %v2279
    %vm2281 = vweird.f32 %v2275
    %vm2282 = vweird.f32 %v2276
    %vm2283 = vmor %vm2281, %vm2282
    %v2284 = vsel %vm2283, %v2276, %v2280
    %v2285 = vand.u32 2147483647, %v2275
    %vm2286 = vcmp.eq.f32.partialorder %v2285, 8.507059e+37
    %v2287 = vand.u32 %v2275, 2147483648
    %v2288 = vor.u32 1.1754944e-38, %v2287
    %v2289 = vsel %vm2286, %v2288, %v2284
    %v2290 = vmul.f32 1.0, %v2289
    %v2291 = vadd.f32 %v2215, %v2255
    %v2292 = vxor.u32 %v2291, 2147483648
    %v2293 = vmul.f32 %v2292, 1.442695
    %v2294 = vpow.pop %v2293
    %v2295 = vadd.f32 %v2294, 1.0
    %v2296 = vrcp.pop %v2295
    %v2297 = vmul.f32 %v2295, %v2296
    %v2298 = vsub.f32 1.0, %v2297
    %v2299 = vmul.f32 %v2296, %v2298
    %v2300 = vadd.f32 %v2296, %v2299
    %vm2301 = vweird.f32 %v2295
    %vm2302 = vweird.f32 %v2296
    %vm2303 = vmor %vm2301, %vm2302
    %v2304 = vsel %vm2303, %v2296, %v2300
    %v2305 = vand.u32 2147483647, %v2295
    %vm2306 = vcmp.eq.f32.partialorder %v2305, 8.507059e+37
    %v2307 = vand.u32 %v2295, 2147483648
    %v2308 = vor.u32 1.1754944e-38, %v2307
    %v2309 = vsel %vm2306, %v2308, %v2304
    %v2310 = vmul.f32 1.0, %v2309
    %v2311 = vadd.f32 %v2268, %v247
    %v2312 = vmul.f32 %v2290, %v2311
    %v2313 = vadd.f32 %v2228, %v2312
    %v2314 = vtanh.pop %v2313
    %v2315 = vsub.f32 1.0, %v2310
    %v2316 = vmul.f32 %v2315, %v2314
    %v2317 = vmul.f32 %v2310, %v1888
    %v2318 = vadd.f32 %v2316, %v2317
    %v2319 = vpack.c.bf16 %v1976, %v1976
    %2320 = vmatpush.bf16.msra.mxu0 %v620
    %2321 = vmatpush.bf16.msra.mxu0 %v617
    %2322 = vmatpush.bf16.msra.mxu0 %v614
    %2323 = vmatpush.bf16.msra.mxu0 %v611
    %2324 = vmatpush.bf16.msra.mxu0 %v608
    %2325 = vmatpush.bf16.msra.mxu0 %v605
    %2326 = vmatpush.bf16.msra.mxu0 %v602
    %2327 = vmatpush.bf16.msra.mxu0 %v599
    %2328 = vmatmul.bf16.gmra.mxu0 %v2319
    %v2329 = vpop.f32.mrf.mxu0
    %v2330 = vadd.f32 0.0, %v2329
    %v2331 = vpop.f32.mrf.mxu0
    %2332 = vdwg.mxu0
    %2333 = vmatpush.bf16.msra.mxu0 %v621
    %2334 = vmatpush.bf16.msra.mxu0 %v618
    %2335 = vmatpush.bf16.msra.mxu0 %v615
    %2336 = vmatpush.bf16.msra.mxu0 %v612
    %2337 = vmatpush.bf16.msra.mxu0 %v609
    %2338 = vmatpush.bf16.msra.mxu0 %v606
    %2339 = vmatpush.bf16.msra.mxu0 %v603
    %2340 = vmatpush.bf16.msra.mxu0 %v600
    %2341 = vmatmul.bf16.gmra.mxu0 %v2319
    %v2342 = vpop.f32.mrf.mxu0
    %v2343 = vadd.f32 0.0, %v2342
    %v2344 = vpop.f32.mrf.mxu0
    %2345 = vdwg.mxu0
    %2346 = vmatpush.bf16.msra.mxu0 %v622
    %2347 = vmatpush.bf16.msra.mxu0 %v619
    %2348 = vmatpush.bf16.msra.mxu0 %v616
    %2349 = vmatpush.bf16.msra.mxu0 %v613
    %2350 = vmatpush.bf16.msra.mxu0 %v610
    %2351 = vmatpush.bf16.msra.mxu0 %v607
    %2352 = vmatpush.bf16.msra.mxu0 %v604
    %2353 = vmatpush.bf16.msra.mxu0 %v601
    %2354 = vmatmul.bf16.gmra.mxu0 %v2319
    %v2355 = vpop.f32.mrf.mxu0
    %v2356 = vadd.f32 0.0, %v2355
    %v2357 = vpop.f32.mrf.mxu0
    %2358 = vdwg.mxu0
    %v2359 = vadd.f32 %v327, %v2330
    %v2360 = vxor.u32 %v2359, 2147483648
    %v2361 = vmul.f32 %v2360, 1.442695
    %v2362 = vpow.pop %v2361
    %v2363 = vadd.f32 %v2362, 1.0
    %v2364 = vrcp.pop %v2363
    %v2365 = vmul.f32 %v2363, %v2364
    %v2366 = vsub.f32 1.0, %v2365
    %v2367 = vmul.f32 %v2364, %v2366
    %v2368 = vadd.f32 %v2364, %v2367
    %vm2369 = vweird.f32 %v2363
    %vm2370 = vweird.f32 %v2364
    %vm2371 = vmor %vm2369, %vm2370
    %v2372 = vsel %vm2371, %v2364, %v2368
    %v2373 = vand.u32 2147483647, %v2363
    %vm2374 = vcmp.eq.f32.partialorder %v2373, 8.507059e+37
    %v2375 = vand.u32 %v2363, 2147483648
    %v2376 = vor.u32 1.1754944e-38, %v2375
    %v2377 = vsel %vm2374, %v2376, %v2372
    %v2378 = vmul.f32 1.0, %v2377
    %v2379 = vadd.f32 %v356, %v2343
    %v2380 = vxor.u32 %v2379, 2147483648
    %v2381 = vmul.f32 %v2380, 1.442695
    %v2382 = vpow.pop %v2381
    %v2383 = vadd.f32 %v2382, 1.0
    %v2384 = vrcp.pop %v2383
    %v2385 = vmul.f32 %v2383, %v2384
    %v2386 = vsub.f32 1.0, %v2385
    %v2387 = vmul.f32 %v2384, %v2386
    %v2388 = vadd.f32 %v2384, %v2387
    %vm2389 = vweird.f32 %v2383
    %vm2390 = vweird.f32 %v2384
    %vm2391 = vmor %vm2389, %vm2390
    %v2392 = vsel %vm2391, %v2384, %v2388
    %v2393 = vand.u32 2147483647, %v2383
    %vm2394 = vcmp.eq.f32.partialorder %v2393, 8.507059e+37
    %v2395 = vand.u32 %v2383, 2147483648
    %v2396 = vor.u32 1.1754944e-38, %v2395
    %v2397 = vsel %vm2394, %v2396, %v2392
    %v2398 = vmul.f32 1.0, %v2397
    %v2399 = vadd.f32 %v2356, %v244
    %v2400 = vmul.f32 %v2378, %v2399
    %v2401 = vadd.f32 %v385, %v2400
    %v2402 = vtanh.pop %v2401
    %v2403 = vsub.f32 1.0, %v2398
    %v2404 = vmul.f32 %v2403, %v2402
    %v2405 = vmul.f32 %v2398, %v1976
    %v2406 = vadd.f32 %v2404, %v2405
    %v2407 = vpack.c.bf16 %v2064, %v2064
    %2408 = vmatpush.bf16.msra.mxu0 %v835
    %2409 = vmatpush.bf16.msra.mxu0 %v832
    %2410 = vmatpush.bf16.msra.mxu0 %v829
    %2411 = vmatpush.bf16.msra.mxu0 %v826
    %2412 = vmatpush.bf16.msra.mxu0 %v823
    %2413 = vmatpush.bf16.msra.mxu0 %v820
    %2414 = vmatpush.bf16.msra.mxu0 %v817
    %2415 = vmatpush.bf16.msra.mxu0 %v814
    %2416 = vmatmul.bf16.gmra.mxu0 %v2407
    %v2417 = vpop.f32.mrf.mxu0
    %v2418 = vadd.f32 0.0, %v2417
    %v2419 = vpop.f32.mrf.mxu0
    %2420 = vdwg.mxu0
    %2421 = vmatpush.bf16.msra.mxu0 %v836
    %2422 = vmatpush.bf16.msra.mxu0 %v833
    %2423 = vmatpush.bf16.msra.mxu0 %v830
    %2424 = vmatpush.bf16.msra.mxu0 %v827
    %2425 = vmatpush.bf16.msra.mxu0 %v824
    %2426 = vmatpush.bf16.msra.mxu0 %v821
    %2427 = vmatpush.bf16.msra.mxu0 %v818
    %2428 = vmatpush.bf16.msra.mxu0 %v815
    %2429 = vmatmul.bf16.gmra.mxu0 %v2407
    %v2430 = vpop.f32.mrf.mxu0
    %v2431 = vadd.f32 0.0, %v2430
    %v2432 = vpop.f32.mrf.mxu0
    %2433 = vdwg.mxu0
    %2434 = vmatpush.bf16.msra.mxu0 %v837
    %2435 = vmatpush.bf16.msra.mxu0 %v834
    %2436 = vmatpush.bf16.msra.mxu0 %v831
    %2437 = vmatpush.bf16.msra.mxu0 %v828
    %2438 = vmatpush.bf16.msra.mxu0 %v825
    %2439 = vmatpush.bf16.msra.mxu0 %v822
    %2440 = vmatpush.bf16.msra.mxu0 %v819
    %2441 = vmatpush.bf16.msra.mxu0 %v816
    %2442 = vmatmul.bf16.gmra.mxu0 %v2407
    %v2443 = vpop.f32.mrf.mxu0
    %v2444 = vadd.f32 0.0, %v2443
    %v2445 = vpop.f32.mrf.mxu0
    %2446 = vdwg.mxu0
    %v2447 = vadd.f32 %v464, %v2418
    %v2448 = vxor.u32 %v2447, 2147483648
    %v2449 = vmul.f32 %v2448, 1.442695
    %v2450 = vpow.pop %v2449
    %v2451 = vadd.f32 %v2450, 1.0
    %v2452 = vrcp.pop %v2451
    %v2453 = vmul.f32 %v2451, %v2452
    %v2454 = vsub.f32 1.0, %v2453
    %v2455 = vmul.f32 %v2452, %v2454
    %v2456 = vadd.f32 %v2452, %v2455
    %vm2457 = vweird.f32 %v2451
    %vm2458 = vweird.f32 %v2452
    %vm2459 = vmor %vm2457, %vm2458
    %v2460 = vsel %vm2459, %v2452, %v2456
    %v2461 = vand.u32 2147483647, %v2451
    %vm2462 = vcmp.eq.f32.partialorder %v2461, 8.507059e+37
    %v2463 = vand.u32 %v2451, 2147483648
    %v2464 = vor.u32 1.1754944e-38, %v2463
    %v2465 = vsel %vm2462, %v2464, %v2460
    %v2466 = vmul.f32 1.0, %v2465
    %v2467 = vadd.f32 %v488, %v2431
    %v2468 = vxor.u32 %v2467, 2147483648
    %v2469 = vmul.f32 %v2468, 1.442695
    %v2470 = vpow.pop %v2469
    %v2471 = vadd.f32 %v2470, 1.0
    %v2472 = vrcp.pop %v2471
    %v2473 = vmul.f32 %v2471, %v2472
    %v2474 = vsub.f32 1.0, %v2473
    %v2475 = vmul.f32 %v2472, %v2474
    %v2476 = vadd.f32 %v2472, %v2475
    %vm2477 = vweird.f32 %v2471
    %vm2478 = vweird.f32 %v2472
    %vm2479 = vmor %vm2477, %vm2478
    %v2480 = vsel %vm2479, %v2472, %v2476
    %v2481 = vand.u32 2147483647, %v2471
    %vm2482 = vcmp.eq.f32.partialorder %v2481, 8.507059e+37
    %v2483 = vand.u32 %v2471, 2147483648
    %v2484 = vor.u32 1.1754944e-38, %v2483
    %v2485 = vsel %vm2482, %v2484, %v2480
    %v2486 = vmul.f32 1.0, %v2485
    %v2487 = vadd.f32 %v2444, %v246
    %v2488 = vmul.f32 %v2466, %v2487
    %v2489 = vadd.f32 %v512, %v2488
    %v2490 = vtanh.pop %v2489
    %v2491 = vsub.f32 1.0, %v2486
    %v2492 = vmul.f32 %v2491, %v2490
    %v2493 = vmul.f32 %v2486, %v2064
    %v2494 = vadd.f32 %v2492, %v2493
    %2495 = vmatpush.bf16.msra.mxu0 %v1226
    %2496 = vmatpush.bf16.msra.mxu0 %v1223
    %2497 = vmatpush.bf16.msra.mxu0 %v1220
    %2498 = vmatpush.bf16.msra.mxu0 %v1217
    %2499 = vmatpush.bf16.msra.mxu0 %v1214
    %2500 = vmatpush.bf16.msra.mxu0 %v1211
    %2501 = vmatpush.bf16.msra.mxu0 %v1208
    %2502 = vmatpush.bf16.msra.mxu0 %v1205
    %2503 = vmatmul.bf16.gmra.mxu0 %v2319
    %v2504 = vpop.f32.mrf.mxu0
    %v2505 = vadd.f32 %v238, %v2504
    %v2506 = vpop.f32.mrf.mxu0
    %2507 = vdwg.mxu0
    %2508 = vmatpush.bf16.msra.mxu0 %v1227
    %2509 = vmatpush.bf16.msra.mxu0 %v1224
    %2510 = vmatpush.bf16.msra.mxu0 %v1221
    %2511 = vmatpush.bf16.msra.mxu0 %v1218
    %2512 = vmatpush.bf16.msra.mxu0 %v1215
    %2513 = vmatpush.bf16.msra.mxu0 %v1212
    %2514 = vmatpush.bf16.msra.mxu0 %v1209
    %2515 = vmatpush.bf16.msra.mxu0 %v1206
    %2516 = vmatmul.bf16.gmra.mxu0 %v2319
    %v2517 = vpop.f32.mrf.mxu0
    %v2518 = vadd.f32 %v239, %v2517
    %v2519 = vpop.f32.mrf.mxu0
    %2520 = vdwg.mxu0
    %2521 = vmatpush.bf16.msra.mxu0 %v1228
    %2522 = vmatpush.bf16.msra.mxu0 %v1225
    %2523 = vmatpush.bf16.msra.mxu0 %v1222
    %2524 = vmatpush.bf16.msra.mxu0 %v1219
    %2525 = vmatpush.bf16.msra.mxu0 %v1216
    %2526 = vmatpush.bf16.msra.mxu0 %v1213
    %2527 = vmatpush.bf16.msra.mxu0 %v1210
    %2528 = vmatpush.bf16.msra.mxu0 %v1207
    %2529 = vmatmul.bf16.gmra.mxu0 %v2319
    %v2530 = vpop.f32.mrf.mxu0
    %v2531 = vadd.f32 %v240, %v2530
    %v2532 = vpop.f32.mrf.mxu0
    %2533 = vdwg.mxu0
    %v2534 = vpack.c.bf16 %v2191, %v2191
    %2535 = vmatpush.bf16.msra.mxu0 %v1393
    %2536 = vmatpush.bf16.msra.mxu0 %v1390
    %2537 = vmatpush.bf16.msra.mxu0 %v1387
    %2538 = vmatpush.bf16.msra.mxu0 %v1384
    %2539 = vmatpush.bf16.msra.mxu0 %v1381
    %2540 = vmatpush.bf16.msra.mxu0 %v1378
    %2541 = vmatpush.bf16.msra.mxu0 %v1375
    %2542 = vmatpush.bf16.msra.mxu0 %v1372
    %2543 = vmatmul.bf16.gmra.mxu0 %v2534
    %v2544 = vpop.f32.mrf.mxu0
    %v2545 = vadd.f32 0.0, %v2544
    %v2546 = vpop.f32.mrf.mxu0
    %2547 = vdwg.mxu0
    %2548 = vmatpush.bf16.msra.mxu0 %v1394
    %2549 = vmatpush.bf16.msra.mxu0 %v1391
    %2550 = vmatpush.bf16.msra.mxu0 %v1388
    %2551 = vmatpush.bf16.msra.mxu0 %v1385
    %2552 = vmatpush.bf16.msra.mxu0 %v1382
    %2553 = vmatpush.bf16.msra.mxu0 %v1379
    %2554 = vmatpush.bf16.msra.mxu0 %v1376
    %2555 = vmatpush.bf16.msra.mxu0 %v1373
    %2556 = vmatmul.bf16.gmra.mxu0 %v2534
    %v2557 = vpop.f32.mrf.mxu0
    %v2558 = vadd.f32 0.0, %v2557
    %v2559 = vpop.f32.mrf.mxu0
    %2560 = vdwg.mxu0
    %2561 = vmatpush.bf16.msra.mxu0 %v1395
    %2562 = vmatpush.bf16.msra.mxu0 %v1392
    %2563 = vmatpush.bf16.msra.mxu0 %v1389
    %2564 = vmatpush.bf16.msra.mxu0 %v1386
    %2565 = vmatpush.bf16.msra.mxu0 %v1383
    %2566 = vmatpush.bf16.msra.mxu0 %v1380
    %2567 = vmatpush.bf16.msra.mxu0 %v1377
    %2568 = vmatpush.bf16.msra.mxu0 %v1374
    %2569 = vmatmul.bf16.gmra.mxu0 %v2534
    %v2570 = vpop.f32.mrf.mxu0
    %v2571 = vadd.f32 0.0, %v2570
    %v2572 = vpop.f32.mrf.mxu0
    %2573 = vdwg.mxu0
    %v2574 = vadd.f32 %v2505, %v2545
    %v2575 = vxor.u32 %v2574, 2147483648
    %v2576 = vmul.f32 %v2575, 1.442695
    %v2577 = vpow.pop %v2576
    %v2578 = vadd.f32 %v2577, 1.0
    %v2579 = vrcp.pop %v2578
    %v2580 = vmul.f32 %v2578, %v2579
    %v2581 = vsub.f32 1.0, %v2580
    %v2582 = vmul.f32 %v2579, %v2581
    %v2583 = vadd.f32 %v2579, %v2582
    %vm2584 = vweird.f32 %v2578
    %vm2585 = vweird.f32 %v2579
    %vm2586 = vmor %vm2584, %vm2585
    %v2587 = vsel %vm2586, %v2579, %v2583
    %v2588 = vand.u32 2147483647, %v2578
    %vm2589 = vcmp.eq.f32.partialorder %v2588, 8.507059e+37
    %v2590 = vand.u32 %v2578, 2147483648
    %v2591 = vor.u32 1.1754944e-38, %v2590
    %v2592 = vsel %vm2589, %v2591, %v2587
    %v2593 = vmul.f32 1.0, %v2592
    %v2594 = vadd.f32 %v2518, %v2558
    %v2595 = vxor.u32 %v2594, 2147483648
    %v2596 = vmul.f32 %v2595, 1.442695
    %v2597 = vpow.pop %v2596
    %v2598 = vadd.f32 %v2597, 1.0
    %v2599 = vrcp.pop %v2598
    %v2600 = vmul.f32 %v2598, %v2599
    %v2601 = vsub.f32 1.0, %v2600
    %v2602 = vmul.f32 %v2599, %v2601
    %v2603 = vadd.f32 %v2599, %v2602
    %vm2604 = vweird.f32 %v2598
    %vm2605 = vweird.f32 %v2599
    %vm2606 = vmor %vm2604, %vm2605
    %v2607 = vsel %vm2606, %v2599, %v2603
    %v2608 = vand.u32 2147483647, %v2598
    %vm2609 = vcmp.eq.f32.partialorder %v2608, 8.507059e+37
    %v2610 = vand.u32 %v2598, 2147483648
    %v2611 = vor.u32 1.1754944e-38, %v2610
    %v2612 = vsel %vm2609, %v2611, %v2607
    %v2613 = vmul.f32 1.0, %v2612
    %v2614 = vadd.f32 %v2571, %v245
    %v2615 = vmul.f32 %v2593, %v2614
    %v2616 = vadd.f32 %v2531, %v2615
    %v2617 = vtanh.pop %v2616
    %v2618 = vsub.f32 1.0, %v2613
    %v2619 = vmul.f32 %v2618, %v2617
    %v2620 = vmul.f32 %v2613, %v2191
    %v2621 = vadd.f32 %v2619, %v2620
    %2622 = vmatpush.bf16.msra.mxu0 %v1608
    %2623 = vmatpush.bf16.msra.mxu0 %v1605
    %2624 = vmatpush.bf16.msra.mxu0 %v1602
    %2625 = vmatpush.bf16.msra.mxu0 %v1599
    %2626 = vmatpush.bf16.msra.mxu0 %v1596
    %2627 = vmatpush.bf16.msra.mxu0 %v1593
    %2628 = vmatpush.bf16.msra.mxu0 %v1590
    %2629 = vmatpush.bf16.msra.mxu0 %v1587
    %2630 = vmatmul.bf16.gmra.mxu0 %v2407
    %v2631 = vpop.f32.mrf.mxu0
    %v2632 = vadd.f32 %v241, %v2631
    %v2633 = vpop.f32.mrf.mxu0
    %2634 = vdwg.mxu0
    %2635 = vmatpush.bf16.msra.mxu0 %v1609
    %2636 = vmatpush.bf16.msra.mxu0 %v1606
    %2637 = vmatpush.bf16.msra.mxu0 %v1603
    %2638 = vmatpush.bf16.msra.mxu0 %v1600
    %2639 = vmatpush.bf16.msra.mxu0 %v1597
    %2640 = vmatpush.bf16.msra.mxu0 %v1594
    %2641 = vmatpush.bf16.msra.mxu0 %v1591
    %2642 = vmatpush.bf16.msra.mxu0 %v1588
    %2643 = vmatmul.bf16.gmra.mxu0 %v2407
    %v2644 = vpop.f32.mrf.mxu0
    %v2645 = vadd.f32 %v242, %v2644
    %v2646 = vpop.f32.mrf.mxu0
    %2647 = vdwg.mxu0
    %2648 = vmatpush.bf16.msra.mxu0 %v1610
    %2649 = vmatpush.bf16.msra.mxu0 %v1607
    %2650 = vmatpush.bf16.msra.mxu0 %v1604
    %2651 = vmatpush.bf16.msra.mxu0 %v1601
    %2652 = vmatpush.bf16.msra.mxu0 %v1598
    %2653 = vmatpush.bf16.msra.mxu0 %v1595
    %2654 = vmatpush.bf16.msra.mxu0 %v1592
    %2655 = vmatpush.bf16.msra.mxu0 %v1589
    %2656 = vmatmul.bf16.gmra.mxu0 %v2407
    %v2657 = vpop.f32.mrf.mxu0
    %v2658 = vadd.f32 %v243, %v2657
    %v2659 = vpop.f32.mrf.mxu0
    %2660 = vdwg.mxu0
    %v2661 = vpack.c.bf16 %v2318, %v2318
    %2662 = vmatpush.bf16.msra.mxu0 %v1775
    %2663 = vmatpush.bf16.msra.mxu0 %v1772
    %2664 = vmatpush.bf16.msra.mxu0 %v1769
    %2665 = vmatpush.bf16.msra.mxu0 %v1766
    %2666 = vmatpush.bf16.msra.mxu0 %v1763
    %2667 = vmatpush.bf16.msra.mxu0 %v1760
    %2668 = vmatpush.bf16.msra.mxu0 %v1757
    %2669 = vmatpush.bf16.msra.mxu0 %v1754
    %2670 = vmatmul.bf16.gmra.mxu0 %v2661
    %v2671 = vpop.f32.mrf.mxu0
    %v2672 = vadd.f32 0.0, %v2671
    %v2673 = vpop.f32.mrf.mxu0
    %2674 = vdwg.mxu0
    %2675 = vmatpush.bf16.msra.mxu0 %v1776
    %2676 = vmatpush.bf16.msra.mxu0 %v1773
    %2677 = vmatpush.bf16.msra.mxu0 %v1770
    %2678 = vmatpush.bf16.msra.mxu0 %v1767
    %2679 = vmatpush.bf16.msra.mxu0 %v1764
    %2680 = vmatpush.bf16.msra.mxu0 %v1761
    %2681 = vmatpush.bf16.msra.mxu0 %v1758
    %2682 = vmatpush.bf16.msra.mxu0 %v1755
    %2683 = vmatmul.bf16.gmra.mxu0 %v2661
    %v2684 = vpop.f32.mrf.mxu0
    %v2685 = vadd.f32 0.0, %v2684
    %v2686 = vpop.f32.mrf.mxu0
    %2687 = vdwg.mxu0
    %2688 = vmatpush.bf16.msra.mxu0 %v1777
    %2689 = vmatpush.bf16.msra.mxu0 %v1774
    %2690 = vmatpush.bf16.msra.mxu0 %v1771
    %2691 = vmatpush.bf16.msra.mxu0 %v1768
    %2692 = vmatpush.bf16.msra.mxu0 %v1765
    %2693 = vmatpush.bf16.msra.mxu0 %v1762
    %2694 = vmatpush.bf16.msra.mxu0 %v1759
    %2695 = vmatpush.bf16.msra.mxu0 %v1756
    %2696 = vmatmul.bf16.gmra.mxu0 %v2661
    %v2697 = vpop.f32.mrf.mxu0
    %v2698 = vadd.f32 0.0, %v2697
    %v2699 = vpop.f32.mrf.mxu0
    %2700 = vdwg.mxu0
    %v2701 = vadd.f32 %v2632, %v2672
    %v2702 = vxor.u32 %v2701, 2147483648
    %v2703 = vmul.f32 %v2702, 1.442695
    %v2704 = vpow.pop %v2703
    %v2705 = vadd.f32 %v2704, 1.0
    %v2706 = vrcp.pop %v2705
    %v2707 = vmul.f32 %v2705, %v2706
    %v2708 = vsub.f32 1.0, %v2707
    %v2709 = vmul.f32 %v2706, %v2708
    %v2710 = vadd.f32 %v2706, %v2709
    %vm2711 = vweird.f32 %v2705
    %vm2712 = vweird.f32 %v2706
    %vm2713 = vmor %vm2711, %vm2712
    %v2714 = vsel %vm2713, %v2706, %v2710
    %v2715 = vand.u32 2147483647, %v2705
    %vm2716 = vcmp.eq.f32.partialorder %v2715, 8.507059e+37
    %v2717 = vand.u32 %v2705, 2147483648
    %v2718 = vor.u32 1.1754944e-38, %v2717
    %v2719 = vsel %vm2716, %v2718, %v2714
    %v2720 = vmul.f32 1.0, %v2719
    %v2721 = vadd.f32 %v2645, %v2685
    %v2722 = vxor.u32 %v2721, 2147483648
    %v2723 = vmul.f32 %v2722, 1.442695
    %v2724 = vpow.pop %v2723
    %v2725 = vadd.f32 %v2724, 1.0
    %v2726 = vrcp.pop %v2725
    %v2727 = vmul.f32 %v2725, %v2726
    %v2728 = vsub.f32 1.0, %v2727
    %v2729 = vmul.f32 %v2726, %v2728
    %v2730 = vadd.f32 %v2726, %v2729
    %vm2731 = vweird.f32 %v2725
    %vm2732 = vweird.f32 %v2726
    %vm2733 = vmor %vm2731, %vm2732
    %v2734 = vsel %vm2733, %v2726, %v2730
    %v2735 = vand.u32 2147483647, %v2725
    %vm2736 = vcmp.eq.f32.partialorder %v2735, 8.507059e+37
    %v2737 = vand.u32 %v2725, 2147483648
    %v2738 = vor.u32 1.1754944e-38, %v2737
    %v2739 = vsel %vm2736, %v2738, %v2734
    %v2740 = vmul.f32 1.0, %v2739
    %v2741 = vadd.f32 %v2698, %v247
    %v2742 = vmul.f32 %v2720, %v2741
    %v2743 = vadd.f32 %v2658, %v2742
    %v2744 = vtanh.pop %v2743
    %v2745 = vsub.f32 1.0, %v2740
    %v2746 = vmul.f32 %v2745, %v2744
    %v2747 = vmul.f32 %v2740, %v2318
    %v2748 = vadd.f32 %v2746, %v2747
    %v2749 = vpack.c.bf16 %v2406, %v2406
    %2750 = vmatpush.bf16.msra.mxu0 %v620
    %2751 = vmatpush.bf16.msra.mxu0 %v617
    %2752 = vmatpush.bf16.msra.mxu0 %v614
    %2753 = vmatpush.bf16.msra.mxu0 %v611
    %2754 = vmatpush.bf16.msra.mxu0 %v608
    %2755 = vmatpush.bf16.msra.mxu0 %v605
    %2756 = vmatpush.bf16.msra.mxu0 %v602
    %2757 = vmatpush.bf16.msra.mxu0 %v599
    %2758 = vmatmul.bf16.gmra.mxu0 %v2749
    %v2759 = vpop.f32.mrf.mxu0
    %v2760 = vadd.f32 0.0, %v2759
    %v2761 = vpop.f32.mrf.mxu0
    %2762 = vdwg.mxu0
    %2763 = vmatpush.bf16.msra.mxu0 %v621
    %2764 = vmatpush.bf16.msra.mxu0 %v618
    %2765 = vmatpush.bf16.msra.mxu0 %v615
    %2766 = vmatpush.bf16.msra.mxu0 %v612
    %2767 = vmatpush.bf16.msra.mxu0 %v609
    %2768 = vmatpush.bf16.msra.mxu0 %v606
    %2769 = vmatpush.bf16.msra.mxu0 %v603
    %2770 = vmatpush.bf16.msra.mxu0 %v600
    %2771 = vmatmul.bf16.gmra.mxu0 %v2749
    %v2772 = vpop.f32.mrf.mxu0
    %v2773 = vadd.f32 0.0, %v2772
    %v2774 = vpop.f32.mrf.mxu0
    %2775 = vdwg.mxu0
    %2776 = vmatpush.bf16.msra.mxu0 %v622
    %2777 = vmatpush.bf16.msra.mxu0 %v619
    %2778 = vmatpush.bf16.msra.mxu0 %v616
    %2779 = vmatpush.bf16.msra.mxu0 %v613
    %2780 = vmatpush.bf16.msra.mxu0 %v610
    %2781 = vmatpush.bf16.msra.mxu0 %v607
    %2782 = vmatpush.bf16.msra.mxu0 %v604
    %2783 = vmatpush.bf16.msra.mxu0 %v601
    %2784 = vmatmul.bf16.gmra.mxu0 %v2749
    %v2785 = vpop.f32.mrf.mxu0
    %v2786 = vadd.f32 0.0, %v2785
    %v2787 = vpop.f32.mrf.mxu0
    %2788 = vdwg.mxu0
    %v2789 = vadd.f32 %v330, %v2760
    %v2790 = vxor.u32 %v2789, 2147483648
    %v2791 = vmul.f32 %v2790, 1.442695
    %v2792 = vpow.pop %v2791
    %v2793 = vadd.f32 %v2792, 1.0
    %v2794 = vrcp.pop %v2793
    %v2795 = vmul.f32 %v2793, %v2794
    %v2796 = vsub.f32 1.0, %v2795
    %v2797 = vmul.f32 %v2794, %v2796
    %v2798 = vadd.f32 %v2794, %v2797
    %vm2799 = vweird.f32 %v2793
    %vm2800 = vweird.f32 %v2794
    %vm2801 = vmor %vm2799, %vm2800
    %v2802 = vsel %vm2801, %v2794, %v2798
    %v2803 = vand.u32 2147483647, %v2793
    %vm2804 = vcmp.eq.f32.partialorder %v2803, 8.507059e+37
    %v2805 = vand.u32 %v2793, 2147483648
    %v2806 = vor.u32 1.1754944e-38, %v2805
    %v2807 = vsel %vm2804, %v2806, %v2802
    %v2808 = vmul.f32 1.0, %v2807
    %v2809 = vadd.f32 %v359, %v2773
    %v2810 = vxor.u32 %v2809, 2147483648
    %v2811 = vmul.f32 %v2810, 1.442695
    %v2812 = vpow.pop %v2811
    %v2813 = vadd.f32 %v2812, 1.0
    %v2814 = vrcp.pop %v2813
    %v2815 = vmul.f32 %v2813, %v2814
    %v2816 = vsub.f32 1.0, %v2815
    %v2817 = vmul.f32 %v2814, %v2816
    %v2818 = vadd.f32 %v2814, %v2817
    %vm2819 = vweird.f32 %v2813
    %vm2820 = vweird.f32 %v2814
    %vm2821 = vmor %vm2819, %vm2820
    %v2822 = vsel %vm2821, %v2814, %v2818
    %v2823 = vand.u32 2147483647, %v2813
    %vm2824 = vcmp.eq.f32.partialorder %v2823, 8.507059e+37
    %v2825 = vand.u32 %v2813, 2147483648
    %v2826 = vor.u32 1.1754944e-38, %v2825
    %v2827 = vsel %vm2824, %v2826, %v2822
    %v2828 = vmul.f32 1.0, %v2827
    %v2829 = vadd.f32 %v2786, %v244
    %v2830 = vmul.f32 %v2808, %v2829
    %v2831 = vadd.f32 %v388, %v2830
    %v2832 = vtanh.pop %v2831
    %v2833 = vsub.f32 1.0, %v2828
    %v2834 = vmul.f32 %v2833, %v2832
    %v2835 = vmul.f32 %v2828, %v2406
    %v2836 = vadd.f32 %v2834, %v2835
    %v2837 = vpack.c.bf16 %v2494, %v2494
    %2838 = vmatpush.bf16.msra.mxu0 %v835
    %2839 = vmatpush.bf16.msra.mxu0 %v832
    %2840 = vmatpush.bf16.msra.mxu0 %v829
    %2841 = vmatpush.bf16.msra.mxu0 %v826
    %2842 = vmatpush.bf16.msra.mxu0 %v823
    %2843 = vmatpush.bf16.msra.mxu0 %v820
    %2844 = vmatpush.bf16.msra.mxu0 %v817
    %2845 = vmatpush.bf16.msra.mxu0 %v814
    %2846 = vmatmul.bf16.gmra.mxu0 %v2837
    %v2847 = vpop.f32.mrf.mxu0
    %v2848 = vadd.f32 0.0, %v2847
    %v2849 = vpop.f32.mrf.mxu0
    %2850 = vdwg.mxu0
    %2851 = vmatpush.bf16.msra.mxu0 %v836
    %2852 = vmatpush.bf16.msra.mxu0 %v833
    %2853 = vmatpush.bf16.msra.mxu0 %v830
    %2854 = vmatpush.bf16.msra.mxu0 %v827
    %2855 = vmatpush.bf16.msra.mxu0 %v824
    %2856 = vmatpush.bf16.msra.mxu0 %v821
    %2857 = vmatpush.bf16.msra.mxu0 %v818
    %2858 = vmatpush.bf16.msra.mxu0 %v815
    %2859 = vmatmul.bf16.gmra.mxu0 %v2837
    %v2860 = vpop.f32.mrf.mxu0
    %v2861 = vadd.f32 0.0, %v2860
    %v2862 = vpop.f32.mrf.mxu0
    %2863 = vdwg.mxu0
    %2864 = vmatpush.bf16.msra.mxu0 %v837
    %2865 = vmatpush.bf16.msra.mxu0 %v834
    %2866 = vmatpush.bf16.msra.mxu0 %v831
    %2867 = vmatpush.bf16.msra.mxu0 %v828
    %2868 = vmatpush.bf16.msra.mxu0 %v825
    %2869 = vmatpush.bf16.msra.mxu0 %v822
    %2870 = vmatpush.bf16.msra.mxu0 %v819
    %2871 = vmatpush.bf16.msra.mxu0 %v816
    %2872 = vmatmul.bf16.gmra.mxu0 %v2837
    %v2873 = vpop.f32.mrf.mxu0
    %v2874 = vadd.f32 0.0, %v2873
    %v2875 = vpop.f32.mrf.mxu0
    %2876 = vdwg.mxu0
    %v2877 = vadd.f32 %v467, %v2848
    %v2878 = vxor.u32 %v2877, 2147483648
    %v2879 = vmul.f32 %v2878, 1.442695
    %v2880 = vpow.pop %v2879
    %v2881 = vadd.f32 %v2880, 1.0
    %v2882 = vrcp.pop %v2881
    %v2883 = vmul.f32 %v2881, %v2882
    %v2884 = vsub.f32 1.0, %v2883
    %v2885 = vmul.f32 %v2882, %v2884
    %v2886 = vadd.f32 %v2882, %v2885
    %vm2887 = vweird.f32 %v2881
    %vm2888 = vweird.f32 %v2882
    %vm2889 = vmor %vm2887, %vm2888
    %v2890 = vsel %vm2889, %v2882, %v2886
    %v2891 = vand.u32 2147483647, %v2881
    %vm2892 = vcmp.eq.f32.partialorder %v2891, 8.507059e+37
    %v2893 = vand.u32 %v2881, 2147483648
    %v2894 = vor.u32 1.1754944e-38, %v2893
    %v2895 = vsel %vm2892, %v2894, %v2890
    %v2896 = vmul.f32 1.0, %v2895
    %v2897 = vadd.f32 %v491, %v2861
    %v2898 = vxor.u32 %v2897, 2147483648
    %v2899 = vmul.f32 %v2898, 1.442695
    %v2900 = vpow.pop %v2899
    %v2901 = vadd.f32 %v2900, 1.0
    %v2902 = vrcp.pop %v2901
    %v2903 = vmul.f32 %v2901, %v2902
    %v2904 = vsub.f32 1.0, %v2903
    %v2905 = vmul.f32 %v2902, %v2904
    %v2906 = vadd.f32 %v2902, %v2905
    %vm2907 = vweird.f32 %v2901
    %vm2908 = vweird.f32 %v2902
    %vm2909 = vmor %vm2907, %vm2908
    %v2910 = vsel %vm2909, %v2902, %v2906
    %v2911 = vand.u32 2147483647, %v2901
    %vm2912 = vcmp.eq.f32.partialorder %v2911, 8.507059e+37
    %v2913 = vand.u32 %v2901, 2147483648
    %v2914 = vor.u32 1.1754944e-38, %v2913
    %v2915 = vsel %vm2912, %v2914, %v2910
    %v2916 = vmul.f32 1.0, %v2915
    %v2917 = vadd.f32 %v2874, %v246
    %v2918 = vmul.f32 %v2896, %v2917
    %v2919 = vadd.f32 %v515, %v2918
    %v2920 = vtanh.pop %v2919
    %v2921 = vsub.f32 1.0, %v2916
    %v2922 = vmul.f32 %v2921, %v2920
    %v2923 = vmul.f32 %v2916, %v2494
    %v2924 = vadd.f32 %v2922, %v2923
    %2925 = vmatpush.bf16.msra.mxu0 %v1226
    %2926 = vmatpush.bf16.msra.mxu0 %v1223
    %2927 = vmatpush.bf16.msra.mxu0 %v1220
    %2928 = vmatpush.bf16.msra.mxu0 %v1217
    %2929 = vmatpush.bf16.msra.mxu0 %v1214
    %2930 = vmatpush.bf16.msra.mxu0 %v1211
    %2931 = vmatpush.bf16.msra.mxu0 %v1208
    %2932 = vmatpush.bf16.msra.mxu0 %v1205
    %2933 = vmatmul.bf16.gmra.mxu0 %v2749
    %v2934 = vpop.f32.mrf.mxu0
    %v2935 = vadd.f32 %v238, %v2934
    %v2936 = vpop.f32.mrf.mxu0
    %2937 = vdwg.mxu0
    %2938 = vmatpush.bf16.msra.mxu0 %v1227
    %2939 = vmatpush.bf16.msra.mxu0 %v1224
    %2940 = vmatpush.bf16.msra.mxu0 %v1221
    %2941 = vmatpush.bf16.msra.mxu0 %v1218
    %2942 = vmatpush.bf16.msra.mxu0 %v1215
    %2943 = vmatpush.bf16.msra.mxu0 %v1212
    %2944 = vmatpush.bf16.msra.mxu0 %v1209
    %2945 = vmatpush.bf16.msra.mxu0 %v1206
    %2946 = vmatmul.bf16.gmra.mxu0 %v2749
    %v2947 = vpop.f32.mrf.mxu0
    %v2948 = vadd.f32 %v239, %v2947
    %v2949 = vpop.f32.mrf.mxu0
    %2950 = vdwg.mxu0
    %2951 = vmatpush.bf16.msra.mxu0 %v1228
    %2952 = vmatpush.bf16.msra.mxu0 %v1225
    %2953 = vmatpush.bf16.msra.mxu0 %v1222
    %2954 = vmatpush.bf16.msra.mxu0 %v1219
    %2955 = vmatpush.bf16.msra.mxu0 %v1216
    %2956 = vmatpush.bf16.msra.mxu0 %v1213
    %2957 = vmatpush.bf16.msra.mxu0 %v1210
    %2958 = vmatpush.bf16.msra.mxu0 %v1207
    %2959 = vmatmul.bf16.gmra.mxu0 %v2749
    %v2960 = vpop.f32.mrf.mxu0
    %v2961 = vadd.f32 %v240, %v2960
    %v2962 = vpop.f32.mrf.mxu0
    %2963 = vdwg.mxu0
    %v2964 = vpack.c.bf16 %v2621, %v2621
    %2965 = vmatpush.bf16.msra.mxu0 %v1393
    %2966 = vmatpush.bf16.msra.mxu0 %v1390
    %2967 = vmatpush.bf16.msra.mxu0 %v1387
    %2968 = vmatpush.bf16.msra.mxu0 %v1384
    %2969 = vmatpush.bf16.msra.mxu0 %v1381
    %2970 = vmatpush.bf16.msra.mxu0 %v1378
    %2971 = vmatpush.bf16.msra.mxu0 %v1375
    %2972 = vmatpush.bf16.msra.mxu0 %v1372
    %2973 = vmatmul.bf16.gmra.mxu0 %v2964
    %v2974 = vpop.f32.mrf.mxu0
    %v2975 = vadd.f32 0.0, %v2974
    %v2976 = vpop.f32.mrf.mxu0
    %2977 = vdwg.mxu0
    %2978 = vmatpush.bf16.msra.mxu0 %v1394
    %2979 = vmatpush.bf16.msra.mxu0 %v1391
    %2980 = vmatpush.bf16.msra.mxu0 %v1388
    %2981 = vmatpush.bf16.msra.mxu0 %v1385
    %2982 = vmatpush.bf16.msra.mxu0 %v1382
    %2983 = vmatpush.bf16.msra.mxu0 %v1379
    %2984 = vmatpush.bf16.msra.mxu0 %v1376
    %2985 = vmatpush.bf16.msra.mxu0 %v1373
    %2986 = vmatmul.bf16.gmra.mxu0 %v2964
    %v2987 = vpop.f32.mrf.mxu0
    %v2988 = vadd.f32 0.0, %v2987
    %v2989 = vpop.f32.mrf.mxu0
    %2990 = vdwg.mxu0
    %2991 = vmatpush.bf16.msra.mxu0 %v1395
    %2992 = vmatpush.bf16.msra.mxu0 %v1392
    %2993 = vmatpush.bf16.msra.mxu0 %v1389
    %2994 = vmatpush.bf16.msra.mxu0 %v1386
    %2995 = vmatpush.bf16.msra.mxu0 %v1383
    %2996 = vmatpush.bf16.msra.mxu0 %v1380
    %2997 = vmatpush.bf16.msra.mxu0 %v1377
    %2998 = vmatpush.bf16.msra.mxu0 %v1374
    %2999 = vmatmul.bf16.gmra.mxu0 %v2964
    %v3000 = vpop.f32.mrf.mxu0
    %v3001 = vadd.f32 0.0, %v3000
    %v3002 = vpop.f32.mrf.mxu0
    %3003 = vdwg.mxu0
    %v3004 = vadd.f32 %v2935, %v2975
    %v3005 = vxor.u32 %v3004, 2147483648
    %v3006 = vmul.f32 %v3005, 1.442695
    %v3007 = vpow.pop %v3006
    %v3008 = vadd.f32 %v3007, 1.0
    %v3009 = vrcp.pop %v3008
    %v3010 = vmul.f32 %v3008, %v3009
    %v3011 = vsub.f32 1.0, %v3010
    %v3012 = vmul.f32 %v3009, %v3011
    %v3013 = vadd.f32 %v3009, %v3012
    %vm3014 = vweird.f32 %v3008
    %vm3015 = vweird.f32 %v3009
    %vm3016 = vmor %vm3014, %vm3015
    %v3017 = vsel %vm3016, %v3009, %v3013
    %v3018 = vand.u32 2147483647, %v3008
    %vm3019 = vcmp.eq.f32.partialorder %v3018, 8.507059e+37
    %v3020 = vand.u32 %v3008, 2147483648
    %v3021 = vor.u32 1.1754944e-38, %v3020
    %v3022 = vsel %vm3019, %v3021, %v3017
    %v3023 = vmul.f32 1.0, %v3022
    %v3024 = vadd.f32 %v2948, %v2988
    %v3025 = vxor.u32 %v3024, 2147483648
    %v3026 = vmul.f32 %v3025, 1.442695
    %v3027 = vpow.pop %v3026
    %v3028 = vadd.f32 %v3027, 1.0
    %v3029 = vrcp.pop %v3028
    %v3030 = vmul.f32 %v3028, %v3029
    %v3031 = vsub.f32 1.0, %v3030
    %v3032 = vmul.f32 %v3029, %v3031
    %v3033 = vadd.f32 %v3029, %v3032
    %vm3034 = vweird.f32 %v3028
    %vm3035 = vweird.f32 %v3029
    %vm3036 = vmor %vm3034, %vm3035
    %v3037 = vsel %vm3036, %v3029, %v3033
    %v3038 = vand.u32 2147483647, %v3028
    %vm3039 = vcmp.eq.f32.partialorder %v3038, 8.507059e+37
    %v3040 = vand.u32 %v3028, 2147483648
    %v3041 = vor.u32 1.1754944e-38, %v3040
    %v3042 = vsel %vm3039, %v3041, %v3037
    %v3043 = vmul.f32 1.0, %v3042
    %v3044 = vadd.f32 %v3001, %v245
    %v3045 = vmul.f32 %v3023, %v3044
    %v3046 = vadd.f32 %v2961, %v3045
    %v3047 = vtanh.pop %v3046
    %v3048 = vsub.f32 1.0, %v3043
    %v3049 = vmul.f32 %v3048, %v3047
    %v3050 = vmul.f32 %v3043, %v2621
    %v3051 = vadd.f32 %v3049, %v3050
    %3052 = vmatpush.bf16.msra.mxu0 %v1608
    %3053 = vmatpush.bf16.msra.mxu0 %v1605
    %3054 = vmatpush.bf16.msra.mxu0 %v1602
    %3055 = vmatpush.bf16.msra.mxu0 %v1599
    %3056 = vmatpush.bf16.msra.mxu0 %v1596
    %3057 = vmatpush.bf16.msra.mxu0 %v1593
    %3058 = vmatpush.bf16.msra.mxu0 %v1590
    %3059 = vmatpush.bf16.msra.mxu0 %v1587
    %3060 = vmatmul.bf16.gmra.mxu0 %v2837
    %v3061 = vpop.f32.mrf.mxu0
    %v3062 = vadd.f32 %v241, %v3061
    %v3063 = vpop.f32.mrf.mxu0
    %3064 = vdwg.mxu0
    %3065 = vmatpush.bf16.msra.mxu0 %v1609
    %3066 = vmatpush.bf16.msra.mxu0 %v1606
    %3067 = vmatpush.bf16.msra.mxu0 %v1603
    %3068 = vmatpush.bf16.msra.mxu0 %v1600
    %3069 = vmatpush.bf16.msra.mxu0 %v1597
    %3070 = vmatpush.bf16.msra.mxu0 %v1594
    %3071 = vmatpush.bf16.msra.mxu0 %v1591
    %3072 = vmatpush.bf16.msra.mxu0 %v1588
    %3073 = vmatmul.bf16.gmra.mxu0 %v2837
    %v3074 = vpop.f32.mrf.mxu0
    %v3075 = vadd.f32 %v242, %v3074
    %v3076 = vpop.f32.mrf.mxu0
    %3077 = vdwg.mxu0
    %3078 = vmatpush.bf16.msra.mxu0 %v1610
    %3079 = vmatpush.bf16.msra.mxu0 %v1607
    %3080 = vmatpush.bf16.msra.mxu0 %v1604
    %3081 = vmatpush.bf16.msra.mxu0 %v1601
    %3082 = vmatpush.bf16.msra.mxu0 %v1598
    %3083 = vmatpush.bf16.msra.mxu0 %v1595
    %3084 = vmatpush.bf16.msra.mxu0 %v1592
    %3085 = vmatpush.bf16.msra.mxu0 %v1589
    %3086 = vmatmul.bf16.gmra.mxu0 %v2837
    %v3087 = vpop.f32.mrf.mxu0
    %v3088 = vadd.f32 %v243, %v3087
    %v3089 = vpop.f32.mrf.mxu0
    %3090 = vdwg.mxu0
    %v3091 = vpack.c.bf16 %v2748, %v2748
    %3092 = vmatpush.bf16.msra.mxu0 %v1775
    %3093 = vmatpush.bf16.msra.mxu0 %v1772
    %3094 = vmatpush.bf16.msra.mxu0 %v1769
    %3095 = vmatpush.bf16.msra.mxu0 %v1766
    %3096 = vmatpush.bf16.msra.mxu0 %v1763
    %3097 = vmatpush.bf16.msra.mxu0 %v1760
    %3098 = vmatpush.bf16.msra.mxu0 %v1757
    %3099 = vmatpush.bf16.msra.mxu0 %v1754
    %3100 = vmatmul.bf16.gmra.mxu0 %v3091
    %v3101 = vpop.f32.mrf.mxu0
    %v3102 = vadd.f32 0.0, %v3101
    %v3103 = vpop.f32.mrf.mxu0
    %3104 = vdwg.mxu0
    %3105 = vmatpush.bf16.msra.mxu0 %v1776
    %3106 = vmatpush.bf16.msra.mxu0 %v1773
    %3107 = vmatpush.bf16.msra.mxu0 %v1770
    %3108 = vmatpush.bf16.msra.mxu0 %v1767
    %3109 = vmatpush.bf16.msra.mxu0 %v1764
    %3110 = vmatpush.bf16.msra.mxu0 %v1761
    %3111 = vmatpush.bf16.msra.mxu0 %v1758
    %3112 = vmatpush.bf16.msra.mxu0 %v1755
    %3113 = vmatmul.bf16.gmra.mxu0 %v3091
    %v3114 = vpop.f32.mrf.mxu0
    %v3115 = vadd.f32 0.0, %v3114
    %v3116 = vpop.f32.mrf.mxu0
    %3117 = vdwg.mxu0
    %3118 = vmatpush.bf16.msra.mxu0 %v1777
    %3119 = vmatpush.bf16.msra.mxu0 %v1774
    %3120 = vmatpush.bf16.msra.mxu0 %v1771
    %3121 = vmatpush.bf16.msra.mxu0 %v1768
    %3122 = vmatpush.bf16.msra.mxu0 %v1765
    %3123 = vmatpush.bf16.msra.mxu0 %v1762
    %3124 = vmatpush.bf16.msra.mxu0 %v1759
    %3125 = vmatpush.bf16.msra.mxu0 %v1756
    %3126 = vmatmul.bf16.gmra.mxu0 %v3091
    %v3127 = vpop.f32.mrf.mxu0
    %v3128 = vadd.f32 0.0, %v3127
    %v3129 = vpop.f32.mrf.mxu0
    %3130 = vdwg.mxu0
    %v3131 = vadd.f32 %v3062, %v3102
    %v3132 = vxor.u32 %v3131, 2147483648
    %v3133 = vmul.f32 %v3132, 1.442695
    %v3134 = vpow.pop %v3133
    %v3135 = vadd.f32 %v3134, 1.0
    %v3136 = vrcp.pop %v3135
    %v3137 = vmul.f32 %v3135, %v3136
    %v3138 = vsub.f32 1.0, %v3137
    %v3139 = vmul.f32 %v3136, %v3138
    %v3140 = vadd.f32 %v3136, %v3139
    %vm3141 = vweird.f32 %v3135
    %vm3142 = vweird.f32 %v3136
    %vm3143 = vmor %vm3141, %vm3142
    %v3144 = vsel %vm3143, %v3136, %v3140
    %v3145 = vand.u32 2147483647, %v3135
    %vm3146 = vcmp.eq.f32.partialorder %v3145, 8.507059e+37
    %v3147 = vand.u32 %v3135, 2147483648
    %v3148 = vor.u32 1.1754944e-38, %v3147
    %v3149 = vsel %vm3146, %v3148, %v3144
    %v3150 = vmul.f32 1.0, %v3149
    %v3151 = vadd.f32 %v3075, %v3115
    %v3152 = vxor.u32 %v3151, 2147483648
    %v3153 = vmul.f32 %v3152, 1.442695
    %v3154 = vpow.pop %v3153
    %v3155 = vadd.f32 %v3154, 1.0
    %v3156 = vrcp.pop %v3155
    %v3157 = vmul.f32 %v3155, %v3156
    %v3158 = vsub.f32 1.0, %v3157
    %v3159 = vmul.f32 %v3156, %v3158
    %v3160 = vadd.f32 %v3156, %v3159
    %vm3161 = vweird.f32 %v3155
    %vm3162 = vweird.f32 %v3156
    %vm3163 = vmor %vm3161, %vm3162
    %v3164 = vsel %vm3163, %v3156, %v3160
    %v3165 = vand.u32 2147483647, %v3155
    %vm3166 = vcmp.eq.f32.partialorder %v3165, 8.507059e+37
    %v3167 = vand.u32 %v3155, 2147483648
    %v3168 = vor.u32 1.1754944e-38, %v3167
    %v3169 = vsel %vm3166, %v3168, %v3164
    %v3170 = vmul.f32 1.0, %v3169
    %v3171 = vadd.f32 %v3128, %v247
    %v3172 = vmul.f32 %v3150, %v3171
    %v3173 = vadd.f32 %v3088, %v3172
    %v3174 = vtanh.pop %v3173
    %v3175 = vsub.f32 1.0, %v3170
    %v3176 = vmul.f32 %v3175, %v3174
    %v3177 = vmul.f32 %v3170, %v2748
    %v3178 = vadd.f32 %v3176, %v3177
    %v3179 = vpack.c.bf16 %v2836, %v2836
    %3180 = vmatpush.bf16.msra.mxu0 %v620
    %3181 = vmatpush.bf16.msra.mxu0 %v617
    %3182 = vmatpush.bf16.msra.mxu0 %v614
    %3183 = vmatpush.bf16.msra.mxu0 %v611
    %3184 = vmatpush.bf16.msra.mxu0 %v608
    %3185 = vmatpush.bf16.msra.mxu0 %v605
    %3186 = vmatpush.bf16.msra.mxu0 %v602
    %3187 = vmatpush.bf16.msra.mxu0 %v599
    %3188 = vmatmul.bf16.gmra.mxu0 %v3179
    %v3189 = vpop.f32.mrf.mxu0
    %v3190 = vadd.f32 0.0, %v3189
    %v3191 = vpop.f32.mrf.mxu0
    %3192 = vdwg.mxu0
    %3193 = vmatpush.bf16.msra.mxu0 %v621
    %3194 = vmatpush.bf16.msra.mxu0 %v618
    %3195 = vmatpush.bf16.msra.mxu0 %v615
    %3196 = vmatpush.bf16.msra.mxu0 %v612
    %3197 = vmatpush.bf16.msra.mxu0 %v609
    %3198 = vmatpush.bf16.msra.mxu0 %v606
    %3199 = vmatpush.bf16.msra.mxu0 %v603
    %3200 = vmatpush.bf16.msra.mxu0 %v600
    %3201 = vmatmul.bf16.gmra.mxu0 %v3179
    %v3202 = vpop.f32.mrf.mxu0
    %v3203 = vadd.f32 0.0, %v3202
    %v3204 = vpop.f32.mrf.mxu0
    %3205 = vdwg.mxu0
    %3206 = vmatpush.bf16.msra.mxu0 %v622
    %3207 = vmatpush.bf16.msra.mxu0 %v619
    %3208 = vmatpush.bf16.msra.mxu0 %v616
    %3209 = vmatpush.bf16.msra.mxu0 %v613
    %3210 = vmatpush.bf16.msra.mxu0 %v610
    %3211 = vmatpush.bf16.msra.mxu0 %v607
    %3212 = vmatpush.bf16.msra.mxu0 %v604
    %3213 = vmatpush.bf16.msra.mxu0 %v601
    %3214 = vmatmul.bf16.gmra.mxu0 %v3179
    %v3215 = vpop.f32.mrf.mxu0
    %v3216 = vadd.f32 0.0, %v3215
    %v3217 = vpop.f32.mrf.mxu0
    %3218 = vdwg.mxu0
    %v3219 = vadd.f32 %v332, %v3190
    %v3220 = vxor.u32 %v3219, 2147483648
    %v3221 = vmul.f32 %v3220, 1.442695
    %v3222 = vpow.pop %v3221
    %v3223 = vadd.f32 %v3222, 1.0
    %v3224 = vrcp.pop %v3223
    %v3225 = vmul.f32 %v3223, %v3224
    %v3226 = vsub.f32 1.0, %v3225
    %v3227 = vmul.f32 %v3224, %v3226
    %v3228 = vadd.f32 %v3224, %v3227
    %vm3229 = vweird.f32 %v3223
    %vm3230 = vweird.f32 %v3224
    %vm3231 = vmor %vm3229, %vm3230
    %v3232 = vsel %vm3231, %v3224, %v3228
    %v3233 = vand.u32 2147483647, %v3223
    %vm3234 = vcmp.eq.f32.partialorder %v3233, 8.507059e+37
    %v3235 = vand.u32 %v3223, 2147483648
    %v3236 = vor.u32 1.1754944e-38, %v3235
    %v3237 = vsel %vm3234, %v3236, %v3232
    %v3238 = vmul.f32 1.0, %v3237
    %v3239 = vadd.f32 %v361, %v3203
    %v3240 = vxor.u32 %v3239, 2147483648
    %v3241 = vmul.f32 %v3240, 1.442695
    %v3242 = vpow.pop %v3241
    %v3243 = vadd.f32 %v3242, 1.0
    %v3244 = vrcp.pop %v3243
    %v3245 = vmul.f32 %v3243, %v3244
    %v3246 = vsub.f32 1.0, %v3245
    %v3247 = vmul.f32 %v3244, %v3246
    %v3248 = vadd.f32 %v3244, %v3247
    %vm3249 = vweird.f32 %v3243
    %vm3250 = vweird.f32 %v3244
    %vm3251 = vmor %vm3249, %vm3250
    %v3252 = vsel %vm3251, %v3244, %v3248
    %v3253 = vand.u32 2147483647, %v3243
    %vm3254 = vcmp.eq.f32.partialorder %v3253, 8.507059e+37
    %v3255 = vand.u32 %v3243, 2147483648
    %v3256 = vor.u32 1.1754944e-38, %v3255
    %v3257 = vsel %vm3254, %v3256, %v3252
    %v3258 = vmul.f32 1.0, %v3257
    %v3259 = vadd.f32 %v3216, %v244
    %v3260 = vmul.f32 %v3238, %v3259
    %v3261 = vadd.f32 %v390, %v3260
    %v3262 = vtanh.pop %v3261
    %v3263 = vsub.f32 1.0, %v3258
    %v3264 = vmul.f32 %v3263, %v3262
    %v3265 = vmul.f32 %v3258, %v2836
    %v3266 = vadd.f32 %v3264, %v3265
    %v3267 = vpack.c.bf16 %v2924, %v2924
    %3268 = vmatpush.bf16.msra.mxu0 %v835
    %3269 = vmatpush.bf16.msra.mxu0 %v832
    %3270 = vmatpush.bf16.msra.mxu0 %v829
    %3271 = vmatpush.bf16.msra.mxu0 %v826
    %3272 = vmatpush.bf16.msra.mxu0 %v823
    %3273 = vmatpush.bf16.msra.mxu0 %v820
    %3274 = vmatpush.bf16.msra.mxu0 %v817
    %3275 = vmatpush.bf16.msra.mxu0 %v814
    %3276 = vmatmul.bf16.gmra.mxu0 %v3267
    %v3277 = vpop.f32.mrf.mxu0
    %v3278 = vadd.f32 0.0, %v3277
    %v3279 = vpop.f32.mrf.mxu0
    %3280 = vdwg.mxu0
    %3281 = vmatpush.bf16.msra.mxu0 %v836
    %3282 = vmatpush.bf16.msra.mxu0 %v833
    %3283 = vmatpush.bf16.msra.mxu0 %v830
    %3284 = vmatpush.bf16.msra.mxu0 %v827
    %3285 = vmatpush.bf16.msra.mxu0 %v824
    %3286 = vmatpush.bf16.msra.mxu0 %v821
    %3287 = vmatpush.bf16.msra.mxu0 %v818
    %3288 = vmatpush.bf16.msra.mxu0 %v815
    %3289 = vmatmul.bf16.gmra.mxu0 %v3267
    %v3290 = vpop.f32.mrf.mxu0
    %v3291 = vadd.f32 0.0, %v3290
    %v3292 = vpop.f32.mrf.mxu0
    %3293 = vdwg.mxu0
    %3294 = vmatpush.bf16.msra.mxu0 %v837
    %3295 = vmatpush.bf16.msra.mxu0 %v834
    %3296 = vmatpush.bf16.msra.mxu0 %v831
    %3297 = vmatpush.bf16.msra.mxu0 %v828
    %3298 = vmatpush.bf16.msra.mxu0 %v825
    %3299 = vmatpush.bf16.msra.mxu0 %v822
    %3300 = vmatpush.bf16.msra.mxu0 %v819
    %3301 = vmatpush.bf16.msra.mxu0 %v816
    %3302 = vmatmul.bf16.gmra.mxu0 %v3267
    %v3303 = vpop.f32.mrf.mxu0
    %v3304 = vadd.f32 0.0, %v3303
    %v3305 = vpop.f32.mrf.mxu0
    %3306 = vdwg.mxu0
    %v3307 = vadd.f32 %v469, %v3278
    %v3308 = vxor.u32 %v3307, 2147483648
    %v3309 = vmul.f32 %v3308, 1.442695
    %v3310 = vpow.pop %v3309
    %v3311 = vadd.f32 %v3310, 1.0
    %v3312 = vrcp.pop %v3311
    %v3313 = vmul.f32 %v3311, %v3312
    %v3314 = vsub.f32 1.0, %v3313
    %v3315 = vmul.f32 %v3312, %v3314
    %v3316 = vadd.f32 %v3312, %v3315
    %vm3317 = vweird.f32 %v3311
    %vm3318 = vweird.f32 %v3312
    %vm3319 = vmor %vm3317, %vm3318
    %v3320 = vsel %vm3319, %v3312, %v3316
    %v3321 = vand.u32 2147483647, %v3311
    %vm3322 = vcmp.eq.f32.partialorder %v3321, 8.507059e+37
    %v3323 = vand.u32 %v3311, 2147483648
    %v3324 = vor.u32 1.1754944e-38, %v3323
    %v3325 = vsel %vm3322, %v3324, %v3320
    %v3326 = vmul.f32 1.0, %v3325
    %v3327 = vadd.f32 %v493, %v3291
    %v3328 = vxor.u32 %v3327, 2147483648
    %v3329 = vmul.f32 %v3328, 1.442695
    %v3330 = vpow.pop %v3329
    %v3331 = vadd.f32 %v3330, 1.0
    %v3332 = vrcp.pop %v3331
    %v3333 = vmul.f32 %v3331, %v3332
    %v3334 = vsub.f32 1.0, %v3333
    %v3335 = vmul.f32 %v3332, %v3334
    %v3336 = vadd.f32 %v3332, %v3335
    %vm3337 = vweird.f32 %v3331
    %vm3338 = vweird.f32 %v3332
    %vm3339 = vmor %vm3337, %vm3338
    %v3340 = vsel %vm3339, %v3332, %v3336
    %v3341 = vand.u32 2147483647, %v3331
    %vm3342 = vcmp.eq.f32.partialorder %v3341, 8.507059e+37
    %v3343 = vand.u32 %v3331, 2147483648
    %v3344 = vor.u32 1.1754944e-38, %v3343
    %v3345 = vsel %vm3342, %v3344, %v3340
    %v3346 = vmul.f32 1.0, %v3345
    %v3347 = vadd.f32 %v3304, %v246
    %v3348 = vmul.f32 %v3326, %v3347
    %v3349 = vadd.f32 %v517, %v3348
    %v3350 = vtanh.pop %v3349
    %v3351 = vsub.f32 1.0, %v3346
    %v3352 = vmul.f32 %v3351, %v3350
    %v3353 = vmul.f32 %v3346, %v2924
    %v3354 = vadd.f32 %v3352, %v3353
    %3355 = vmatpush.bf16.msra.mxu0 %v1226
    %3356 = vmatpush.bf16.msra.mxu0 %v1223
    %3357 = vmatpush.bf16.msra.mxu0 %v1220
    %3358 = vmatpush.bf16.msra.mxu0 %v1217
    %3359 = vmatpush.bf16.msra.mxu0 %v1214
    %3360 = vmatpush.bf16.msra.mxu0 %v1211
    %3361 = vmatpush.bf16.msra.mxu0 %v1208
    %3362 = vmatpush.bf16.msra.mxu0 %v1205
    %3363 = vmatmul.bf16.gmra.mxu0 %v3179
    %v3364 = vpop.f32.mrf.mxu0
    %v3365 = vadd.f32 %v238, %v3364
    %v3366 = vpop.f32.mrf.mxu0
    %3367 = vdwg.mxu0
    %3368 = vmatpush.bf16.msra.mxu0 %v1227
    %3369 = vmatpush.bf16.msra.mxu0 %v1224
    %3370 = vmatpush.bf16.msra.mxu0 %v1221
    %3371 = vmatpush.bf16.msra.mxu0 %v1218
    %3372 = vmatpush.bf16.msra.mxu0 %v1215
    %3373 = vmatpush.bf16.msra.mxu0 %v1212
    %3374 = vmatpush.bf16.msra.mxu0 %v1209
    %3375 = vmatpush.bf16.msra.mxu0 %v1206
    %3376 = vmatmul.bf16.gmra.mxu0 %v3179
    %v3377 = vpop.f32.mrf.mxu0
    %v3378 = vadd.f32 %v239, %v3377
    %v3379 = vpop.f32.mrf.mxu0
    %3380 = vdwg.mxu0
    %3381 = vmatpush.bf16.msra.mxu0 %v1228
    %3382 = vmatpush.bf16.msra.mxu0 %v1225
    %3383 = vmatpush.bf16.msra.mxu0 %v1222
    %3384 = vmatpush.bf16.msra.mxu0 %v1219
    %3385 = vmatpush.bf16.msra.mxu0 %v1216
    %3386 = vmatpush.bf16.msra.mxu0 %v1213
    %3387 = vmatpush.bf16.msra.mxu0 %v1210
    %3388 = vmatpush.bf16.msra.mxu0 %v1207
    %3389 = vmatmul.bf16.gmra.mxu0 %v3179
    %v3390 = vpop.f32.mrf.mxu0
    %v3391 = vadd.f32 %v240, %v3390
    %v3392 = vpop.f32.mrf.mxu0
    %3393 = vdwg.mxu0
    %v3394 = vpack.c.bf16 %v3051, %v3051
    %3395 = vmatpush.bf16.msra.mxu0 %v1393
    %3396 = vmatpush.bf16.msra.mxu0 %v1390
    %3397 = vmatpush.bf16.msra.mxu0 %v1387
    %3398 = vmatpush.bf16.msra.mxu0 %v1384
    %3399 = vmatpush.bf16.msra.mxu0 %v1381
    %3400 = vmatpush.bf16.msra.mxu0 %v1378
    %3401 = vmatpush.bf16.msra.mxu0 %v1375
    %3402 = vmatpush.bf16.msra.mxu0 %v1372
    %3403 = vmatmul.bf16.gmra.mxu0 %v3394
    %v3404 = vpop.f32.mrf.mxu0
    %v3405 = vadd.f32 0.0, %v3404
    %v3406 = vpop.f32.mrf.mxu0
    %3407 = vdwg.mxu0
    %3408 = vmatpush.bf16.msra.mxu0 %v1394
    %3409 = vmatpush.bf16.msra.mxu0 %v1391
    %3410 = vmatpush.bf16.msra.mxu0 %v1388
    %3411 = vmatpush.bf16.msra.mxu0 %v1385
    %3412 = vmatpush.bf16.msra.mxu0 %v1382
    %3413 = vmatpush.bf16.msra.mxu0 %v1379
    %3414 = vmatpush.bf16.msra.mxu0 %v1376
    %3415 = vmatpush.bf16.msra.mxu0 %v1373
    %3416 = vmatmul.bf16.gmra.mxu0 %v3394
    %v3417 = vpop.f32.mrf.mxu0
    %v3418 = vadd.f32 0.0, %v3417
    %v3419 = vpop.f32.mrf.mxu0
    %3420 = vdwg.mxu0
    %3421 = vmatpush.bf16.msra.mxu0 %v1395
    %3422 = vmatpush.bf16.msra.mxu0 %v1392
    %3423 = vmatpush.bf16.msra.mxu0 %v1389
    %3424 = vmatpush.bf16.msra.mxu0 %v1386
    %3425 = vmatpush.bf16.msra.mxu0 %v1383
    %3426 = vmatpush.bf16.msra.mxu0 %v1380
    %3427 = vmatpush.bf16.msra.mxu0 %v1377
    %3428 = vmatpush.bf16.msra.mxu0 %v1374
    %3429 = vmatmul.bf16.gmra.mxu0 %v3394
    %v3430 = vpop.f32.mrf.mxu0
    %v3431 = vadd.f32 0.0, %v3430
    %v3432 = vpop.f32.mrf.mxu0
    %3433 = vdwg.mxu0
    %v3434 = vadd.f32 %v3365, %v3405
    %v3435 = vxor.u32 %v3434, 2147483648
    %v3436 = vmul.f32 %v3435, 1.442695
    %v3437 = vpow.pop %v3436
    %v3438 = vadd.f32 %v3437, 1.0
    %v3439 = vrcp.pop %v3438
    %v3440 = vmul.f32 %v3438, %v3439
    %v3441 = vsub.f32 1.0, %v3440
    %v3442 = vmul.f32 %v3439, %v3441
    %v3443 = vadd.f32 %v3439, %v3442
    %vm3444 = vweird.f32 %v3438
    %vm3445 = vweird.f32 %v3439
    %vm3446 = vmor %vm3444, %vm3445
    %v3447 = vsel %vm3446, %v3439, %v3443
    %v3448 = vand.u32 2147483647, %v3438
    %vm3449 = vcmp.eq.f32.partialorder %v3448, 8.507059e+37
    %v3450 = vand.u32 %v3438, 2147483648
    %v3451 = vor.u32 1.1754944e-38, %v3450
    %v3452 = vsel %vm3449, %v3451, %v3447
    %v3453 = vmul.f32 1.0, %v3452
    %v3454 = vadd.f32 %v3378, %v3418
    %v3455 = vxor.u32 %v3454, 2147483648
    %v3456 = vmul.f32 %v3455, 1.442695
    %v3457 = vpow.pop %v3456
    %v3458 = vadd.f32 %v3457, 1.0
    %v3459 = vrcp.pop %v3458
    %v3460 = vmul.f32 %v3458, %v3459
    %v3461 = vsub.f32 1.0, %v3460
    %v3462 = vmul.f32 %v3459, %v3461
    %v3463 = vadd.f32 %v3459, %v3462
    %vm3464 = vweird.f32 %v3458
    %vm3465 = vweird.f32 %v3459
    %vm3466 = vmor %vm3464, %vm3465
    %v3467 = vsel %vm3466, %v3459, %v3463
    %v3468 = vand.u32 2147483647, %v3458
    %vm3469 = vcmp.eq.f32.partialorder %v3468, 8.507059e+37
    %v3470 = vand.u32 %v3458, 2147483648
    %v3471 = vor.u32 1.1754944e-38, %v3470
    %v3472 = vsel %vm3469, %v3471, %v3467
    %v3473 = vmul.f32 1.0, %v3472
    %v3474 = vadd.f32 %v3431, %v245
    %v3475 = vmul.f32 %v3453, %v3474
    %v3476 = vadd.f32 %v3391, %v3475
    %v3477 = vtanh.pop %v3476
    %v3478 = vsub.f32 1.0, %v3473
    %v3479 = vmul.f32 %v3478, %v3477
    %v3480 = vmul.f32 %v3473, %v3051
    %v3481 = vadd.f32 %v3479, %v3480
    %3482 = vmatpush.bf16.msra.mxu0 %v1608
    %3483 = vmatpush.bf16.msra.mxu0 %v1605
    %3484 = vmatpush.bf16.msra.mxu0 %v1602
    %3485 = vmatpush.bf16.msra.mxu0 %v1599
    %3486 = vmatpush.bf16.msra.mxu0 %v1596
    %3487 = vmatpush.bf16.msra.mxu0 %v1593
    %3488 = vmatpush.bf16.msra.mxu0 %v1590
    %3489 = vmatpush.bf16.msra.mxu0 %v1587
    %3490 = vmatmul.bf16.gmra.mxu0 %v3267
    %v3491 = vpop.f32.mrf.mxu0
    %v3492 = vadd.f32 %v241, %v3491
    %v3493 = vpop.f32.mrf.mxu0
    %3494 = vdwg.mxu0
    %3495 = vmatpush.bf16.msra.mxu0 %v1609
    %3496 = vmatpush.bf16.msra.mxu0 %v1606
    %3497 = vmatpush.bf16.msra.mxu0 %v1603
    %3498 = vmatpush.bf16.msra.mxu0 %v1600
    %3499 = vmatpush.bf16.msra.mxu0 %v1597
    %3500 = vmatpush.bf16.msra.mxu0 %v1594
    %3501 = vmatpush.bf16.msra.mxu0 %v1591
    %3502 = vmatpush.bf16.msra.mxu0 %v1588
    %3503 = vmatmul.bf16.gmra.mxu0 %v3267
    %v3504 = vpop.f32.mrf.mxu0
    %v3505 = vadd.f32 %v242, %v3504
    %v3506 = vpop.f32.mrf.mxu0
    %3507 = vdwg.mxu0
    %3508 = vmatpush.bf16.msra.mxu0 %v1610
    %3509 = vmatpush.bf16.msra.mxu0 %v1607
    %3510 = vmatpush.bf16.msra.mxu0 %v1604
    %3511 = vmatpush.bf16.msra.mxu0 %v1601
    %3512 = vmatpush.bf16.msra.mxu0 %v1598
    %3513 = vmatpush.bf16.msra.mxu0 %v1595
    %3514 = vmatpush.bf16.msra.mxu0 %v1592
    %3515 = vmatpush.bf16.msra.mxu0 %v1589
    %3516 = vmatmul.bf16.gmra.mxu0 %v3267
    %v3517 = vpop.f32.mrf.mxu0
    %v3518 = vadd.f32 %v243, %v3517
    %v3519 = vpop.f32.mrf.mxu0
    %3520 = vdwg.mxu0
    %v3521 = vpack.c.bf16 %v3178, %v3178
    %3522 = vmatpush.bf16.msra.mxu0 %v1775
    %3523 = vmatpush.bf16.msra.mxu0 %v1772
    %3524 = vmatpush.bf16.msra.mxu0 %v1769
    %3525 = vmatpush.bf16.msra.mxu0 %v1766
    %3526 = vmatpush.bf16.msra.mxu0 %v1763
    %3527 = vmatpush.bf16.msra.mxu0 %v1760
    %3528 = vmatpush.bf16.msra.mxu0 %v1757
    %3529 = vmatpush.bf16.msra.mxu0 %v1754
    %3530 = vmatmul.bf16.gmra.mxu0 %v3521
    %v3531 = vpop.f32.mrf.mxu0
    %v3532 = vadd.f32 0.0, %v3531
    %v3533 = vpop.f32.mrf.mxu0
    %3534 = vdwg.mxu0
    %3535 = vmatpush.bf16.msra.mxu0 %v1776
    %3536 = vmatpush.bf16.msra.mxu0 %v1773
    %3537 = vmatpush.bf16.msra.mxu0 %v1770
    %3538 = vmatpush.bf16.msra.mxu0 %v1767
    %3539 = vmatpush.bf16.msra.mxu0 %v1764
    %3540 = vmatpush.bf16.msra.mxu0 %v1761
    %3541 = vmatpush.bf16.msra.mxu0 %v1758
    %3542 = vmatpush.bf16.msra.mxu0 %v1755
    %3543 = vmatmul.bf16.gmra.mxu0 %v3521
    %v3544 = vpop.f32.mrf.mxu0
    %v3545 = vadd.f32 0.0, %v3544
    %v3546 = vpop.f32.mrf.mxu0
    %3547 = vdwg.mxu0
    %3548 = vmatpush.bf16.msra.mxu0 %v1777
    %3549 = vmatpush.bf16.msra.mxu0 %v1774
    %3550 = vmatpush.bf16.msra.mxu0 %v1771
    %3551 = vmatpush.bf16.msra.mxu0 %v1768
    %3552 = vmatpush.bf16.msra.mxu0 %v1765
    %3553 = vmatpush.bf16.msra.mxu0 %v1762
    %3554 = vmatpush.bf16.msra.mxu0 %v1759
    %3555 = vmatpush.bf16.msra.mxu0 %v1756
    %3556 = vmatmul.bf16.gmra.mxu0 %v3521
    %v3557 = vpop.f32.mrf.mxu0
    %v3558 = vadd.f32 0.0, %v3557
    %v3559 = vpop.f32.mrf.mxu0
    %3560 = vdwg.mxu0
    %v3561 = vadd.f32 %v3492, %v3532
    %v3562 = vxor.u32 %v3561, 2147483648
    %v3563 = vmul.f32 %v3562, 1.442695
    %v3564 = vpow.pop %v3563
    %v3565 = vadd.f32 %v3564, 1.0
    %v3566 = vrcp.pop %v3565
    %v3567 = vmul.f32 %v3565, %v3566
    %v3568 = vsub.f32 1.0, %v3567
    %v3569 = vmul.f32 %v3566, %v3568
    %v3570 = vadd.f32 %v3566, %v3569
    %vm3571 = vweird.f32 %v3565
    %vm3572 = vweird.f32 %v3566
    %vm3573 = vmor %vm3571, %vm3572
    %v3574 = vsel %vm3573, %v3566, %v3570
    %v3575 = vand.u32 2147483647, %v3565
    %vm3576 = vcmp.eq.f32.partialorder %v3575, 8.507059e+37
    %v3577 = vand.u32 %v3565, 2147483648
    %v3578 = vor.u32 1.1754944e-38, %v3577
    %v3579 = vsel %vm3576, %v3578, %v3574
    %v3580 = vmul.f32 1.0, %v3579
    %v3581 = vadd.f32 %v3505, %v3545
    %v3582 = vxor.u32 %v3581, 2147483648
    %v3583 = vmul.f32 %v3582, 1.442695
    %v3584 = vpow.pop %v3583
    %v3585 = vadd.f32 %v3584, 1.0
    %v3586 = vrcp.pop %v3585
    %v3587 = vmul.f32 %v3585, %v3586
    %v3588 = vsub.f32 1.0, %v3587
    %v3589 = vmul.f32 %v3586, %v3588
    %v3590 = vadd.f32 %v3586, %v3589
    %vm3591 = vweird.f32 %v3585
    %vm3592 = vweird.f32 %v3586
    %vm3593 = vmor %vm3591, %vm3592
    %v3594 = vsel %vm3593, %v3586, %v3590
    %v3595 = vand.u32 2147483647, %v3585
    %vm3596 = vcmp.eq.f32.partialorder %v3595, 8.507059e+37
    %v3597 = vand.u32 %v3585, 2147483648
    %v3598 = vor.u32 1.1754944e-38, %v3597
    %v3599 = vsel %vm3596, %v3598, %v3594
    %v3600 = vmul.f32 1.0, %v3599
    %v3601 = vadd.f32 %v3558, %v247
    %v3602 = vmul.f32 %v3580, %v3601
    %v3603 = vadd.f32 %v3518, %v3602
    %v3604 = vtanh.pop %v3603
    %v3605 = vsub.f32 1.0, %v3600
    %v3606 = vmul.f32 %v3605, %v3604
    %v3607 = vmul.f32 %v3600, %v3178
    %v3608 = vadd.f32 %v3606, %v3607
    %v3609 = vpack.c.bf16 %v3266, %v3266
    %3610 = vmatpush.bf16.msra.mxu0 %v620
    %3611 = vmatpush.bf16.msra.mxu0 %v617
    %3612 = vmatpush.bf16.msra.mxu0 %v614
    %3613 = vmatpush.bf16.msra.mxu0 %v611
    %3614 = vmatpush.bf16.msra.mxu0 %v608
    %3615 = vmatpush.bf16.msra.mxu0 %v605
    %3616 = vmatpush.bf16.msra.mxu0 %v602
    %3617 = vmatpush.bf16.msra.mxu0 %v599
    %3618 = vmatmul.bf16.gmra.mxu0 %v3609
    %v3619 = vpop.f32.mrf.mxu0
    %v3620 = vadd.f32 0.0, %v3619
    %v3621 = vpop.f32.mrf.mxu0
    %3622 = vdwg.mxu0
    %3623 = vmatpush.bf16.msra.mxu0 %v621
    %3624 = vmatpush.bf16.msra.mxu0 %v618
    %3625 = vmatpush.bf16.msra.mxu0 %v615
    %3626 = vmatpush.bf16.msra.mxu0 %v612
    %3627 = vmatpush.bf16.msra.mxu0 %v609
    %3628 = vmatpush.bf16.msra.mxu0 %v606
    %3629 = vmatpush.bf16.msra.mxu0 %v603
    %3630 = vmatpush.bf16.msra.mxu0 %v600
    %3631 = vmatmul.bf16.gmra.mxu0 %v3609
    %v3632 = vpop.f32.mrf.mxu0
    %v3633 = vadd.f32 0.0, %v3632
    %v3634 = vpop.f32.mrf.mxu0
    %3635 = vdwg.mxu0
    %3636 = vmatpush.bf16.msra.mxu0 %v622
    %3637 = vmatpush.bf16.msra.mxu0 %v619
    %3638 = vmatpush.bf16.msra.mxu0 %v616
    %3639 = vmatpush.bf16.msra.mxu0 %v613
    %3640 = vmatpush.bf16.msra.mxu0 %v610
    %3641 = vmatpush.bf16.msra.mxu0 %v607
    %3642 = vmatpush.bf16.msra.mxu0 %v604
    %3643 = vmatpush.bf16.msra.mxu0 %v601
    %3644 = vmatmul.bf16.gmra.mxu0 %v3609
    %v3645 = vpop.f32.mrf.mxu0
    %v3646 = vadd.f32 0.0, %v3645
    %v3647 = vpop.f32.mrf.mxu0
    %3648 = vdwg.mxu0
    %v3649 = vadd.f32 %v335, %v3620
    %v3650 = vxor.u32 %v3649, 2147483648
    %v3651 = vmul.f32 %v3650, 1.442695
    %v3652 = vpow.pop %v3651
    %v3653 = vadd.f32 %v3652, 1.0
    %v3654 = vrcp.pop %v3653
    %v3655 = vmul.f32 %v3653, %v3654
    %v3656 = vsub.f32 1.0, %v3655
    %v3657 = vmul.f32 %v3654, %v3656
    %v3658 = vadd.f32 %v3654, %v3657
    %vm3659 = vweird.f32 %v3653
    %vm3660 = vweird.f32 %v3654
    %vm3661 = vmor %vm3659, %vm3660
    %v3662 = vsel %vm3661, %v3654, %v3658
    %v3663 = vand.u32 2147483647, %v3653
    %vm3664 = vcmp.eq.f32.partialorder %v3663, 8.507059e+37
    %v3665 = vand.u32 %v3653, 2147483648
    %v3666 = vor.u32 1.1754944e-38, %v3665
    %v3667 = vsel %vm3664, %v3666, %v3662
    %v3668 = vmul.f32 1.0, %v3667
    %v3669 = vadd.f32 %v364, %v3633
    %v3670 = vxor.u32 %v3669, 2147483648
    %v3671 = vmul.f32 %v3670, 1.442695
    %v3672 = vpow.pop %v3671
    %v3673 = vadd.f32 %v3672, 1.0
    %v3674 = vrcp.pop %v3673
    %v3675 = vmul.f32 %v3673, %v3674
    %v3676 = vsub.f32 1.0, %v3675
    %v3677 = vmul.f32 %v3674, %v3676
    %v3678 = vadd.f32 %v3674, %v3677
    %vm3679 = vweird.f32 %v3673
    %vm3680 = vweird.f32 %v3674
    %vm3681 = vmor %vm3679, %vm3680
    %v3682 = vsel %vm3681, %v3674, %v3678
    %v3683 = vand.u32 2147483647, %v3673
    %vm3684 = vcmp.eq.f32.partialorder %v3683, 8.507059e+37
    %v3685 = vand.u32 %v3673, 2147483648
    %v3686 = vor.u32 1.1754944e-38, %v3685
    %v3687 = vsel %vm3684, %v3686, %v3682
    %v3688 = vmul.f32 1.0, %v3687
    %v3689 = vadd.f32 %v3646, %v244
    %v3690 = vmul.f32 %v3668, %v3689
    %v3691 = vadd.f32 %v393, %v3690
    %v3692 = vtanh.pop %v3691
    %v3693 = vsub.f32 1.0, %v3688
    %v3694 = vmul.f32 %v3693, %v3692
    %v3695 = vmul.f32 %v3688, %v3266
    %v3696 = vadd.f32 %v3694, %v3695
    %3697 = vmatpush.bf16.msra.mxu0 %v1226
    %3698 = vmatpush.bf16.msra.mxu0 %v1223
    %3699 = vmatpush.bf16.msra.mxu0 %v1220
    %3700 = vmatpush.bf16.msra.mxu0 %v1217
    %3701 = vmatpush.bf16.msra.mxu0 %v1214
    %3702 = vmatpush.bf16.msra.mxu0 %v1211
    %3703 = vmatpush.bf16.msra.mxu0 %v1208
    %3704 = vmatpush.bf16.msra.mxu0 %v1205
    %3705 = vmatmul.bf16.gmra.mxu0 %v3609
    %v3706 = vpop.f32.mrf.mxu0
    %v3707 = vadd.f32 %v238, %v3706
    %v3708 = vpop.f32.mrf.mxu0
    %3709 = vdwg.mxu0
    %3710 = vmatpush.bf16.msra.mxu0 %v1227
    %3711 = vmatpush.bf16.msra.mxu0 %v1224
    %3712 = vmatpush.bf16.msra.mxu0 %v1221
    %3713 = vmatpush.bf16.msra.mxu0 %v1218
    %3714 = vmatpush.bf16.msra.mxu0 %v1215
    %3715 = vmatpush.bf16.msra.mxu0 %v1212
    %3716 = vmatpush.bf16.msra.mxu0 %v1209
    %3717 = vmatpush.bf16.msra.mxu0 %v1206
    %3718 = vmatmul.bf16.gmra.mxu0 %v3609
    %v3719 = vpop.f32.mrf.mxu0
    %v3720 = vadd.f32 %v239, %v3719
    %v3721 = vpop.f32.mrf.mxu0
    %3722 = vdwg.mxu0
    %3723 = vmatpush.bf16.msra.mxu0 %v1228
    %3724 = vmatpush.bf16.msra.mxu0 %v1225
    %3725 = vmatpush.bf16.msra.mxu0 %v1222
    %3726 = vmatpush.bf16.msra.mxu0 %v1219
    %3727 = vmatpush.bf16.msra.mxu0 %v1216
    %3728 = vmatpush.bf16.msra.mxu0 %v1213
    %3729 = vmatpush.bf16.msra.mxu0 %v1210
    %3730 = vmatpush.bf16.msra.mxu0 %v1207
    %3731 = vmatmul.bf16.gmra.mxu0 %v3609
    %v3732 = vpop.f32.mrf.mxu0
    %v3733 = vadd.f32 %v240, %v3732
    %v3734 = vpop.f32.mrf.mxu0
    %3735 = vdwg.mxu0
    %v3736 = vpack.c.bf16 %v3481, %v3481
    %3737 = vmatpush.bf16.msra.mxu0 %v1393
    %3738 = vmatpush.bf16.msra.mxu0 %v1390
    %3739 = vmatpush.bf16.msra.mxu0 %v1387
    %3740 = vmatpush.bf16.msra.mxu0 %v1384
    %3741 = vmatpush.bf16.msra.mxu0 %v1381
    %3742 = vmatpush.bf16.msra.mxu0 %v1378
    %3743 = vmatpush.bf16.msra.mxu0 %v1375
    %3744 = vmatpush.bf16.msra.mxu0 %v1372
    %3745 = vmatmul.bf16.gmra.mxu0 %v3736
    %v3746 = vpop.f32.mrf.mxu0
    %v3747 = vadd.f32 0.0, %v3746
    %v3748 = vpop.f32.mrf.mxu0
    %3749 = vdwg.mxu0
    %3750 = vmatpush.bf16.msra.mxu0 %v1394
    %3751 = vmatpush.bf16.msra.mxu0 %v1391
    %3752 = vmatpush.bf16.msra.mxu0 %v1388
    %3753 = vmatpush.bf16.msra.mxu0 %v1385
    %3754 = vmatpush.bf16.msra.mxu0 %v1382
    %3755 = vmatpush.bf16.msra.mxu0 %v1379
    %3756 = vmatpush.bf16.msra.mxu0 %v1376
    %3757 = vmatpush.bf16.msra.mxu0 %v1373
    %3758 = vmatmul.bf16.gmra.mxu0 %v3736
    %v3759 = vpop.f32.mrf.mxu0
    %v3760 = vadd.f32 0.0, %v3759
    %v3761 = vpop.f32.mrf.mxu0
    %3762 = vdwg.mxu0
    %3763 = vmatpush.bf16.msra.mxu0 %v1395
    %3764 = vmatpush.bf16.msra.mxu0 %v1392
    %3765 = vmatpush.bf16.msra.mxu0 %v1389
    %3766 = vmatpush.bf16.msra.mxu0 %v1386
    %3767 = vmatpush.bf16.msra.mxu0 %v1383
    %3768 = vmatpush.bf16.msra.mxu0 %v1380
    %3769 = vmatpush.bf16.msra.mxu0 %v1377
    %3770 = vmatpush.bf16.msra.mxu0 %v1374
    %3771 = vmatmul.bf16.gmra.mxu0 %v3736
    %v3772 = vpop.f32.mrf.mxu0
    %v3773 = vadd.f32 0.0, %v3772
    %v3774 = vpop.f32.mrf.mxu0
    %3775 = vdwg.mxu0
    %v3776 = vadd.f32 %v3707, %v3747
    %v3777 = vxor.u32 %v3776, 2147483648
    %v3778 = vmul.f32 %v3777, 1.442695
    %v3779 = vpow.pop %v3778
    %v3780 = vadd.f32 %v3779, 1.0
    %v3781 = vrcp.pop %v3780
    %v3782 = vmul.f32 %v3780, %v3781
    %v3783 = vsub.f32 1.0, %v3782
    %v3784 = vmul.f32 %v3781, %v3783
    %v3785 = vadd.f32 %v3781, %v3784
    %vm3786 = vweird.f32 %v3780
    %vm3787 = vweird.f32 %v3781
    %vm3788 = vmor %vm3786, %vm3787
    %v3789 = vsel %vm3788, %v3781, %v3785
    %v3790 = vand.u32 2147483647, %v3780
    %vm3791 = vcmp.eq.f32.partialorder %v3790, 8.507059e+37
    %v3792 = vand.u32 %v3780, 2147483648
    %v3793 = vor.u32 1.1754944e-38, %v3792
    %v3794 = vsel %vm3791, %v3793, %v3789
    %v3795 = vmul.f32 1.0, %v3794
    %v3796 = vadd.f32 %v3720, %v3760
    %v3797 = vxor.u32 %v3796, 2147483648
    %v3798 = vmul.f32 %v3797, 1.442695
    %v3799 = vpow.pop %v3798
    %v3800 = vadd.f32 %v3799, 1.0
    %v3801 = vrcp.pop %v3800
    %v3802 = vmul.f32 %v3800, %v3801
    %v3803 = vsub.f32 1.0, %v3802
    %v3804 = vmul.f32 %v3801, %v3803
    %v3805 = vadd.f32 %v3801, %v3804
    %vm3806 = vweird.f32 %v3800
    %vm3807 = vweird.f32 %v3801
    %vm3808 = vmor %vm3806, %vm3807
    %v3809 = vsel %vm3808, %v3801, %v3805
    %v3810 = vand.u32 2147483647, %v3800
    %vm3811 = vcmp.eq.f32.partialorder %v3810, 8.507059e+37
    %v3812 = vand.u32 %v3800, 2147483648
    %v3813 = vor.u32 1.1754944e-38, %v3812
    %v3814 = vsel %vm3811, %v3813, %v3809
    %v3815 = vmul.f32 1.0, %v3814
    %v3816 = vadd.f32 %v3773, %v245
    %v3817 = vmul.f32 %v3795, %v3816
    %v3818 = vadd.f32 %v3733, %v3817
    %v3819 = vtanh.pop %v3818
    %v3820 = vsub.f32 1.0, %v3815
    %v3821 = vmul.f32 %v3820, %v3819
    %v3822 = vmul.f32 %v3815, %v3481
    %v3823 = vadd.f32 %v3821, %v3822
    %v3824 = vpack.c.bf16 %v3354, %v3354
    %3825 = vmatpush.bf16.msra.mxu0 %v1608
    %3826 = vmatpush.bf16.msra.mxu0 %v1605
    %3827 = vmatpush.bf16.msra.mxu0 %v1602
    %3828 = vmatpush.bf16.msra.mxu0 %v1599
    %3829 = vmatpush.bf16.msra.mxu0 %v1596
    %3830 = vmatpush.bf16.msra.mxu0 %v1593
    %3831 = vmatpush.bf16.msra.mxu0 %v1590
    %3832 = vmatpush.bf16.msra.mxu0 %v1587
    %3833 = vmatmul.bf16.gmra.mxu0 %v3824
    %v3834 = vpop.f32.mrf.mxu0
    %v3835 = vadd.f32 %v241, %v3834
    %v3836 = vpop.f32.mrf.mxu0
    %3837 = vdwg.mxu0
    %3838 = vmatpush.bf16.msra.mxu0 %v1609
    %3839 = vmatpush.bf16.msra.mxu0 %v1606
    %3840 = vmatpush.bf16.msra.mxu0 %v1603
    %3841 = vmatpush.bf16.msra.mxu0 %v1600
    %3842 = vmatpush.bf16.msra.mxu0 %v1597
    %3843 = vmatpush.bf16.msra.mxu0 %v1594
    %3844 = vmatpush.bf16.msra.mxu0 %v1591
    %3845 = vmatpush.bf16.msra.mxu0 %v1588
    %3846 = vmatmul.bf16.gmra.mxu0 %v3824
    %v3847 = vpop.f32.mrf.mxu0
    %v3848 = vadd.f32 %v242, %v3847
    %v3849 = vpop.f32.mrf.mxu0
    %3850 = vdwg.mxu0
    %3851 = vmatpush.bf16.msra.mxu0 %v1610
    %3852 = vmatpush.bf16.msra.mxu0 %v1607
    %3853 = vmatpush.bf16.msra.mxu0 %v1604
    %3854 = vmatpush.bf16.msra.mxu0 %v1601
    %3855 = vmatpush.bf16.msra.mxu0 %v1598
    %3856 = vmatpush.bf16.msra.mxu0 %v1595
    %3857 = vmatpush.bf16.msra.mxu0 %v1592
    %3858 = vmatpush.bf16.msra.mxu0 %v1589
    %3859 = vmatmul.bf16.gmra.mxu0 %v3824
    %v3860 = vpop.f32.mrf.mxu0
    %v3861 = vadd.f32 %v243, %v3860
    %v3862 = vpop.f32.mrf.mxu0
    %3863 = vdwg.mxu0
    %v3864 = vpack.c.bf16 %v3608, %v3608
    %3865 = vmatpush.bf16.msra.mxu0 %v1775
    %3866 = vmatpush.bf16.msra.mxu0 %v1772
    %3867 = vmatpush.bf16.msra.mxu0 %v1769
    %3868 = vmatpush.bf16.msra.mxu0 %v1766
    %3869 = vmatpush.bf16.msra.mxu0 %v1763
    %3870 = vmatpush.bf16.msra.mxu0 %v1760
    %3871 = vmatpush.bf16.msra.mxu0 %v1757
    %3872 = vmatpush.bf16.msra.mxu0 %v1754
    %3873 = vmatmul.bf16.gmra.mxu0 %v3864
    %v3874 = vpop.f32.mrf.mxu0
    %v3875 = vadd.f32 0.0, %v3874
    %v3876 = vpop.f32.mrf.mxu0
    %3877 = vdwg.mxu0
    %3878 = vmatpush.bf16.msra.mxu0 %v1776
    %3879 = vmatpush.bf16.msra.mxu0 %v1773
    %3880 = vmatpush.bf16.msra.mxu0 %v1770
    %3881 = vmatpush.bf16.msra.mxu0 %v1767
    %3882 = vmatpush.bf16.msra.mxu0 %v1764
    %3883 = vmatpush.bf16.msra.mxu0 %v1761
    %3884 = vmatpush.bf16.msra.mxu0 %v1758
    %3885 = vmatpush.bf16.msra.mxu0 %v1755
    %3886 = vmatmul.bf16.gmra.mxu0 %v3864
    %v3887 = vpop.f32.mrf.mxu0
    %v3888 = vadd.f32 0.0, %v3887
    %v3889 = vpop.f32.mrf.mxu0
    %3890 = vdwg.mxu0
    %3891 = vmatpush.bf16.msra.mxu0 %v1777
    %3892 = vmatpush.bf16.msra.mxu0 %v1774
    %3893 = vmatpush.bf16.msra.mxu0 %v1771
    %3894 = vmatpush.bf16.msra.mxu0 %v1768
    %3895 = vmatpush.bf16.msra.mxu0 %v1765
    %3896 = vmatpush.bf16.msra.mxu0 %v1762
    %3897 = vmatpush.bf16.msra.mxu0 %v1759
    %3898 = vmatpush.bf16.msra.mxu0 %v1756
    %3899 = vmatmul.bf16.gmra.mxu0 %v3864
    %v3900 = vpop.f32.mrf.mxu0
    %v3901 = vadd.f32 0.0, %v3900
    %v3902 = vpop.f32.mrf.mxu0
    %3903 = vdwg.mxu0
    %v3904 = vadd.f32 %v3835, %v3875
    %v3905 = vxor.u32 %v3904, 2147483648
    %v3906 = vmul.f32 %v3905, 1.442695
    %v3907 = vpow.pop %v3906
    %v3908 = vadd.f32 %v3907, 1.0
    %v3909 = vrcp.pop %v3908
    %v3910 = vmul.f32 %v3908, %v3909
    %v3911 = vsub.f32 1.0, %v3910
    %v3912 = vmul.f32 %v3909, %v3911
    %v3913 = vadd.f32 %v3909, %v3912
    %vm3914 = vweird.f32 %v3908
    %vm3915 = vweird.f32 %v3909
    %vm3916 = vmor %vm3914, %vm3915
    %v3917 = vsel %vm3916, %v3909, %v3913
    %v3918 = vand.u32 2147483647, %v3908
    %vm3919 = vcmp.eq.f32.partialorder %v3918, 8.507059e+37
    %v3920 = vand.u32 %v3908, 2147483648
    %v3921 = vor.u32 1.1754944e-38, %v3920
    %v3922 = vsel %vm3919, %v3921, %v3917
    %v3923 = vmul.f32 1.0, %v3922
    %v3924 = vadd.f32 %v3848, %v3888
    %v3925 = vxor.u32 %v3924, 2147483648
    %v3926 = vmul.f32 %v3925, 1.442695
    %v3927 = vpow.pop %v3926
    %v3928 = vadd.f32 %v3927, 1.0
    %v3929 = vrcp.pop %v3928
    %v3930 = vmul.f32 %v3928, %v3929
    %v3931 = vsub.f32 1.0, %v3930
    %v3932 = vmul.f32 %v3929, %v3931
    %v3933 = vadd.f32 %v3929, %v3932
    %vm3934 = vweird.f32 %v3928
    %vm3935 = vweird.f32 %v3929
    %vm3936 = vmor %vm3934, %vm3935
    %v3937 = vsel %vm3936, %v3929, %v3933
    %v3938 = vand.u32 2147483647, %v3928
    %vm3939 = vcmp.eq.f32.partialorder %v3938, 8.507059e+37
    %v3940 = vand.u32 %v3928, 2147483648
    %v3941 = vor.u32 1.1754944e-38, %v3940
    %v3942 = vsel %vm3939, %v3941, %v3937
    %v3943 = vmul.f32 1.0, %v3942
    %v3944 = vadd.f32 %v3901, %v247
    %v3945 = vmul.f32 %v3923, %v3944
    %v3946 = vadd.f32 %v3861, %v3945
    %v3947 = vtanh.pop %v3946
    %v3948 = vsub.f32 1.0, %v3943
    %v3949 = vmul.f32 %v3948, %v3947
    %v3950 = vmul.f32 %v3943, %v3608
    %v3951 = vadd.f32 %v3949, %v3950
    %v3952 = vpack.c.bf16 %v3696, %v3696
    %3953 = vmatpush.bf16.msra.mxu0 %v620
    %3954 = vmatpush.bf16.msra.mxu0 %v617
    %3955 = vmatpush.bf16.msra.mxu0 %v614
    %3956 = vmatpush.bf16.msra.mxu0 %v611
    %3957 = vmatpush.bf16.msra.mxu0 %v608
    %3958 = vmatpush.bf16.msra.mxu0 %v605
    %3959 = vmatpush.bf16.msra.mxu0 %v602
    %3960 = vmatpush.bf16.msra.mxu0 %v599
    %3961 = vmatmul.bf16.gmra.mxu0 %v3952
    %v3962 = vpop.f32.mrf.mxu0
    %v3963 = vadd.f32 0.0, %v3962
    %v3964 = vpop.f32.mrf.mxu0
    %3965 = vdwg.mxu0
    %3966 = vmatpush.bf16.msra.mxu0 %v621
    %3967 = vmatpush.bf16.msra.mxu0 %v618
    %3968 = vmatpush.bf16.msra.mxu0 %v615
    %3969 = vmatpush.bf16.msra.mxu0 %v612
    %3970 = vmatpush.bf16.msra.mxu0 %v609
    %3971 = vmatpush.bf16.msra.mxu0 %v606
    %3972 = vmatpush.bf16.msra.mxu0 %v603
    %3973 = vmatpush.bf16.msra.mxu0 %v600
    %3974 = vmatmul.bf16.gmra.mxu0 %v3952
    %v3975 = vpop.f32.mrf.mxu0
    %v3976 = vadd.f32 0.0, %v3975
    %v3977 = vpop.f32.mrf.mxu0
    %3978 = vdwg.mxu0
    %3979 = vmatpush.bf16.msra.mxu0 %v622
    %3980 = vmatpush.bf16.msra.mxu0 %v619
    %3981 = vmatpush.bf16.msra.mxu0 %v616
    %3982 = vmatpush.bf16.msra.mxu0 %v613
    %3983 = vmatpush.bf16.msra.mxu0 %v610
    %3984 = vmatpush.bf16.msra.mxu0 %v607
    %3985 = vmatpush.bf16.msra.mxu0 %v604
    %3986 = vmatpush.bf16.msra.mxu0 %v601
    %3987 = vmatmul.bf16.gmra.mxu0 %v3952
    %v3988 = vpop.f32.mrf.mxu0
    %v3989 = vadd.f32 0.0, %v3988
    %v3990 = vpop.f32.mrf.mxu0
    %3991 = vdwg.mxu0
    %v3992 = vadd.f32 %v337, %v3963
    %v3993 = vxor.u32 %v3992, 2147483648
    %v3994 = vmul.f32 %v3993, 1.442695
    %v3995 = vpow.pop %v3994
    %v3996 = vadd.f32 %v3995, 1.0
    %v3997 = vrcp.pop %v3996
    %v3998 = vmul.f32 %v3996, %v3997
    %v3999 = vsub.f32 1.0, %v3998
    %v4000 = vmul.f32 %v3997, %v3999
    %v4001 = vadd.f32 %v3997, %v4000
    %vm4002 = vweird.f32 %v3996
    %vm4003 = vweird.f32 %v3997
    %vm4004 = vmor %vm4002, %vm4003
    %v4005 = vsel %vm4004, %v3997, %v4001
    %v4006 = vand.u32 2147483647, %v3996
    %vm4007 = vcmp.eq.f32.partialorder %v4006, 8.507059e+37
    %v4008 = vand.u32 %v3996, 2147483648
    %v4009 = vor.u32 1.1754944e-38, %v4008
    %v4010 = vsel %vm4007, %v4009, %v4005
    %v4011 = vmul.f32 1.0, %v4010
    %v4012 = vadd.f32 %v366, %v3976
    %v4013 = vxor.u32 %v4012, 2147483648
    %v4014 = vmul.f32 %v4013, 1.442695
    %v4015 = vpow.pop %v4014
    %v4016 = vadd.f32 %v4015, 1.0
    %v4017 = vrcp.pop %v4016
    %v4018 = vmul.f32 %v4016, %v4017
    %v4019 = vsub.f32 1.0, %v4018
    %v4020 = vmul.f32 %v4017, %v4019
    %v4021 = vadd.f32 %v4017, %v4020
    %vm4022 = vweird.f32 %v4016
    %vm4023 = vweird.f32 %v4017
    %vm4024 = vmor %vm4022, %vm4023
    %v4025 = vsel %vm4024, %v4017, %v4021
    %v4026 = vand.u32 2147483647, %v4016
    %vm4027 = vcmp.eq.f32.partialorder %v4026, 8.507059e+37
    %v4028 = vand.u32 %v4016, 2147483648
    %v4029 = vor.u32 1.1754944e-38, %v4028
    %v4030 = vsel %vm4027, %v4029, %v4025
    %v4031 = vmul.f32 1.0, %v4030
    %v4032 = vadd.f32 %v3989, %v244
    %v4033 = vmul.f32 %v4011, %v4032
    %v4034 = vadd.f32 %v395, %v4033
    %v4035 = vtanh.pop %v4034
    %v4036 = vsub.f32 1.0, %v4031
    %v4037 = vmul.f32 %v4036, %v4035
    %v4038 = vmul.f32 %v4031, %v3696
    %v4039 = vadd.f32 %v4037, %v4038
    %4040 = vmatpush.bf16.msra.mxu0 %v1226
    %4041 = vmatpush.bf16.msra.mxu0 %v1223
    %4042 = vmatpush.bf16.msra.mxu0 %v1220
    %4043 = vmatpush.bf16.msra.mxu0 %v1217
    %4044 = vmatpush.bf16.msra.mxu0 %v1214
    %4045 = vmatpush.bf16.msra.mxu0 %v1211
    %4046 = vmatpush.bf16.msra.mxu0 %v1208
    %4047 = vmatpush.bf16.msra.mxu0 %v1205
    %4048 = vmatmul.bf16.gmra.mxu0 %v3952
    %v4049 = vpop.f32.mrf.mxu0
    %v4050 = vadd.f32 %v238, %v4049
    %v4051 = vpop.f32.mrf.mxu0
    %4052 = vdwg.mxu0
    %4053 = vmatpush.bf16.msra.mxu0 %v1227
    %4054 = vmatpush.bf16.msra.mxu0 %v1224
    %4055 = vmatpush.bf16.msra.mxu0 %v1221
    %4056 = vmatpush.bf16.msra.mxu0 %v1218
    %4057 = vmatpush.bf16.msra.mxu0 %v1215
    %4058 = vmatpush.bf16.msra.mxu0 %v1212
    %4059 = vmatpush.bf16.msra.mxu0 %v1209
    %4060 = vmatpush.bf16.msra.mxu0 %v1206
    %4061 = vmatmul.bf16.gmra.mxu0 %v3952
    %v4062 = vpop.f32.mrf.mxu0
    %v4063 = vadd.f32 %v239, %v4062
    %v4064 = vpop.f32.mrf.mxu0
    %4065 = vdwg.mxu0
    %4066 = vmatpush.bf16.msra.mxu0 %v1228
    %4067 = vmatpush.bf16.msra.mxu0 %v1225
    %4068 = vmatpush.bf16.msra.mxu0 %v1222
    %4069 = vmatpush.bf16.msra.mxu0 %v1219
    %4070 = vmatpush.bf16.msra.mxu0 %v1216
    %4071 = vmatpush.bf16.msra.mxu0 %v1213
    %4072 = vmatpush.bf16.msra.mxu0 %v1210
    %4073 = vmatpush.bf16.msra.mxu0 %v1207
    %4074 = vmatmul.bf16.gmra.mxu0 %v3952
    %v4075 = vpop.f32.mrf.mxu0
    %v4076 = vadd.f32 %v240, %v4075
    %v4077 = vpop.f32.mrf.mxu0
    %4078 = vdwg.mxu0
    %v4079 = vpack.c.bf16 %v3823, %v3823
    %4080 = vmatpush.bf16.msra.mxu0 %v1393
    %4081 = vmatpush.bf16.msra.mxu0 %v1390
    %4082 = vmatpush.bf16.msra.mxu0 %v1387
    %4083 = vmatpush.bf16.msra.mxu0 %v1384
    %4084 = vmatpush.bf16.msra.mxu0 %v1381
    %4085 = vmatpush.bf16.msra.mxu0 %v1378
    %4086 = vmatpush.bf16.msra.mxu0 %v1375
    %4087 = vmatpush.bf16.msra.mxu0 %v1372
    %4088 = vmatmul.bf16.gmra.mxu0 %v4079
    %v4089 = vpop.f32.mrf.mxu0
    %v4090 = vadd.f32 0.0, %v4089
    %v4091 = vpop.f32.mrf.mxu0
    %4092 = vdwg.mxu0
    %4093 = vmatpush.bf16.msra.mxu0 %v1394
    %4094 = vmatpush.bf16.msra.mxu0 %v1391
    %4095 = vmatpush.bf16.msra.mxu0 %v1388
    %4096 = vmatpush.bf16.msra.mxu0 %v1385
    %4097 = vmatpush.bf16.msra.mxu0 %v1382
    %4098 = vmatpush.bf16.msra.mxu0 %v1379
    %4099 = vmatpush.bf16.msra.mxu0 %v1376
    %4100 = vmatpush.bf16.msra.mxu0 %v1373
    %4101 = vmatmul.bf16.gmra.mxu0 %v4079
    %v4102 = vpop.f32.mrf.mxu0
    %v4103 = vadd.f32 0.0, %v4102
    %v4104 = vpop.f32.mrf.mxu0
    %4105 = vdwg.mxu0
    %4106 = vmatpush.bf16.msra.mxu0 %v1395
    %4107 = vmatpush.bf16.msra.mxu0 %v1392
    %4108 = vmatpush.bf16.msra.mxu0 %v1389
    %4109 = vmatpush.bf16.msra.mxu0 %v1386
    %4110 = vmatpush.bf16.msra.mxu0 %v1383
    %4111 = vmatpush.bf16.msra.mxu0 %v1380
    %4112 = vmatpush.bf16.msra.mxu0 %v1377
    %4113 = vmatpush.bf16.msra.mxu0 %v1374
    %4114 = vmatmul.bf16.gmra.mxu0 %v4079
    %v4115 = vpop.f32.mrf.mxu0
    %v4116 = vadd.f32 0.0, %v4115
    %v4117 = vpop.f32.mrf.mxu0
    %4118 = vdwg.mxu0
    %v4119 = vadd.f32 %v4050, %v4090
    %v4120 = vxor.u32 %v4119, 2147483648
    %v4121 = vmul.f32 %v4120, 1.442695
    %v4122 = vpow.pop %v4121
    %v4123 = vadd.f32 %v4122, 1.0
    %v4124 = vrcp.pop %v4123
    %v4125 = vmul.f32 %v4123, %v4124
    %v4126 = vsub.f32 1.0, %v4125
    %v4127 = vmul.f32 %v4124, %v4126
    %v4128 = vadd.f32 %v4124, %v4127
    %vm4129 = vweird.f32 %v4123
    %vm4130 = vweird.f32 %v4124
    %vm4131 = vmor %vm4129, %vm4130
    %v4132 = vsel %vm4131, %v4124, %v4128
    %v4133 = vand.u32 2147483647, %v4123
    %vm4134 = vcmp.eq.f32.partialorder %v4133, 8.507059e+37
    %v4135 = vand.u32 %v4123, 2147483648
    %v4136 = vor.u32 1.1754944e-38, %v4135
    %v4137 = vsel %vm4134, %v4136, %v4132
    %v4138 = vmul.f32 1.0, %v4137
    %v4139 = vadd.f32 %v4063, %v4103
    %v4140 = vxor.u32 %v4139, 2147483648
    %v4141 = vmul.f32 %v4140, 1.442695
    %v4142 = vpow.pop %v4141
    %v4143 = vadd.f32 %v4142, 1.0
    %v4144 = vrcp.pop %v4143
    %v4145 = vmul.f32 %v4143, %v4144
    %v4146 = vsub.f32 1.0, %v4145
    %v4147 = vmul.f32 %v4144, %v4146
    %v4148 = vadd.f32 %v4144, %v4147
    %vm4149 = vweird.f32 %v4143
    %vm4150 = vweird.f32 %v4144
    %vm4151 = vmor %vm4149, %vm4150
    %v4152 = vsel %vm4151, %v4144, %v4148
    %v4153 = vand.u32 2147483647, %v4143
    %vm4154 = vcmp.eq.f32.partialorder %v4153, 8.507059e+37
    %v4155 = vand.u32 %v4143, 2147483648
    %v4156 = vor.u32 1.1754944e-38, %v4155
    %v4157 = vsel %vm4154, %v4156, %v4152
    %v4158 = vmul.f32 1.0, %v4157
    %v4159 = vadd.f32 %v4116, %v245
    %v4160 = vmul.f32 %v4138, %v4159
    %v4161 = vadd.f32 %v4076, %v4160
    %v4162 = vtanh.pop %v4161
    %v4163 = vsub.f32 1.0, %v4158
    %v4164 = vmul.f32 %v4163, %v4162
    %v4165 = vmul.f32 %v4158, %v3823
    %v4166 = vadd.f32 %v4164, %v4165
    %v4167 = vpack.c.bf16 %v4039, %v4039
    %4168 = vmatpush.bf16.msra.mxu0 %v1226
    %4169 = vmatpush.bf16.msra.mxu0 %v1223
    %4170 = vmatpush.bf16.msra.mxu0 %v1220
    %4171 = vmatpush.bf16.msra.mxu0 %v1217
    %4172 = vmatpush.bf16.msra.mxu0 %v1214
    %4173 = vmatpush.bf16.msra.mxu0 %v1211
    %4174 = vmatpush.bf16.msra.mxu0 %v1208
    %4175 = vmatpush.bf16.msra.mxu0 %v1205
    %4176 = vmatmul.bf16.gmra.mxu0 %v4167
    %v4177 = vpop.f32.mrf.mxu0
    %v4178 = vadd.f32 %v238, %v4177
    %v4179 = vpop.f32.mrf.mxu0
    %4180 = vdwg.mxu0
    %4181 = vmatpush.bf16.msra.mxu0 %v1227
    %4182 = vmatpush.bf16.msra.mxu0 %v1224
    %4183 = vmatpush.bf16.msra.mxu0 %v1221
    %4184 = vmatpush.bf16.msra.mxu0 %v1218
    %4185 = vmatpush.bf16.msra.mxu0 %v1215
    %4186 = vmatpush.bf16.msra.mxu0 %v1212
    %4187 = vmatpush.bf16.msra.mxu0 %v1209
    %4188 = vmatpush.bf16.msra.mxu0 %v1206
    %4189 = vmatmul.bf16.gmra.mxu0 %v4167
    %v4190 = vpop.f32.mrf.mxu0
    %v4191 = vadd.f32 %v239, %v4190
    %v4192 = vpop.f32.mrf.mxu0
    %4193 = vdwg.mxu0
    %4194 = vmatpush.bf16.msra.mxu0 %v1228
    %4195 = vmatpush.bf16.msra.mxu0 %v1225
    %4196 = vmatpush.bf16.msra.mxu0 %v1222
    %4197 = vmatpush.bf16.msra.mxu0 %v1219
    %4198 = vmatpush.bf16.msra.mxu0 %v1216
    %4199 = vmatpush.bf16.msra.mxu0 %v1213
    %4200 = vmatpush.bf16.msra.mxu0 %v1210
    %4201 = vmatpush.bf16.msra.mxu0 %v1207
    %4202 = vmatmul.bf16.gmra.mxu0 %v4167
    %v4203 = vpop.f32.mrf.mxu0
    %v4204 = vadd.f32 %v240, %v4203
    %v4205 = vpop.f32.mrf.mxu0
    %4206 = vdwg.mxu0
    %v4207 = vpack.c.bf16 %v4166, %v4166
    %4208 = vmatpush.bf16.msra.mxu0 %v1393
    %4209 = vmatpush.bf16.msra.mxu0 %v1390
    %4210 = vmatpush.bf16.msra.mxu0 %v1387
    %4211 = vmatpush.bf16.msra.mxu0 %v1384
    %4212 = vmatpush.bf16.msra.mxu0 %v1381
    %4213 = vmatpush.bf16.msra.mxu0 %v1378
    %4214 = vmatpush.bf16.msra.mxu0 %v1375
    %4215 = vmatpush.bf16.msra.mxu0 %v1372
    %4216 = vmatmul.bf16.gmra.mxu0 %v4207
    %v4217 = vpop.f32.mrf.mxu0
    %v4218 = vadd.f32 0.0, %v4217
    %v4219 = vpop.f32.mrf.mxu0
    %4220 = vdwg.mxu0
    %4221 = vmatpush.bf16.msra.mxu0 %v1394
    %4222 = vmatpush.bf16.msra.mxu0 %v1391
    %4223 = vmatpush.bf16.msra.mxu0 %v1388
    %4224 = vmatpush.bf16.msra.mxu0 %v1385
    %4225 = vmatpush.bf16.msra.mxu0 %v1382
    %4226 = vmatpush.bf16.msra.mxu0 %v1379
    %4227 = vmatpush.bf16.msra.mxu0 %v1376
    %4228 = vmatpush.bf16.msra.mxu0 %v1373
    %4229 = vmatmul.bf16.gmra.mxu0 %v4207
    %v4230 = vpop.f32.mrf.mxu0
    %v4231 = vadd.f32 0.0, %v4230
    %v4232 = vpop.f32.mrf.mxu0
    %4233 = vdwg.mxu0
    %4234 = vmatpush.bf16.msra.mxu0 %v1395
    %4235 = vmatpush.bf16.msra.mxu0 %v1392
    %4236 = vmatpush.bf16.msra.mxu0 %v1389
    %4237 = vmatpush.bf16.msra.mxu0 %v1386
    %4238 = vmatpush.bf16.msra.mxu0 %v1383
    %4239 = vmatpush.bf16.msra.mxu0 %v1380
    %4240 = vmatpush.bf16.msra.mxu0 %v1377
    %4241 = vmatpush.bf16.msra.mxu0 %v1374
    %4242 = vmatmul.bf16.gmra.mxu0 %v4207
    %v4243 = vpop.f32.mrf.mxu0
    %v4244 = vadd.f32 0.0, %v4243
    %v4245 = vpop.f32.mrf.mxu0
    %4246 = vdwg.mxu0
    %v4247 = vadd.f32 %v4178, %v4218
    %v4248 = vxor.u32 %v4247, 2147483648
    %v4249 = vmul.f32 %v4248, 1.442695
    %v4250 = vpow.pop %v4249
    %v4251 = vadd.f32 %v4250, 1.0
    %v4252 = vrcp.pop %v4251
    %v4253 = vmul.f32 %v4251, %v4252
    %v4254 = vsub.f32 1.0, %v4253
    %v4255 = vmul.f32 %v4252, %v4254
    %v4256 = vadd.f32 %v4252, %v4255
    %vm4257 = vweird.f32 %v4251
    %vm4258 = vweird.f32 %v4252
    %vm4259 = vmor %vm4257, %vm4258
    %v4260 = vsel %vm4259, %v4252, %v4256
    %v4261 = vand.u32 2147483647, %v4251
    %vm4262 = vcmp.eq.f32.partialorder %v4261, 8.507059e+37
    %v4263 = vand.u32 %v4251, 2147483648
    %v4264 = vor.u32 1.1754944e-38, %v4263
    %v4265 = vsel %vm4262, %v4264, %v4260
    %v4266 = vmul.f32 1.0, %v4265
    %v4267 = vadd.f32 %v4191, %v4231
    %v4268 = vxor.u32 %v4267, 2147483648
    %v4269 = vmul.f32 %v4268, 1.442695
    %v4270 = vpow.pop %v4269
    %v4271 = vadd.f32 %v4270, 1.0
    %v4272 = vrcp.pop %v4271
    %v4273 = vmul.f32 %v4271, %v4272
    %v4274 = vsub.f32 1.0, %v4273
    %v4275 = vmul.f32 %v4272, %v4274
    %v4276 = vadd.f32 %v4272, %v4275
    %vm4277 = vweird.f32 %v4271
    %vm4278 = vweird.f32 %v4272
    %vm4279 = vmor %vm4277, %vm4278
    %v4280 = vsel %vm4279, %v4272, %v4276
    %v4281 = vand.u32 2147483647, %v4271
    %vm4282 = vcmp.eq.f32.partialorder %v4281, 8.507059e+37
    %v4283 = vand.u32 %v4271, 2147483648
    %v4284 = vor.u32 1.1754944e-38, %v4283
    %v4285 = vsel %vm4282, %v4284, %v4280
    %v4286 = vmul.f32 1.0, %v4285
    %v4287 = vadd.f32 %v4244, %v245
    %v4288 = vmul.f32 %v4266, %v4287
    %v4289 = vadd.f32 %v4204, %v4288
    %v4290 = vtanh.pop %v4289
    %v4291 = vsub.f32 1.0, %v4286
    %v4292 = vmul.f32 %v4291, %v4290
    %v4293 = vmul.f32 %v4286, %v4166
    %v4294 = vadd.f32 %v4292, %v4293
    %v4295 = vld [vmem:[%s4] sm:$0xff]
    %v4296 = vld [vmem:[%s4 + $0x8] sm:$0xff]
    %v4297 = vld [vmem:[%s4 + $0x10] sm:$0xff]
    %v4298 = vld [vmem:[%s4 + $0x18] sm:$0xff]
    %v4299 = vld [vmem:[%s4 + $0x20] sm:$0xff]
    %v4300 = vld [vmem:[%s4 + $0x28] sm:$0xff]
    %v4301 = vld [vmem:[%s4 + $0x30] sm:$0xff]
    %v4302 = vld [vmem:[%s4 + $0x38] sm:$0xff]
    %v4303 = vld [vmem:[%s4 + $0x40] sm:$0xff]
    %v4304 = vld [vmem:[%s4 + $0x48] sm:$0xff]
    %v4305 = vld [vmem:[%s4 + $0x50] sm:$0xff]
    %v4306 = vld [vmem:[%s4 + $0x58] sm:$0xff]
    %v4307 = vld [vmem:[%s4 + $0x60] sm:$0xff]
    %v4308 = vld [vmem:[%s4 + $0x68] sm:$0xff]
    %v4309 = vld [vmem:[%s4 + $0x70] sm:$0xff]
    %v4310 = vld [vmem:[%s4 + $0x78] sm:$0xff]
    %v4311 = vld [vmem:[%s4 + $0x80] sm:$0xff]
    %v4312 = vld [vmem:[%s4 + $0x88] sm:$0xff]
    %v4313 = vld [vmem:[%s4 + $0x90] sm:$0xff]
    %v4314 = vld [vmem:[%s4 + $0x98] sm:$0xff]
    %v4315 = vld [vmem:[%s4 + $0xa0] sm:$0xff]
    %v4316 = vld [vmem:[%s4 + $0xa8] sm:$0xff]
    %v4317 = vld [vmem:[%s4 + $0xb0] sm:$0xff]
    %v4318 = vld [vmem:[%s4 + $0xb8] sm:$0xff]
    %v4319 = vld [vmem:[%s4 + $0xc0] sm:$0xff]
    %v4320 = vld [vmem:[%s4 + $0xc8] sm:$0xff]
    %v4321 = vld [vmem:[%s4 + $0xd0] sm:$0xff]
    %v4322 = vld [vmem:[%s4 + $0xd8] sm:$0xff]
    %v4323 = vld [vmem:[%s4 + $0xe0] sm:$0xff]
    %v4324 = vld [vmem:[%s4 + $0xe8] sm:$0xff]
    %v4325 = vld [vmem:[%s4 + $0xf0] sm:$0xff]
    %v4326 = vld [vmem:[%s4 + $0xf8] sm:$0xff]
    %v4327 = vld [vmem:[%s4 + $0x100] sm:$0xff]
    %4328 = vmatpush.msra.mxu0 %v4327
    %4329 = vmatpush.msra.mxu0 %v4326
    %4330 = vmatpush.msra.mxu0 %v4325
    %4331 = vmatpush.msra.mxu0 %v4324
    %4332 = vmatpush.msra.mxu0 %v4323
    %4333 = vmatpush.msra.mxu0 %v4322
    %4334 = vmatpush.msra.mxu0 %v4321
    %4335 = vmatpush.msra.mxu0 %v4320
    %4336 = vmatpush.msra.mxu0 %v4319
    %4337 = vmatpush.msra.mxu0 %v4318
    %4338 = vmatpush.msra.mxu0 %v4317
    %4339 = vmatpush.msra.mxu0 %v4316
    %4340 = vmatpush.msra.mxu0 %v4315
    %4341 = vmatpush.msra.mxu0 %v4314
    %4342 = vmatpush.msra.mxu0 %v4313
    %4343 = vmatpush.msra.mxu0 %v4312
    %4344 = vmatmul.f32.gmra.mxu0 %v3951
    %v4345 = vpop.f32.mrf.mxu0
    %v4346 = vadd.f32 0.0, %v4345
    %4347 = vdwg.mxu0
    %4348 = vmatpush.msra.mxu0 %v4311
    %4349 = vmatpush.msra.mxu0 %v4310
    %4350 = vmatpush.msra.mxu0 %v4309
    %4351 = vmatpush.msra.mxu0 %v4308
    %4352 = vmatpush.msra.mxu0 %v4307
    %4353 = vmatpush.msra.mxu0 %v4306
    %4354 = vmatpush.msra.mxu0 %v4305
    %4355 = vmatpush.msra.mxu0 %v4304
    %4356 = vmatpush.msra.mxu0 %v4303
    %4357 = vmatpush.msra.mxu0 %v4302
    %4358 = vmatpush.msra.mxu0 %v4301
    %4359 = vmatpush.msra.mxu0 %v4300
    %4360 = vmatpush.msra.mxu0 %v4299
    %4361 = vmatpush.msra.mxu0 %v4298
    %4362 = vmatpush.msra.mxu0 %v4297
    %4363 = vmatpush.msra.mxu0 %v4296
    %4364 = vmatmul.f32.gmra.mxu0 %v4294
    %v4365 = vpop.f32.mrf.mxu0
    %v4366 = vadd.f32 %v4346, %v4365
    %4367 = vdwg.mxu0
    %v4368 = vperm.slane %v4295, 0
    %v4369 = vadd.f32 %v4366, %v4368
    %v4370 = vmax.f32 %v4369, 0.0
    %v4371 = vperm.slane %v4295, 1
    %v4372 = vmul.f32 %v4370, %v4371
    %vm4373 = vcmask 523264
    %v4374 = vsel %vm4373, %v4372, 0.0
    %4375 = vadd.xlane.f32.xlu0 %v4374
    %v4376 = vpop.xlane.xlu0 %4375
    %v4377 = vperm.slane %v4295, 2
    %v4378 = vadd.f32 %v4376, %v4377
    %v4379 = vxor.u32 %v4378, 2147483648
    %v4380 = vmul.f32 %v4379, 1.442695
    %v4381 = vpow.pop %v4380
    %v4382 = vadd.f32 %v4381, 1.0
    %v4383 = vrcp.pop %v4382
    %v4384 = vmul.f32 %v4382, %v4383
    %v4385 = vsub.f32 1.0, %v4384
    %v4386 = vmul.f32 %v4383, %v4385
    %v4387 = vadd.f32 %v4383, %v4386
    %vm4388 = vweird.f32 %v4382
    %vm4389 = vweird.f32 %v4383
    %vm4390 = vmor %vm4388, %vm4389
    %v4391 = vsel %vm4390, %v4383, %v4387
    %v4392 = vand.u32 2147483647, %v4382
    %vm4393 = vcmp.eq.f32.partialorder %v4392, 8.507059e+37
    %v4394 = vand.u32 %v4382, 2147483648
    %v4395 = vor.u32 1.1754944e-38, %v4394
    %v4396 = vsel %vm4393, %v4395, %v4391
    %v4397 = vmul.f32 1.0, %v4396
    %vm4398 = vcmask 7168
    %4399 = vst.msk [vmem:[%s5] sm:$0xff] %vm4398, %v4397
    // Predicated region
    $region26: #{tpu_custom_call.1} parent=1 // pred_check
      _
    $region27: #{tpu_custom_call.1} parent=1 // pred_check_branch
      %4401 = sbr.rel (0) target = $region29
    $region28: #{tpu_custom_call.1} parent=1 // pred_region
      _
    $region29: #{tpu_custom_call.1} parent=1 // pred_fallthru
      _
    // Predicated region
    $region30: #{tpu_custom_call.1} parent=1 // pred_check
      _
    $region31: #{tpu_custom_call.1} parent=1 // pred_check_branch
      %4403 = sbr.rel (0) target = $region33
    $region32: #{tpu_custom_call.1} parent=1 // pred_region
      _
    $region33: #{tpu_custom_call.1} parent=1 // pred_fallthru
      _
    %4404 = vsyncpa [#allocation3], 1

</llo_original>
